<compile_context>
chip_gen: v7x
topology: tpu7x:2x2x1
jax: 0.10.0
libtpu: 0.0.40
codegen_flags: <defaults>
</compile_context>

<pallas_src>
import functools

import jax
import jax.numpy as jnp
from jax import lax
from jax.experimental import pallas as pl
from jax.experimental.pallas import tpu as pltpu

LANE = 128
SUBLANE = 8
ROW_CHUNK = 128   # in-kernel row sub-chunk (bounds live vregs; v5e spill control)


def _round_up(n, m):
    return ((n + m - 1) // m) * m


# --------------------------------------------------------------------------- #
# Kernel
# --------------------------------------------------------------------------- #
def customnet_kernel(x_ref, wx_ref, w2a_ref, w3a_ref, out_ref,
                     *, h_pad, d2_pad, na_pad, chunk):
    """One batch tile of the CustomNet forward.

    x_ref : (TM, k_pad) bf16      -- [x | 1 | 0-pad]  (bias column folded in)
    wx_ref: (k_pad, h_pad+d2_pad+na_pad) bf16 -- [W1^T;b1 | W2b^T;b2 | W3b^T;b3]
    w2a   : (h_pad, d2_pad) bf16  ;  w3a : (d2_pad, na_pad) bf16
    out   : (TM, na_pad) bf16     -- lane-dense padded logits (sliced outside)
    """
    n_chunks = x_ref.shape[0] // chunk

    def body(c, carry):
        r0 = pl.multiple_of(c * chunk, chunk)
        x = x_ref[pl.ds(r0, chunk), :]
        # One MXU push for all three x-side projections + all three biases
        # (the constant-1 column of x picks up the bias rows of wx):
        #   lanes = [x@W1^T + b1 | x@W2b^T + b2 | x@W3b^T + b3]
        xp = jnp.dot(x, wx_ref[...], preferred_element_type=jnp.float32)

        # fc1 + ReLU (padded cols are exactly 0).
        h1 = jnp.maximum(xp[:, :h_pad], 0.0)

        # fc2 on cat([h1, x]) + ReLU (split matmul; x/bias part already in xp).
        h2 = jnp.dot(h1.astype(jnp.bfloat16), w2a_ref[...],
                     preferred_element_type=jnp.float32)
        h2 = jnp.maximum(h2 + xp[:, h_pad:h_pad + d2_pad], 0.0)

        # fc3 on cat([h2, x]) (split matmul, no activation).
        out = jnp.dot(h2.astype(jnp.bfloat16), w3a_ref[...],
                      preferred_element_type=jnp.float32)
        out = out + xp[:, h_pad + d2_pad:h_pad + d2_pad + na_pad]

        out_ref[pl.ds(r0, chunk), :] = out.astype(out_ref.dtype)
        return carry

    lax.fori_loop(0, n_chunks, body, 0, unroll=True)


# --------------------------------------------------------------------------- #
# Parameter packing (concat folding + bias folding + lane padding)
# --------------------------------------------------------------------------- #
def pack_params(w1, b1, w2, b2, w3, b3):
    hidden, input_dim = w1.shape
    d2 = hidden + input_dim
    nA = w3.shape[0]

    h_pad = _round_up(hidden, LANE)
    d2_pad = _round_up(d2, LANE)
    na_pad = _round_up(nA, LANE)
    k_pad = _round_up(input_dim + 1, SUBLANE)   # +1 column: constant 1 for biases

    # Split fc2/fc3 along their input dim (concat folding), transpose to (in, out).
    w2a_t = w2[:, :hidden].T          # (hidden, d2)
    w2b_t = w2[:, hidden:].T          # (input,  d2)
    w3a_t = w3[:, :d2].T              # (d2,     nA)
    w3b_t = w3[:, d2:].T              # (input,  nA)

    def pad2(a, rows, cols):
        z = jnp.zeros((rows, cols), jnp.float32)
        return z.at[:a.shape[0], :a.shape[1]].set(a)

    def x_side(w_t, b, cols):
        # rows 0..input_dim-1: x projection; row input_dim: bias (picked up by
        # the constant-1 column of x); remaining rows: zero padding.
        blk = jnp.zeros((k_pad, cols), jnp.float32)
        blk = blk.at[:input_dim, :w_t.shape[1]].set(w_t)
        blk = blk.at[input_dim, :b.shape[0]].set(b)
        return blk

    wx_packed = jnp.concatenate([
        x_side(w1.T, b1, h_pad),        # -> fc1 pre-activation (+ b1)
        x_side(w2b_t, b2, d2_pad),      # -> x contribution to fc2 (+ b2)
        x_side(w3b_t, b3, na_pad),      # -> x contribution to fc3 (+ b3)
    ], axis=1).astype(jnp.bfloat16)     # (k_pad, h_pad + d2_pad + na_pad)

    return dict(
        wx_packed=wx_packed,
        w2a_pad=pad2(w2a_t, h_pad, d2_pad).astype(jnp.bfloat16),
        w3a_pad=pad2(w3a_t, d2_pad, na_pad).astype(jnp.bfloat16),
        dims=(hidden, input_dim, nA, h_pad, d2_pad, na_pad, k_pad),
    )


# --------------------------------------------------------------------------- #
# Wrapper
# --------------------------------------------------------------------------- #
def _choose_tiling(batch, tm_request):
    cap = 2048 if tm_request is None else max(SUBLANE, tm_request)
    tm = min(_round_up(batch, SUBLANE), _round_up(cap, SUBLANE))
    n_steps = -(-batch // tm)
    # v7x: an even number of grid steps lets dimension_semantics=("parallel",)
    # give both TensorCores equal work; pointless for 1-2 step grids.
    if n_steps >= 3 and n_steps % 2:
        n_steps += 1
    tm = _round_up(-(-batch // n_steps), SUBLANE)
    if tm > ROW_CHUNK:
        tm = _round_up(tm, ROW_CHUNK)
        chunk = ROW_CHUNK
    else:
        chunk = tm
    return tm, n_steps, chunk


def customnet_forward(x, params, *, tm=None):
    """x: (B, input_dim) float. Returns (B, nA) float32 logits."""
    B, input_dim = x.shape
    hidden, in_dim_p, nA, h_pad, d2_pad, na_pad, k_pad = params["dims"]
    assert input_dim == in_dim_p

    tm, n_steps, chunk = _choose_tiling(B, tm)
    b_pad = tm * n_steps
    np_total = h_pad + d2_pad + na_pad

    # x as bf16 with a constant-1 column (bias folding), zero-padded to
    # k_pad columns / b_pad rows.  Padded batch rows are all-zero (including
    # the ones column), so they produce exact zeros and are sliced off.
    x_aug = jnp.zeros((b_pad, k_pad), jnp.bfloat16)
    x_aug = x_aug.at[:B, :input_dim].set(x.astype(jnp.bfloat16))
    x_aug = x_aug.at[:B, input_dim].set(1.0)

    kernel = functools.partial(customnet_kernel, h_pad=h_pad, d2_pad=d2_pad,
                               na_pad=na_pad, chunk=chunk)

    # VMEM budget derived from actual tile sizes (+ generous headroom) — a few
    # MiB, not a blanket half of v7x's 64 MiB VMEM.
    weight_bytes = 2 * (k_pad * np_total + h_pad * d2_pad + d2_pad * na_pad)
    io_bytes = 2 * 2 * tm * (k_pad + na_pad)               # double-buffered bf16 x/out
    interm_bytes = 4 * chunk * (np_total + h_pad + d2_pad + na_pad)
    vmem_limit = int(max(4 * (weight_bytes + io_bytes + interm_bytes), 8 << 20))

    def run(single_buffer_weights):
        def resident(shape):
            # Constant index_map => operand never changes; single-buffer it so
            # Pallas doesn't double-buffer static weights.
            if single_buffer_weights:
                return pl.BlockSpec(shape, lambda i: (0, 0),
                                    pipeline_mode=pl.Buffered(1))
            return pl.BlockSpec(shape, lambda i: (0, 0))

        return pl.pallas_call(
            kernel,
            out_shape=jax.ShapeDtypeStruct((b_pad, na_pad), jnp.bfloat16),
            grid=(n_steps,),
            in_specs=[
                pl.BlockSpec((tm, k_pad), lambda i: (i, 0)),   # x: pipelined
                resident(params["wx_packed"].shape),
                resident(params["w2a_pad"].shape),
                resident(params["w3a_pad"].shape),
            ],
            out_specs=pl.BlockSpec((tm, na_pad), lambda i: (i, 0)),  # lane-dense
            compiler_params=pltpu.CompilerParams(
                dimension_semantics=("parallel",),    # shard batch across TCs
                vmem_limit_bytes=vmem_limit,
            ),
        )(x_aug, params["wx_packed"], params["w2a_pad"], params["w3a_pad"])

    try:
        out_padded = run(True)
    except Exception:
        # pl.Buffered(1) unsupported on this jax/libtpu combo: plain specs.
        out_padded = run(False)

    # Module returns raw logits, so we keep them (no fused argmax/softmax head).
    return out_padded[:B, :nA].astype(jnp.float32)


# --------------------------------------------------------------------------- #
# Synthetic init + references
# --------------------------------------------------------------------------- #
def init_raw_params(key, input_dim, hidden_dim, nA):
    """Deterministic synthetic init matching the nn.Linear shapes of CustomNet."""
    d2 = hidden_dim + input_dim
    d3 = hidden_dim + 2 * input_dim
    ks = jax.random.split(key, 6)
    w1 = jax.random.normal(ks[0], (hidden_dim, input_dim), jnp.float32) * 0.1
    b1 = jax.random.normal(ks[1], (hidden_dim,), jnp.float32) * 0.1
    w2 = jax.random.normal(ks[2], (d2, d2), jnp.float32) * 0.1
    b2 = jax.random.normal(ks[3], (d2,), jnp.float32) * 0.1
    w3 = jax.random.normal(ks[4], (nA, d3), jnp.float32) * 0.1
    b3 = jax.random.normal(ks[5], (nA,), jnp.float32) * 0.1
    return (w1, b1, w2, b2, w3, b3)


def reference_forward_f32(x, raw):
    """Pure-f32 mirror of the PyTorch forward."""
    w1, b1, w2, b2, w3, b3 = raw
    h1 = jax.nn.relu(x @ w1.T + b1)
    c1 = jnp.concatenate([h1, x], axis=-1)
    h2 = jax.nn.relu(c1 @ w2.T + b2)
    c2 = jnp.concatenate([h2, x], axis=-1)
    return c2 @ w3.T + b3


def reference_forward_bf16(x, raw):
    """Same forward, mirroring the kernel numerics: bf16 operands/biases,
    f32 accumulation/ReLU."""
    w1, b1, w2, b2, w3, b3 = raw
    bf = lambda a: a.astype(jnp.bfloat16).astype(jnp.float32)
    xb = bf(x)
    h1 = jax.nn.relu(xb @ bf(w1.T) + bf(b1))
    c1 = jnp.concatenate([bf(h1), xb], axis=-1)
    h2 = jax.nn.relu(c1 @ bf(w2.T) + bf(b2))
    c2 = jnp.concatenate([bf(h2), xb], axis=-1)
    return c2 @ bf(w3.T) + bf(b3)


if __name__ == "__main__":
    # Shapes implied by the module: flat observation vector (Box), discrete
    # action head.
    INPUT_DIM, HIDDEN_DIM, NA = 4, 32, 6

    key = jax.random.PRNGKey(0)
    k_params, k_x1, k_x2 = jax.random.split(key, 3)

    raw = init_raw_params(k_params, INPUT_DIM, HIDDEN_DIM, NA)
    params = pack_params(*raw)

    # Case 1: B=512 -> single grid step (TM covers the whole batch).
    x1 = jax.random.normal(k_x1, (512, INPUT_DIM), jnp.float32)
    out1 = jax.block_until_ready(customnet_forward(x1, params))
    assert out1.shape == (512, NA)

    # Case 2: multi-step, even-length grid with batch padding.
    x2 = jax.random.normal(k_x2, (1200, INPUT_DIM), jnp.float32)
    out2 = jax.block_until_ready(customnet_forward(x2, params, tm=256))
    assert out2.shape == (1200, NA)

    for xv, out in ((x1, out1), (x2, out2)):
        # Tight check vs. a reference mirroring the kernel's bf16-operand /
        # f32-accumulate numerics (validates the kernel itself; output is bf16).
        ref_b = reference_forward_bf16(xv, raw)
        assert jnp.allclose(out, ref_b, atol=2e-2, rtol=2e-2), \
            float(jnp.max(jnp.abs(out - ref_b)))
        # Looser check vs. the exact f32 PyTorch-equivalent forward.
        ref_f = reference_forward_f32(xv, raw)
        assert jnp.allclose(out, ref_f, atol=6e-2, rtol=6e-2), \
            float(jnp.max(jnp.abs(out - ref_f)))

    print("KERNEL_OK")
</pallas_src>

<mosaic_0001>
module attributes {stable_mosaic.version = 11 : i64} {
  func.func @customnet_kernel(%arg0: i32, %arg1: memref<512x8xbf16, #tpu.memory_space<vmem>>, %arg2: memref<8x384xbf16, #tpu.memory_space<vmem>>, %arg3: memref<128x128xbf16, #tpu.memory_space<vmem>>, %arg4: memref<128x128xbf16, #tpu.memory_space<vmem>>, %arg5: memref<512x128xbf16, #tpu.memory_space<vmem>>) attributes {dimension_semantics = [#tpu.dimension_semantics<parallel>], iteration_bounds = array<i64: 1>, scalar_prefetch = 0 : i64, scratch_operands = 0 : i64, tpu.core_type = #tpu.core_type<tc>, window_params = [{transform_indices = @transform_0, window_bounds = array<i64: 512, 8>}, {pipeline_mode = #tpu.pipeline_mode<synchronous>, transform_indices = @transform_1, window_bounds = array<i64: 8, 384>}, {pipeline_mode = #tpu.pipeline_mode<synchronous>, transform_indices = @transform_2, window_bounds = array<i64: 128, 128>}, {pipeline_mode = #tpu.pipeline_mode<synchronous>, transform_indices = @transform_3, window_bounds = array<i64: 128, 128>}, {transform_indices = @transform_4, window_bounds = array<i64: 512, 128>}]} {
    %c0_i32 = arith.constant 0 : i32
    %c128_i32 = arith.constant 128 : i32
    %0 = arith.muli %c0_i32, %c128_i32 : i32
    %1 = tpu.assume_multiple %0, 128 : i32
    %2 = arith.index_cast %1 : i32 to index
    %c0 = arith.constant 0 : index
    %3 = vector.load %arg1[%2, %c0] : memref<512x8xbf16, #tpu.memory_space<vmem>>, vector<128x8xbf16>
    %c0_0 = arith.constant 0 : index
    %c0_1 = arith.constant 0 : index
    %4 = vector.load %arg2[%c0_0, %c0_1] : memref<8x384xbf16, #tpu.memory_space<vmem>>, vector<8x384xbf16>
    %cst = arith.constant dense<0.000000e+00> : vector<128x384xf32>
    %5 = tpu.matmul %3, %4, %cst {dimension_numbers = #tpu.dot_dimension_numbers<[1], [0], [0], [1], [0, 0, 1, 1], [], []>} : vector<128x8xbf16>, vector<8x384xbf16>, vector<128x384xf32> -> vector<128x384xf32>
    %6 = vector.extract_strided_slice %5 {offsets = [0, 0], sizes = [128, 128], strides = [1, 1]} : vector<128x384xf32> to vector<128x128xf32>
    %cst_2 = arith.constant 0.000000e+00 : f32
    %7 = vector.broadcast %cst_2 : f32 to vector<128x128xf32>
    %8 = arith.maximumf %6, %7 : vector<128x128xf32>
    %9 = arith.truncf %8 : vector<128x128xf32> to vector<128x128xbf16>
    %c0_3 = arith.constant 0 : index
    %c0_4 = arith.constant 0 : index
    %10 = vector.load %arg3[%c0_3, %c0_4] : memref<128x128xbf16, #tpu.memory_space<vmem>>, vector<128x128xbf16>
    %cst_5 = arith.constant dense<0.000000e+00> : vector<128x128xf32>
    %11 = tpu.matmul %9, %10, %cst_5 {dimension_numbers = #tpu.dot_dimension_numbers<[1], [0], [0], [1], [0, 0, 1, 1], [], []>} : vector<128x128xbf16>, vector<128x128xbf16>, vector<128x128xf32> -> vector<128x128xf32>
    %12 = vector.extract_strided_slice %5 {offsets = [0, 128], sizes = [128, 128], strides = [1, 1]} : vector<128x384xf32> to vector<128x128xf32>
    %13 = arith.addf %11, %12 : vector<128x128xf32>
    %cst_6 = arith.constant 0.000000e+00 : f32
    %14 = vector.broadcast %cst_6 : f32 to vector<128x128xf32>
    %15 = arith.maximumf %13, %14 : vector<128x128xf32>
    %16 = arith.truncf %15 : vector<128x128xf32> to vector<128x128xbf16>
    %c0_7 = arith.constant 0 : index
    %c0_8 = arith.constant 0 : index
    %17 = vector.load %arg4[%c0_7, %c0_8] : memref<128x128xbf16, #tpu.memory_space<vmem>>, vector<128x128xbf16>
    %cst_9 = arith.constant dense<0.000000e+00> : vector<128x128xf32>
    %18 = tpu.matmul %16, %17, %cst_9 {dimension_numbers = #tpu.dot_dimension_numbers<[1], [0], [0], [1], [0, 0, 1, 1], [], []>} : vector<128x128xbf16>, vector<128x128xbf16>, vector<128x128xf32> -> vector<128x128xf32>
    %19 = vector.extract_strided_slice %5 {offsets = [0, 256], sizes = [128, 128], strides = [1, 1]} : vector<128x384xf32> to vector<128x128xf32>
    %20 = arith.addf %18, %19 : vector<128x128xf32>
    %21 = arith.truncf %20 : vector<128x128xf32> to vector<128x128xbf16>
    %22 = arith.index_cast %1 : i32 to index
    %c0_10 = arith.constant 0 : index
    %23 = vector.load %arg5[%22, %c0_10] : memref<512x128xbf16, #tpu.memory_space<vmem>>, vector<128x128xbf16>
    tpu.vector_store %arg5[%22, %c0_10], %21 {strides = array<i32>} : memref<512x128xbf16, #tpu.memory_space<vmem>>, vector<128x128xbf16>,
    %c1_i32 = arith.constant 1 : i32
    %c128_i32_11 = arith.constant 128 : i32
    %24 = arith.muli %c1_i32, %c128_i32_11 : i32
    %25 = tpu.assume_multiple %24, 128 : i32
    %26 = arith.index_cast %25 : i32 to index
    %c0_12 = arith.constant 0 : index
    %27 = vector.load %arg1[%26, %c0_12] : memref<512x8xbf16, #tpu.memory_space<vmem>>, vector<128x8xbf16>
    %c0_13 = arith.constant 0 : index
    %c0_14 = arith.constant 0 : index
    %28 = vector.load %arg2[%c0_13, %c0_14] : memref<8x384xbf16, #tpu.memory_space<vmem>>, vector<8x384xbf16>
    %cst_15 = arith.constant dense<0.000000e+00> : vector<128x384xf32>
    %29 = tpu.matmul %27, %28, %cst_15 {dimension_numbers = #tpu.dot_dimension_numbers<[1], [0], [0], [1], [0, 0, 1, 1], [], []>} : vector<128x8xbf16>, vector<8x384xbf16>, vector<128x384xf32> -> vector<128x384xf32>
    %30 = vector.extract_strided_slice %29 {offsets = [0, 0], sizes = [128, 128], strides = [1, 1]} : vector<128x384xf32> to vector<128x128xf32>
    %cst_16 = arith.constant 0.000000e+00 : f32
    %31 = vector.broadcast %cst_16 : f32 to vector<128x128xf32>
    %32 = arith.maximumf %30, %31 : vector<128x128xf32>
    %33 = arith.truncf %32 : vector<128x128xf32> to vector<128x128xbf16>
    %c0_17 = arith.constant 0 : index
    %c0_18 = arith.constant 0 : index
    %34 = vector.load %arg3[%c0_17, %c0_18] : memref<128x128xbf16, #tpu.memory_space<vmem>>, vector<128x128xbf16>
    %cst_19 = arith.constant dense<0.000000e+00> : vector<128x128xf32>
    %35 = tpu.matmul %33, %34, %cst_19 {dimension_numbers = #tpu.dot_dimension_numbers<[1], [0], [0], [1], [0, 0, 1, 1], [], []>} : vector<128x128xbf16>, vector<128x128xbf16>, vector<128x128xf32> -> vector<128x128xf32>
    %36 = vector.extract_strided_slice %29 {offsets = [0, 128], sizes = [128, 128], strides = [1, 1]} : vector<128x384xf32> to vector<128x128xf32>
    %37 = arith.addf %35, %36 : vector<128x128xf32>
    %cst_20 = arith.constant 0.000000e+00 : f32
    %38 = vector.broadcast %cst_20 : f32 to vector<128x128xf32>
    %39 = arith.maximumf %37, %38 : vector<128x128xf32>
    %40 = arith.truncf %39 : vector<128x128xf32> to vector<128x128xbf16>
    %c0_21 = arith.constant 0 : index
    %c0_22 = arith.constant 0 : index
    %41 = vector.load %arg4[%c0_21, %c0_22] : memref<128x128xbf16, #tpu.memory_space<vmem>>, vector<128x128xbf16>
    %cst_23 = arith.constant dense<0.000000e+00> : vector<128x128xf32>
    %42 = tpu.matmul %40, %41, %cst_23 {dimension_numbers = #tpu.dot_dimension_numbers<[1], [0], [0], [1], [0, 0, 1, 1], [], []>} : vector<128x128xbf16>, vector<128x128xbf16>, vector<128x128xf32> -> vector<128x128xf32>
    %43 = vector.extract_strided_slice %29 {offsets = [0, 256], sizes = [128, 128], strides = [1, 1]} : vector<128x384xf32> to vector<128x128xf32>
    %44 = arith.addf %42, %43 : vector<128x128xf32>
    %45 = arith.truncf %44 : vector<128x128xf32> to vector<128x128xbf16>
    %46 = arith.index_cast %25 : i32 to index
    %c0_24 = arith.constant 0 : index
    %47 = vector.load %arg5[%46, %c0_24] : memref<512x128xbf16, #tpu.memory_space<vmem>>, vector<128x128xbf16>
    tpu.vector_store %arg5[%46, %c0_24], %45 {strides = array<i32>} : memref<512x128xbf16, #tpu.memory_space<vmem>>, vector<128x128xbf16>,
    %c2_i32 = arith.constant 2 : i32
    %c128_i32_25 = arith.constant 128 : i32
    %48 = arith.muli %c2_i32, %c128_i32_25 : i32
    %49 = tpu.assume_multiple %48, 128 : i32
    %50 = arith.index_cast %49 : i32 to index
    %c0_26 = arith.constant 0 : index
    %51 = vector.load %arg1[%50, %c0_26] : memref<512x8xbf16, #tpu.memory_space<vmem>>, vector<128x8xbf16>
    %c0_27 = arith.constant 0 : index
    %c0_28 = arith.constant 0 : index
    %52 = vector.load %arg2[%c0_27, %c0_28] : memref<8x384xbf16, #tpu.memory_space<vmem>>, vector<8x384xbf16>
    %cst_29 = arith.constant dense<0.000000e+00> : vector<128x384xf32>
    %53 = tpu.matmul %51, %52, %cst_29 {dimension_numbers = #tpu.dot_dimension_numbers<[1], [0], [0], [1], [0, 0, 1, 1], [], []>} : vector<128x8xbf16>, vector<8x384xbf16>, vector<128x384xf32> -> vector<128x384xf32>
    %54 = vector.extract_strided_slice %53 {offsets = [0, 0], sizes = [128, 128], strides = [1, 1]} : vector<128x384xf32> to vector<128x128xf32>
    %cst_30 = arith.constant 0.000000e+00 : f32
    %55 = vector.broadcast %cst_30 : f32 to vector<128x128xf32>
    %56 = arith.maximumf %54, %55 : vector<128x128xf32>
    %57 = arith.truncf %56 : vector<128x128xf32> to vector<128x128xbf16>
    %c0_31 = arith.constant 0 : index
    %c0_32 = arith.constant 0 : index
    %58 = vector.load %arg3[%c0_31, %c0_32] : memref<128x128xbf16, #tpu.memory_space<vmem>>, vector<128x128xbf16>
    %cst_33 = arith.constant dense<0.000000e+00> : vector<128x128xf32>
    %59 = tpu.matmul %57, %58, %cst_33 {dimension_numbers = #tpu.dot_dimension_numbers<[1], [0], [0], [1], [0, 0, 1, 1], [], []>} : vector<128x128xbf16>, vector<128x128xbf16>, vector<128x128xf32> -> vector<128x128xf32>
    %60 = vector.extract_strided_slice %53 {offsets = [0, 128], sizes = [128, 128], strides = [1, 1]} : vector<128x384xf32> to vector<128x128xf32>
    %61 = arith.addf %59, %60 : vector<128x128xf32>
    %cst_34 = arith.constant 0.000000e+00 : f32
    %62 = vector.broadcast %cst_34 : f32 to vector<128x128xf32>
    %63 = arith.maximumf %61, %62 : vector<128x128xf32>
    %64 = arith.truncf %63 : vector<128x128xf32> to vector<128x128xbf16>
    %c0_35 = arith.constant 0 : index
    %c0_36 = arith.constant 0 : index
    %65 = vector.load %arg4[%c0_35, %c0_36] : memref<128x128xbf16, #tpu.memory_space<vmem>>, vector<128x128xbf16>
    %cst_37 = arith.constant dense<0.000000e+00> : vector<128x128xf32>
    %66 = tpu.matmul %64, %65, %cst_37 {dimension_numbers = #tpu.dot_dimension_numbers<[1], [0], [0], [1], [0, 0, 1, 1], [], []>} : vector<128x128xbf16>, vector<128x128xbf16>, vector<128x128xf32> -> vector<128x128xf32>
    %67 = vector.extract_strided_slice %53 {offsets = [0, 256], sizes = [128, 128], strides = [1, 1]} : vector<128x384xf32> to vector<128x128xf32>
    %68 = arith.addf %66, %67 : vector<128x128xf32>
    %69 = arith.truncf %68 : vector<128x128xf32> to vector<128x128xbf16>
    %70 = arith.index_cast %49 : i32 to index
    %c0_38 = arith.constant 0 : index
    %71 = vector.load %arg5[%70, %c0_38] : memref<512x128xbf16, #tpu.memory_space<vmem>>, vector<128x128xbf16>
    tpu.vector_store %arg5[%70, %c0_38], %69 {strides = array<i32>} : memref<512x128xbf16, #tpu.memory_space<vmem>>, vector<128x128xbf16>,
    %c3_i32 = arith.constant 3 : i32
    %c128_i32_39 = arith.constant 128 : i32
    %72 = arith.muli %c3_i32, %c128_i32_39 : i32
    %73 = tpu.assume_multiple %72, 128 : i32
    %74 = arith.index_cast %73 : i32 to index
    %c0_40 = arith.constant 0 : index
    %75 = vector.load %arg1[%74, %c0_40] : memref<512x8xbf16, #tpu.memory_space<vmem>>, vector<128x8xbf16>
    %c0_41 = arith.constant 0 : index
    %c0_42 = arith.constant 0 : index
    %76 = vector.load %arg2[%c0_41, %c0_42] : memref<8x384xbf16, #tpu.memory_space<vmem>>, vector<8x384xbf16>
    %cst_43 = arith.constant dense<0.000000e+00> : vector<128x384xf32>
    %77 = tpu.matmul %75, %76, %cst_43 {dimension_numbers = #tpu.dot_dimension_numbers<[1], [0], [0], [1], [0, 0, 1, 1], [], []>} : vector<128x8xbf16>, vector<8x384xbf16>, vector<128x384xf32> -> vector<128x384xf32>
    %78 = vector.extract_strided_slice %77 {offsets = [0, 0], sizes = [128, 128], strides = [1, 1]} : vector<128x384xf32> to vector<128x128xf32>
    %cst_44 = arith.constant 0.000000e+00 : f32
    %79 = vector.broadcast %cst_44 : f32 to vector<128x128xf32>
    %80 = arith.maximumf %78, %79 : vector<128x128xf32>
    %81 = arith.truncf %80 : vector<128x128xf32> to vector<128x128xbf16>
    %c0_45 = arith.constant 0 : index
    %c0_46 = arith.constant 0 : index
    %82 = vector.load %arg3[%c0_45, %c0_46] : memref<128x128xbf16, #tpu.memory_space<vmem>>, vector<128x128xbf16>
    %cst_47 = arith.constant dense<0.000000e+00> : vector<128x128xf32>
    %83 = tpu.matmul %81, %82, %cst_47 {dimension_numbers = #tpu.dot_dimension_numbers<[1], [0], [0], [1], [0, 0, 1, 1], [], []>} : vector<128x128xbf16>, vector<128x128xbf16>, vector<128x128xf32> -> vector<128x128xf32>
    %84 = vector.extract_strided_slice %77 {offsets = [0, 128], sizes = [128, 128], strides = [1, 1]} : vector<128x384xf32> to vector<128x128xf32>
    %85 = arith.addf %83, %84 : vector<128x128xf32>
    %cst_48 = arith.constant 0.000000e+00 : f32
    %86 = vector.broadcast %cst_48 : f32 to vector<128x128xf32>
    %87 = arith.maximumf %85, %86 : vector<128x128xf32>
    %88 = arith.truncf %87 : vector<128x128xf32> to vector<128x128xbf16>
    %c0_49 = arith.constant 0 : index
    %c0_50 = arith.constant 0 : index
    %89 = vector.load %arg4[%c0_49, %c0_50] : memref<128x128xbf16, #tpu.memory_space<vmem>>, vector<128x128xbf16>
    %cst_51 = arith.constant dense<0.000000e+00> : vector<128x128xf32>
    %90 = tpu.matmul %88, %89, %cst_51 {dimension_numbers = #tpu.dot_dimension_numbers<[1], [0], [0], [1], [0, 0, 1, 1], [], []>} : vector<128x128xbf16>, vector<128x128xbf16>, vector<128x128xf32> -> vector<128x128xf32>
    %91 = vector.extract_strided_slice %77 {offsets = [0, 256], sizes = [128, 128], strides = [1, 1]} : vector<128x384xf32> to vector<128x128xf32>
    %92 = arith.addf %90, %91 : vector<128x128xf32>
    %93 = arith.truncf %92 : vector<128x128xf32> to vector<128x128xbf16>
    %94 = arith.index_cast %73 : i32 to index
    %c0_52 = arith.constant 0 : index
    %95 = vector.load %arg5[%94, %c0_52] : memref<512x128xbf16, #tpu.memory_space<vmem>>, vector<128x128xbf16>
    tpu.vector_store %arg5[%94, %c0_52], %93 {strides = array<i32>} : memref<512x128xbf16, #tpu.memory_space<vmem>>, vector<128x128xbf16>,
    %c4_i32 = arith.constant 4 : i32
    return
  }
  func.func @transform_0(%arg0: i32) -> (i32, i32) {
    %c0_i32 = arith.constant 0 : i32
    %c0_i32_0 = arith.constant 0 : i32
    return %arg0, %c0_i32 : i32, i32
  }
  func.func @transform_1(%arg0: i32) -> (i32, i32) {
    %c0_i32 = arith.constant 0 : i32
    %c0_i32_0 = arith.constant 0 : i32
    %c0_i32_1 = arith.constant 0 : i32
    return %c0_i32, %c0_i32_0 : i32, i32
  }
  func.func @transform_2(%arg0: i32) -> (i32, i32) {
    %c0_i32 = arith.constant 0 : i32
    %c0_i32_0 = arith.constant 0 : i32
    %c0_i32_1 = arith.constant 0 : i32
    return %c0_i32, %c0_i32_0 : i32, i32
  }
  func.func @transform_3(%arg0: i32) -> (i32, i32) {
    %c0_i32 = arith.constant 0 : i32
    %c0_i32_0 = arith.constant 0 : i32
    %c0_i32_1 = arith.constant 0 : i32
    return %c0_i32, %c0_i32_0 : i32, i32
  }
  func.func @transform_4(%arg0: i32) -> (i32, i32) {
    %c0_i32 = arith.constant 0 : i32
    %c0_i32_0 = arith.constant 0 : i32
    return %arg0, %c0_i32 : i32, i32
  }
}

module attributes {stable_mosaic.version = 11 : i64} {
  func.func @customnet_kernel(%arg0: i32, %arg1: memref<512x8xbf16, #tpu.memory_space<vmem>>, %arg2: memref<8x384xbf16, #tpu.memory_space<vmem>>, %arg3: memref<128x128xbf16, #tpu.memory_space<vmem>>, %arg4: memref<128x128xbf16, #tpu.memory_space<vmem>>, %arg5: memref<512x128xbf16, #tpu.memory_space<vmem>>) attributes {dimension_semantics = [#tpu.dimension_semantics<parallel>], iteration_bounds = array<i64: 1>, scalar_prefetch = 0 : i64, scratch_operands = 0 : i64, tpu.core_type = #tpu.core_type<tc>, window_params = [{transform_indices = @transform_0, window_bounds = array<i64: 512, 8>}, {pipeline_mode = #tpu.pipeline_mode<synchronous>, transform_indices = @transform_1, window_bounds = array<i64: 8, 384>}, {pipeline_mode = #tpu.pipeline_mode<synchronous>, transform_indices = @transform_2, window_bounds = array<i64: 128, 128>}, {pipeline_mode = #tpu.pipeline_mode<synchronous>, transform_indices = @transform_3, window_bounds = array<i64: 128, 128>}, {transform_indices = @transform_4, window_bounds = array<i64: 512, 128>}]} {
    %c0_i32 = arith.constant 0 : i32
    %c128_i32 = arith.constant 128 : i32
    %0 = arith.muli %c0_i32, %c128_i32 : i32
    %1 = tpu.assume_multiple %0, 128 : i32
    %2 = arith.index_cast %1 : i32 to index
    %c0 = arith.constant 0 : index
    %3 = vector.load %arg1[%2, %c0] : memref<512x8xbf16, #tpu.memory_space<vmem>>, vector<128x8xbf16>
    %c0_0 = arith.constant 0 : index
    %c0_1 = arith.constant 0 : index
    %4 = vector.load %arg2[%c0_0, %c0_1] : memref<8x384xbf16, #tpu.memory_space<vmem>>, vector<8x384xbf16>
    %cst = arith.constant dense<0.000000e+00> : vector<128x384xf32>
    %5 = tpu.matmul %3, %4, %cst {dimension_numbers = #tpu.dot_dimension_numbers<[1], [0], [0], [1], [0, 0, 1, 1], [], []>} : vector<128x8xbf16>, vector<8x384xbf16>, vector<128x384xf32> -> vector<128x384xf32>
    %6 = vector.extract_strided_slice %5 {offsets = [0, 0], sizes = [128, 128], strides = [1, 1]} : vector<128x384xf32> to vector<128x128xf32>
    %cst_2 = arith.constant 0.000000e+00 : f32
    %7 = vector.broadcast %cst_2 : f32 to vector<128x128xf32>
    %8 = arith.maximumf %6, %7 : vector<128x128xf32>
    %9 = arith.truncf %8 : vector<128x128xf32> to vector<128x128xbf16>
    %c0_3 = arith.constant 0 : index
    %c0_4 = arith.constant 0 : index
    %10 = vector.load %arg3[%c0_3, %c0_4] : memref<128x128xbf16, #tpu.memory_space<vmem>>, vector<128x128xbf16>
    %cst_5 = arith.constant dense<0.000000e+00> : vector<128x128xf32>
    %11 = tpu.matmul %9, %10, %cst_5 {dimension_numbers = #tpu.dot_dimension_numbers<[1], [0], [0], [1], [0, 0, 1, 1], [], []>} : vector<128x128xbf16>, vector<128x128xbf16>, vector<128x128xf32> -> vector<128x128xf32>
    %12 = vector.extract_strided_slice %5 {offsets = [0, 128], sizes = [128, 128], strides = [1, 1]} : vector<128x384xf32> to vector<128x128xf32>
    %13 = arith.addf %11, %12 : vector<128x128xf32>
    %cst_6 = arith.constant 0.000000e+00 : f32
    %14 = vector.broadcast %cst_6 : f32 to vector<128x128xf32>
    %15 = arith.maximumf %13, %14 : vector<128x128xf32>
    %16 = arith.truncf %15 : vector<128x128xf32> to vector<128x128xbf16>
    %c0_7 = arith.constant 0 : index
    %c0_8 = arith.constant 0 : index
    %17 = vector.load %arg4[%c0_7, %c0_8] : memref<128x128xbf16, #tpu.memory_space<vmem>>, vector<128x128xbf16>
    %cst_9 = arith.constant dense<0.000000e+00> : vector<128x128xf32>
    %18 = tpu.matmul %16, %17, %cst_9 {dimension_numbers = #tpu.dot_dimension_numbers<[1], [0], [0], [1], [0, 0, 1, 1], [], []>} : vector<128x128xbf16>, vector<128x128xbf16>, vector<128x128xf32> -> vector<128x128xf32>
    %19 = vector.extract_strided_slice %5 {offsets = [0, 256], sizes = [128, 128], strides = [1, 1]} : vector<128x384xf32> to vector<128x128xf32>
    %20 = arith.addf %18, %19 : vector<128x128xf32>
    %21 = arith.truncf %20 : vector<128x128xf32> to vector<128x128xbf16>
    %22 = arith.index_cast %1 : i32 to index
    %c0_10 = arith.constant 0 : index
    %23 = vector.load %arg5[%22, %c0_10] : memref<512x128xbf16, #tpu.memory_space<vmem>>, vector<128x128xbf16>
    tpu.vector_store %arg5[%22, %c0_10], %21 {strides = array<i32>} : memref<512x128xbf16, #tpu.memory_space<vmem>>, vector<128x128xbf16>,
    %c1_i32 = arith.constant 1 : i32
    %c128_i32_11 = arith.constant 128 : i32
    %24 = arith.muli %c1_i32, %c128_i32_11 : i32
    %25 = tpu.assume_multiple %24, 128 : i32
    %26 = arith.index_cast %25 : i32 to index
    %c0_12 = arith.constant 0 : index
    %27 = vector.load %arg1[%26, %c0_12] : memref<512x8xbf16, #tpu.memory_space<vmem>>, vector<128x8xbf16>
    %c0_13 = arith.constant 0 : index
    %c0_14 = arith.constant 0 : index
    %28 = vector.load %arg2[%c0_13, %c0_14] : memref<8x384xbf16, #tpu.memory_space<vmem>>, vector<8x384xbf16>
    %cst_15 = arith.constant dense<0.000000e+00> : vector<128x384xf32>
    %29 = tpu.matmul %27, %28, %cst_15 {dimension_numbers = #tpu.dot_dimension_numbers<[1], [0], [0], [1], [0, 0, 1, 1], [], []>} : vector<128x8xbf16>, vector<8x384xbf16>, vector<128x384xf32> -> vector<128x384xf32>
    %30 = vector.extract_strided_slice %29 {offsets = [0, 0], sizes = [128, 128], strides = [1, 1]} : vector<128x384xf32> to vector<128x128xf32>
    %cst_16 = arith.constant 0.000000e+00 : f32
    %31 = vector.broadcast %cst_16 : f32 to vector<128x128xf32>
    %32 = arith.maximumf %30, %31 : vector<128x128xf32>
    %33 = arith.truncf %32 : vector<128x128xf32> to vector<128x128xbf16>
    %c0_17 = arith.constant 0 : index
    %c0_18 = arith.constant 0 : index
    %34 = vector.load %arg3[%c0_17, %c0_18] : memref<128x128xbf16, #tpu.memory_space<vmem>>, vector<128x128xbf16>
    %cst_19 = arith.constant dense<0.000000e+00> : vector<128x128xf32>
    %35 = tpu.matmul %33, %34, %cst_19 {dimension_numbers = #tpu.dot_dimension_numbers<[1], [0], [0], [1], [0, 0, 1, 1], [], []>} : vector<128x128xbf16>, vector<128x128xbf16>, vector<128x128xf32> -> vector<128x128xf32>
    %36 = vector.extract_strided_slice %29 {offsets = [0, 128], sizes = [128, 128], strides = [1, 1]} : vector<128x384xf32> to vector<128x128xf32>
    %37 = arith.addf %35, %36 : vector<128x128xf32>
    %cst_20 = arith.constant 0.000000e+00 : f32
    %38 = vector.broadcast %cst_20 : f32 to vector<128x128xf32>
    %39 = arith.maximumf %37, %38 : vector<128x128xf32>
    %40 = arith.truncf %39 : vector<128x128xf32> to vector<128x128xbf16>
    %c0_21 = arith.constant 0 : index
    %c0_22 = arith.constant 0 : index
    %41 = vector.load %arg4[%c0_21, %c0_22] : memref<128x128xbf16, #tpu.memory_space<vmem>>, vector<128x128xbf16>
    %cst_23 = arith.constant dense<0.000000e+00> : vector<128x128xf32>
    %42 = tpu.matmul %40, %41, %cst_23 {dimension_numbers = #tpu.dot_dimension_numbers<[1], [0], [0], [1], [0, 0, 1, 1], [], []>} : vector<128x128xbf16>, vector<128x128xbf16>, vector<128x128xf32> -> vector<128x128xf32>
    %43 = vector.extract_strided_slice %29 {offsets = [0, 256], sizes = [128, 128], strides = [1, 1]} : vector<128x384xf32> to vector<128x128xf32>
    %44 = arith.addf %42, %43 : vector<128x128xf32>
    %45 = arith.truncf %44 : vector<128x128xf32> to vector<128x128xbf16>
    %46 = arith.index_cast %25 : i32 to index
    %c0_24 = arith.constant 0 : index
    %47 = vector.load %arg5[%46, %c0_24] : memref<512x128xbf16, #tpu.memory_space<vmem>>, vector<128x128xbf16>
    tpu.vector_store %arg5[%46, %c0_24], %45 {strides = array<i32>} : memref<512x128xbf16, #tpu.memory_space<vmem>>, vector<128x128xbf16>,
    %c2_i32 = arith.constant 2 : i32
    %c128_i32_25 = arith.constant 128 : i32
    %48 = arith.muli %c2_i32, %c128_i32_25 : i32
    %49 = tpu.assume_multiple %48, 128 : i32
    %50 = arith.index_cast %49 : i32 to index
    %c0_26 = arith.constant 0 : index
    %51 = vector.load %arg1[%50, %c0_26] : memref<512x8xbf16, #tpu.memory_space<vmem>>, vector<128x8xbf16>
    %c0_27 = arith.constant 0 : index
    %c0_28 = arith.constant 0 : index
    %52 = vector.load %arg2[%c0_27, %c0_28] : memref<8x384xbf16, #tpu.memory_space<vmem>>, vector<8x384xbf16>
    %cst_29 = arith.constant dense<0.000000e+00> : vector<128x384xf32>
    %53 = tpu.matmul %51, %52, %cst_29 {dimension_numbers = #tpu.dot_dimension_numbers<[1], [0], [0], [1], [0, 0, 1, 1], [], []>} : vector<128x8xbf16>, vector<8x384xbf16>, vector<128x384xf32> -> vector<128x384xf32>
    %54 = vector.extract_strided_slice %53 {offsets = [0, 0], sizes = [128, 128], strides = [1, 1]} : vector<128x384xf32> to vector<128x128xf32>
    %cst_30 = arith.constant 0.000000e+00 : f32
    %55 = vector.broadcast %cst_30 : f32 to vector<128x128xf32>
    %56 = arith.maximumf %54, %55 : vector<128x128xf32>
    %57 = arith.truncf %56 : vector<128x128xf32> to vector<128x128xbf16>
    %c0_31 = arith.constant 0 : index
    %c0_32 = arith.constant 0 : index
    %58 = vector.load %arg3[%c0_31, %c0_32] : memref<128x128xbf16, #tpu.memory_space<vmem>>, vector<128x128xbf16>
    %cst_33 = arith.constant dense<0.000000e+00> : vector<128x128xf32>
    %59 = tpu.matmul %57, %58, %cst_33 {dimension_numbers = #tpu.dot_dimension_numbers<[1], [0], [0], [1], [0, 0, 1, 1], [], []>} : vector<128x128xbf16>, vector<128x128xbf16>, vector<128x128xf32> -> vector<128x128xf32>
    %60 = vector.extract_strided_slice %53 {offsets = [0, 128], sizes = [128, 128], strides = [1, 1]} : vector<128x384xf32> to vector<128x128xf32>
    %61 = arith.addf %59, %60 : vector<128x128xf32>
    %cst_34 = arith.constant 0.000000e+00 : f32
    %62 = vector.broadcast %cst_34 : f32 to vector<128x128xf32>
    %63 = arith.maximumf %61, %62 : vector<128x128xf32>
    %64 = arith.truncf %63 : vector<128x128xf32> to vector<128x128xbf16>
    %c0_35 = arith.constant 0 : index
    %c0_36 = arith.constant 0 : index
    %65 = vector.load %arg4[%c0_35, %c0_36] : memref<128x128xbf16, #tpu.memory_space<vmem>>, vector<128x128xbf16>
    %cst_37 = arith.constant dense<0.000000e+00> : vector<128x128xf32>
    %66 = tpu.matmul %64, %65, %cst_37 {dimension_numbers = #tpu.dot_dimension_numbers<[1], [0], [0], [1], [0, 0, 1, 1], [], []>} : vector<128x128xbf16>, vector<128x128xbf16>, vector<128x128xf32> -> vector<128x128xf32>
    %67 = vector.extract_strided_slice %53 {offsets = [0, 256], sizes = [128, 128], strides = [1, 1]} : vector<128x384xf32> to vector<128x128xf32>
    %68 = arith.addf %66, %67 : vector<128x128xf32>
    %69 = arith.truncf %68 : vector<128x128xf32> to vector<128x128xbf16>
    %70 = arith.index_cast %49 : i32 to index
    %c0_38 = arith.constant 0 : index
    %71 = vector.load %arg5[%70, %c0_38] : memref<512x128xbf16, #tpu.memory_space<vmem>>, vector<128x128xbf16>
    tpu.vector_store %arg5[%70, %c0_38], %69 {strides = array<i32>} : memref<512x128xbf16, #tpu.memory_space<vmem>>, vector<128x128xbf16>,
    %c3_i32 = arith.constant 3 : i32
    %c128_i32_39 = arith.constant 128 : i32
    %72 = arith.muli %c3_i32, %c128_i32_39 : i32
    %73 = tpu.assume_multiple %72, 128 : i32
    %74 = arith.index_cast %73 : i32 to index
    %c0_40 = arith.constant 0 : index
    %75 = vector.load %arg1[%74, %c0_40] : memref<512x8xbf16, #tpu.memory_space<vmem>>, vector<128x8xbf16>
    %c0_41 = arith.constant 0 : index
    %c0_42 = arith.constant 0 : index
    %76 = vector.load %arg2[%c0_41, %c0_42] : memref<8x384xbf16, #tpu.memory_space<vmem>>, vector<8x384xbf16>
    %cst_43 = arith.constant dense<0.000000e+00> : vector<128x384xf32>
    %77 = tpu.matmul %75, %76, %cst_43 {dimension_numbers = #tpu.dot_dimension_numbers<[1], [0], [0], [1], [0, 0, 1, 1], [], []>} : vector<128x8xbf16>, vector<8x384xbf16>, vector<128x384xf32> -> vector<128x384xf32>
    %78 = vector.extract_strided_slice %77 {offsets = [0, 0], sizes = [128, 128], strides = [1, 1]} : vector<128x384xf32> to vector<128x128xf32>
    %cst_44 = arith.constant 0.000000e+00 : f32
    %79 = vector.broadcast %cst_44 : f32 to vector<128x128xf32>
    %80 = arith.maximumf %78, %79 : vector<128x128xf32>
    %81 = arith.truncf %80 : vector<128x128xf32> to vector<128x128xbf16>
    %c0_45 = arith.constant 0 : index
    %c0_46 = arith.constant 0 : index
    %82 = vector.load %arg3[%c0_45, %c0_46] : memref<128x128xbf16, #tpu.memory_space<vmem>>, vector<128x128xbf16>
    %cst_47 = arith.constant dense<0.000000e+00> : vector<128x128xf32>
    %83 = tpu.matmul %81, %82, %cst_47 {dimension_numbers = #tpu.dot_dimension_numbers<[1], [0], [0], [1], [0, 0, 1, 1], [], []>} : vector<128x128xbf16>, vector<128x128xbf16>, vector<128x128xf32> -> vector<128x128xf32>
    %84 = vector.extract_strided_slice %77 {offsets = [0, 128], sizes = [128, 128], strides = [1, 1]} : vector<128x384xf32> to vector<128x128xf32>
    %85 = arith.addf %83, %84 : vector<128x128xf32>
    %cst_48 = arith.constant 0.000000e+00 : f32
    %86 = vector.broadcast %cst_48 : f32 to vector<128x128xf32>
    %87 = arith.maximumf %85, %86 : vector<128x128xf32>
    %88 = arith.truncf %87 : vector<128x128xf32> to vector<128x128xbf16>
    %c0_49 = arith.constant 0 : index
    %c0_50 = arith.constant 0 : index
    %89 = vector.load %arg4[%c0_49, %c0_50] : memref<128x128xbf16, #tpu.memory_space<vmem>>, vector<128x128xbf16>
    %cst_51 = arith.constant dense<0.000000e+00> : vector<128x128xf32>
    %90 = tpu.matmul %88, %89, %cst_51 {dimension_numbers = #tpu.dot_dimension_numbers<[1], [0], [0], [1], [0, 0, 1, 1], [], []>} : vector<128x128xbf16>, vector<128x128xbf16>, vector<128x128xf32> -> vector<128x128xf32>
    %91 = vector.extract_strided_slice %77 {offsets = [0, 256], sizes = [128, 128], strides = [1, 1]} : vector<128x384xf32> to vector<128x128xf32>
    %92 = arith.addf %90, %91 : vector<128x128xf32>
    %93 = arith.truncf %92 : vector<128x128xf32> to vector<128x128xbf16>
    %94 = arith.index_cast %73 : i32 to index
    %c0_52 = arith.constant 0 : index
    %95 = vector.load %arg5[%94, %c0_52] : memref<512x128xbf16, #tpu.memory_space<vmem>>, vector<128x128xbf16>
    tpu.vector_store %arg5[%94, %c0_52], %93 {strides = array<i32>} : memref<512x128xbf16, #tpu.memory_space<vmem>>, vector<128x128xbf16>,
    %c4_i32 = arith.constant 4 : i32
    return
  }
  func.func @transform_0(%arg0: i32) -> (i32, i32) {
    %c0_i32 = arith.constant 0 : i32
    %c0_i32_0 = arith.constant 0 : i32
    return %arg0, %c0_i32 : i32, i32
  }
  func.func @transform_1(%arg0: i32) -> (i32, i32) {
    %c0_i32 = arith.constant 0 : i32
    %c0_i32_0 = arith.constant 0 : i32
    %c0_i32_1 = arith.constant 0 : i32
    return %c0_i32, %c0_i32_0 : i32, i32
  }
  func.func @transform_2(%arg0: i32) -> (i32, i32) {
    %c0_i32 = arith.constant 0 : i32
    %c0_i32_0 = arith.constant 0 : i32
    %c0_i32_1 = arith.constant 0 : i32
    return %c0_i32, %c0_i32_0 : i32, i32
  }
  func.func @transform_3(%arg0: i32) -> (i32, i32) {
    %c0_i32 = arith.constant 0 : i32
    %c0_i32_0 = arith.constant 0 : i32
    %c0_i32_1 = arith.constant 0 : i32
    return %c0_i32, %c0_i32_0 : i32, i32
  }
  func.func @transform_4(%arg0: i32) -> (i32, i32) {
    %c0_i32 = arith.constant 0 : i32
    %c0_i32_0 = arith.constant 0 : i32
    return %arg0, %c0_i32 : i32, i32
  }
}

</mosaic_0001>

<llo_original>
// kernel: tpu_custom_call.1
$region0: #{tpu_custom_call.1}
  #allocation0 [shape = 'u32[]', space=smem, size = 0x4, offset = 0x4, fixed_abs, tag = 'smem constant byte address 0x4 - core index']
  #allocation1 [shape = 'u32[144,128]{1,0:T(1,128)}', space=vmem, size = 0x12000, scoped, tag = 'internal scratch']
  %s0 = inlined_call_operand.vmem [shape: bf16[512,8], index: 0, kind: input, shape index: {}]
  %s1 = inlined_call_operand.vmem [shape: bf16[8,384], index: 1, kind: input, shape index: {}]
  %s2 = inlined_call_operand.vmem [shape: bf16[128,128], index: 2, kind: input, shape index: {}]
  %s3 = inlined_call_operand.vmem [shape: bf16[128,128], index: 3, kind: input, shape index: {}]
  %s4 = inlined_call_operand.hbm [shape: bf16[512,128], index: 4, kind: output, shape index: {}]
  %s5 = sld [smem:[#allocation0]]
  $region26: #{tpu_custom_call.1} parent=0
    _
  %s7 = ssub.s32 1, %s5
  %s8 = scalar_select 0, %s7, %s5
  $region1: #{tpu_custom_call.1} parent=0
    #allocation2 [shape = 'u8[131072]{0}', space=vmem, size = 0x20000, scoped, tag = 'output window, operand 0, single buffered']
    #allocation3 [shape = 's32[1]{0}', space=sflag, size = 0x4, scoped, tag = 'scoped memory for tpu_custom_call.1']
    %9 = vsyncpa [#allocation3], 0
    // Predicated region
    $region2: #{tpu_custom_call.1} parent=1 // pred_check
      _
    $region3: #{tpu_custom_call.1} parent=1 // pred_check_branch
      %11 = sbr.rel (0) target = $region5
    $region4: #{tpu_custom_call.1} parent=1 // pred_region
      _
    $region5: #{tpu_custom_call.1} parent=1 // pred_fallthru
      _
    // Predicated region
    $region6: #{tpu_custom_call.1} parent=1 // pred_check
      _
    $region7: #{tpu_custom_call.1} parent=1 // pred_check_branch
      %13 = sbr.rel (0) target = $region9
    $region8: #{tpu_custom_call.1} parent=1 // pred_region
      _
    $region9: #{tpu_custom_call.1} parent=1 // pred_fallthru
      _
    // Predicated region
    $region10: #{tpu_custom_call.1} parent=1 // pred_check
      _
    $region11: #{tpu_custom_call.1} parent=1 // pred_check_branch
      %15 = sbr.rel (0) target = $region13
    $region12: #{tpu_custom_call.1} parent=1 // pred_region
      _
    $region13: #{tpu_custom_call.1} parent=1 // pred_fallthru
      _
    // Predicated region
    $region14: #{tpu_custom_call.1} parent=1 // pred_check
      _
    $region15: #{tpu_custom_call.1} parent=1 // pred_check_branch
      %17 = sbr.rel (0) target = $region17
    $region16: #{tpu_custom_call.1} parent=1 // pred_region
      _
    $region17: #{tpu_custom_call.1} parent=1 // pred_fallthru
      _
    %v19 = vld [vmem:[%s0] sm:$0xf]
    %v20 = vld [vmem:[%s0 + $0x4] sm:$0xf]
    %v21 = vld [vmem:[%s0 + $0x8] sm:$0xf]
    %v22 = vld [vmem:[%s0 + $0xc] sm:$0xf]
    %v23 = vld [vmem:[%s0 + $0x10] sm:$0xf]
    %v24 = vld [vmem:[%s0 + $0x14] sm:$0xf]
    %v25 = vld [vmem:[%s0 + $0x18] sm:$0xf]
    %v26 = vld [vmem:[%s0 + $0x1c] sm:$0xf]
    %v27 = vld [vmem:[%s0 + $0x20] sm:$0xf]
    %v28 = vld [vmem:[%s0 + $0x24] sm:$0xf]
    %v29 = vld [vmem:[%s0 + $0x28] sm:$0xf]
    %v30 = vld [vmem:[%s0 + $0x2c] sm:$0xf]
    %v31 = vld [vmem:[%s0 + $0x30] sm:$0xf]
    %v32 = vld [vmem:[%s0 + $0x34] sm:$0xf]
    %v33 = vld [vmem:[%s0 + $0x38] sm:$0xf]
    %v34 = vld [vmem:[%s0 + $0x3c] sm:$0xf]
    %v35 = vld [vmem:[%s1] sm:$0xff]
    %v36 = vld [vmem:[%s1 + $0x8] sm:$0xf]
    %v53 = vunpack.c.l.b16 %v19
    %v54 = vunpack.c.l.b16 %v20
    %v55 = vunpack.c.l.b16 %v21
    %v56 = vunpack.c.l.b16 %v22
    %v57 = vunpack.c.l.b16 %v23
    %v58 = vunpack.c.l.b16 %v24
    %v59 = vunpack.c.l.b16 %v25
    %v60 = vunpack.c.l.b16 %v26
    %v61 = vunpack.c.l.b16 %v27
    %v62 = vunpack.c.l.b16 %v28
    %v63 = vunpack.c.l.b16 %v29
    %v64 = vunpack.c.l.b16 %v30
    %v65 = vunpack.c.l.b16 %v31
    %v66 = vunpack.c.l.b16 %v32
    %v67 = vunpack.c.l.b16 %v33
    %v68 = vunpack.c.l.b16 %v34
    %v69 = vpack.c.b16 %v54, %v53
    %v70 = vpack.c.b16 %v56, %v55
    %v71 = vpack.c.b16 %v58, %v57
    %v72 = vpack.c.b16 %v60, %v59
    %v73 = vpack.c.b16 %v62, %v61
    %v74 = vpack.c.b16 %v64, %v63
    %v75 = vpack.c.b16 %v66, %v65
    %v76 = vpack.c.b16 %v68, %v67
    %v79 = vunpack.c.l.b16 %v35
    %v80 = vunpack.c.h.b16 %v35
    %v81 = vunpack.c.l.b16 %v36
    %v82 = vpack.c.b16 %v79, %v79
    %v83 = vpack.c.b16 %v80, %v80
    %v84 = vpack.c.b16 %v81, %v81
    %vm85 = vcmask 64512
    %v87 = vsel %vm85, %v69, 0
    %v90 = vsel %vm85, %v70, 0
    %v93 = vsel %vm85, %v71, 0
    %v96 = vsel %vm85, %v72, 0
    %v99 = vsel %vm85, %v73, 0
    %v102 = vsel %vm85, %v74, 0
    %v105 = vsel %vm85, %v75, 0
    %v108 = vsel %vm85, %v76, 0
    %vm110 = vcmask 1043456
    %v112 = vsel %vm110, %v82, 0
    %v115 = vsel %vm110, %v83, 0
    %v118 = vsel %vm110, %v84, 0
    %120 = vmatprep.subr.bf16.mxu0 %v115
    %121 = vmatpush1.bf16.msra.mxu0 %v112
    %122 = vmatprep.subr.bf16.mxu0 0
    %123 = vmatpush1.bf16.msra.mxu0 0
    %124 = vmatprep.subr.bf16.mxu0 0
    %125 = vmatpush1.bf16.msra.mxu0 0
    %126 = vmatprep.subr.bf16.mxu0 0
    %127 = vmatpush1.bf16.msra.mxu0 0
    %128 = vmatprep.subr.bf16.mxu0 0
    %129 = vmatpush1.bf16.msra.mxu0 0
    %130 = vmatprep.subr.bf16.mxu0 0
    %131 = vmatpush1.bf16.msra.mxu0 0
    %132 = vmatprep.subr.bf16.mxu0 0
    %133 = vmatpush1.bf16.msra.mxu0 0
    %134 = vmatprep.subr.bf16.mxu0 0
    %135 = vmatpush1.bf16.msra.mxu0 0
    %136 = vmatprep.subr.bf16.mxu0 0
    %137 = vmatpush1.bf16.msra.mxu0 0
    %138 = vmatprep.subr.bf16.mxu0 0
    %139 = vmatpush1.bf16.msra.mxu0 0
    %140 = vmatprep.subr.bf16.mxu0 0
    %141 = vmatpush1.bf16.msra.mxu0 0
    %142 = vmatprep.subr.bf16.mxu0 0
    %143 = vmatpush1.bf16.msra.mxu0 0
    %144 = vmatprep.subr.bf16.mxu0 0
    %145 = vmatpush1.bf16.msra.mxu0 0
    %146 = vmatprep.subr.bf16.mxu0 0
    %147 = vmatpush1.bf16.msra.mxu0 0
    %148 = vmatprep.subr.bf16.mxu0 0
    %149 = vmatpush1.bf16.msra.mxu0 0
    %150 = vmatprep.subr.bf16.mxu0 0
    %151 = vmatpush1.bf16.msra.mxu0 0
    %152 = vmatprep.mubr.bf16.mxu0 0
    %153 = vmatmul.mubr.bf16.gmra.mrb[0].mxu0 %v87
    %v154 = vpop.f32.mrb[0].mxu0
    %v155 = vadd.f32 0.0, %v154
    %v156 = vpop.f32.mrb[0].mxu0
    %v157 = vadd.f32 0.0, %v156
    %v158 = vpop.f32.mrb[0].mxu0
    %v159 = vadd.f32 0.0, %v158
    %v160 = vpop.f32.mrb[0].mxu0
    %v161 = vadd.f32 0.0, %v160
    %162 = vmatprep.mubr.bf16.mxu0 0
    %163 = vmatmul.mubr.bf16.gmra.mrb[0].mxu0 %v90
    %v164 = vpop.f32.mrb[0].mxu0
    %v165 = vadd.f32 0.0, %v164
    %v166 = vpop.f32.mrb[0].mxu0
    %v167 = vadd.f32 0.0, %v166
    %v168 = vpop.f32.mrb[0].mxu0
    %v169 = vadd.f32 0.0, %v168
    %v170 = vpop.f32.mrb[0].mxu0
    %v171 = vadd.f32 0.0, %v170
    %172 = vmatprep.mubr.bf16.mxu0 0
    %173 = vmatmul.mubr.bf16.gmra.mrb[0].mxu0 %v93
    %v174 = vpop.f32.mrb[0].mxu0
    %v175 = vadd.f32 0.0, %v174
    %v176 = vpop.f32.mrb[0].mxu0
    %v177 = vadd.f32 0.0, %v176
    %v178 = vpop.f32.mrb[0].mxu0
    %v179 = vadd.f32 0.0, %v178
    %v180 = vpop.f32.mrb[0].mxu0
    %v181 = vadd.f32 0.0, %v180
    %182 = vmatprep.mubr.bf16.mxu0 0
    %183 = vmatmul.mubr.bf16.gmra.mrb[0].mxu0 %v96
    %v184 = vpop.f32.mrb[0].mxu0
    %v185 = vadd.f32 0.0, %v184
    %v186 = vpop.f32.mrb[0].mxu0
    %v187 = vadd.f32 0.0, %v186
    %v188 = vpop.f32.mrb[0].mxu0
    %v189 = vadd.f32 0.0, %v188
    %v190 = vpop.f32.mrb[0].mxu0
    %v191 = vadd.f32 0.0, %v190
    %192 = vmatprep.mubr.bf16.mxu0 0
    %193 = vmatmul.mubr.bf16.gmra.mrb[0].mxu0 %v99
    %v194 = vpop.f32.mrb[0].mxu0
    %v195 = vadd.f32 0.0, %v194
    %v196 = vpop.f32.mrb[0].mxu0
    %v197 = vadd.f32 0.0, %v196
    %v198 = vpop.f32.mrb[0].mxu0
    %v199 = vadd.f32 0.0, %v198
    %v200 = vpop.f32.mrb[0].mxu0
    %v201 = vadd.f32 0.0, %v200
    %202 = vmatprep.mubr.bf16.mxu0 0
    %203 = vmatmul.mubr.bf16.gmra.mrb[0].mxu0 %v102
    %v204 = vpop.f32.mrb[0].mxu0
    %v205 = vadd.f32 0.0, %v204
    %v206 = vpop.f32.mrb[0].mxu0
    %v207 = vadd.f32 0.0, %v206
    %v208 = vpop.f32.mrb[0].mxu0
    %v209 = vadd.f32 0.0, %v208
    %v210 = vpop.f32.mrb[0].mxu0
    %v211 = vadd.f32 0.0, %v210
    %212 = vmatprep.mubr.bf16.mxu0 0
    %213 = vmatmul.mubr.bf16.gmra.mrb[0].mxu0 %v105
    %v214 = vpop.f32.mrb[0].mxu0
    %v215 = vadd.f32 0.0, %v214
    %v216 = vpop.f32.mrb[0].mxu0
    %v217 = vadd.f32 0.0, %v216
    %v218 = vpop.f32.mrb[0].mxu0
    %v219 = vadd.f32 0.0, %v218
    %v220 = vpop.f32.mrb[0].mxu0
    %v221 = vadd.f32 0.0, %v220
    %222 = vmatprep.mubr.bf16.mxu0 0
    %223 = vmatmul.mubr.bf16.gmra.mrb[0].mxu0 %v108
    %v224 = vpop.f32.mrb[0].mxu0
    %v225 = vadd.f32 0.0, %v224
    %v226 = vpop.f32.mrb[0].mxu0
    %v227 = vadd.f32 0.0, %v226
    %v228 = vpop.f32.mrb[0].mxu0
    %v229 = vadd.f32 0.0, %v228
    %v230 = vpop.f32.mrb[0].mxu0
    %v231 = vadd.f32 0.0, %v230
    %232 = vdwg.mxu0
    %233 = vmatprep.subr.bf16.mxu0 0
    %234 = vmatpush1.bf16.msra.mxu0 %v118
    %235 = vmatprep.subr.bf16.mxu0 0
    %236 = vmatpush1.bf16.msra.mxu0 0
    %237 = vmatprep.subr.bf16.mxu0 0
    %238 = vmatpush1.bf16.msra.mxu0 0
    %239 = vmatprep.subr.bf16.mxu0 0
    %240 = vmatpush1.bf16.msra.mxu0 0
    %241 = vmatprep.subr.bf16.mxu0 0
    %242 = vmatpush1.bf16.msra.mxu0 0
    %243 = vmatprep.subr.bf16.mxu0 0
    %244 = vmatpush1.bf16.msra.mxu0 0
    %245 = vmatprep.subr.bf16.mxu0 0
    %246 = vmatpush1.bf16.msra.mxu0 0
    %247 = vmatprep.subr.bf16.mxu0 0
    %248 = vmatpush1.bf16.msra.mxu0 0
    %249 = vmatprep.subr.bf16.mxu0 0
    %250 = vmatpush1.bf16.msra.mxu0 0
    %251 = vmatprep.subr.bf16.mxu0 0
    %252 = vmatpush1.bf16.msra.mxu0 0
    %253 = vmatprep.subr.bf16.mxu0 0
    %254 = vmatpush1.bf16.msra.mxu0 0
    %255 = vmatprep.subr.bf16.mxu0 0
    %256 = vmatpush1.bf16.msra.mxu0 0
    %257 = vmatprep.subr.bf16.mxu0 0
    %258 = vmatpush1.bf16.msra.mxu0 0
    %259 = vmatprep.subr.bf16.mxu0 0
    %260 = vmatpush1.bf16.msra.mxu0 0
    %261 = vmatprep.subr.bf16.mxu0 0
    %262 = vmatpush1.bf16.msra.mxu0 0
    %263 = vmatprep.subr.bf16.mxu0 0
    %264 = vmatpush1.bf16.msra.mxu0 0
    %265 = vmatprep.mubr.bf16.mxu0 0
    %266 = vmatmul.mubr.bf16.gmra.mrb[0].mxu0 %v87
    %v267 = vpop.f32.mrb[0].mxu0
    %v268 = vadd.f32 0.0, %v267
    %v269 = vpop.f32.mrb[0].mxu0
    %v270 = vpop.f32.mrb[0].mxu0
    %v271 = vadd.f32 0.0, %v270
    %v272 = vpop.f32.mrb[0].mxu0
    %273 = vmatprep.mubr.bf16.mxu0 0
    %274 = vmatmul.mubr.bf16.gmra.mrb[0].mxu0 %v90
    %v275 = vpop.f32.mrb[0].mxu0
    %v276 = vadd.f32 0.0, %v275
    %v277 = vpop.f32.mrb[0].mxu0
    %v278 = vpop.f32.mrb[0].mxu0
    %v279 = vadd.f32 0.0, %v278
    %v280 = vpop.f32.mrb[0].mxu0
    %281 = vmatprep.mubr.bf16.mxu0 0
    %282 = vmatmul.mubr.bf16.gmra.mrb[0].mxu0 %v93
    %v283 = vpop.f32.mrb[0].mxu0
    %v284 = vadd.f32 0.0, %v283
    %v285 = vpop.f32.mrb[0].mxu0
    %v286 = vpop.f32.mrb[0].mxu0
    %v287 = vadd.f32 0.0, %v286
    %v288 = vpop.f32.mrb[0].mxu0
    %289 = vmatprep.mubr.bf16.mxu0 0
    %290 = vmatmul.mubr.bf16.gmra.mrb[0].mxu0 %v96
    %v291 = vpop.f32.mrb[0].mxu0
    %v292 = vadd.f32 0.0, %v291
    %v293 = vpop.f32.mrb[0].mxu0
    %v294 = vpop.f32.mrb[0].mxu0
    %v295 = vadd.f32 0.0, %v294
    %v296 = vpop.f32.mrb[0].mxu0
    %297 = vmatprep.mubr.bf16.mxu0 0
    %298 = vmatmul.mubr.bf16.gmra.mrb[0].mxu0 %v99
    %v299 = vpop.f32.mrb[0].mxu0
    %v300 = vadd.f32 0.0, %v299
    %v301 = vpop.f32.mrb[0].mxu0
    %v302 = vpop.f32.mrb[0].mxu0
    %v303 = vadd.f32 0.0, %v302
    %v304 = vpop.f32.mrb[0].mxu0
    %305 = vmatprep.mubr.bf16.mxu0 0
    %306 = vmatmul.mubr.bf16.gmra.mrb[0].mxu0 %v102
    %v307 = vpop.f32.mrb[0].mxu0
    %v308 = vadd.f32 0.0, %v307
    %v309 = vpop.f32.mrb[0].mxu0
    %v310 = vpop.f32.mrb[0].mxu0
    %v311 = vadd.f32 0.0, %v310
    %v312 = vpop.f32.mrb[0].mxu0
    %313 = vmatprep.mubr.bf16.mxu0 0
    %314 = vmatmul.mubr.bf16.gmra.mrb[0].mxu0 %v105
    %v315 = vpop.f32.mrb[0].mxu0
    %v316 = vadd.f32 0.0, %v315
    %v317 = vpop.f32.mrb[0].mxu0
    %v318 = vpop.f32.mrb[0].mxu0
    %v319 = vadd.f32 0.0, %v318
    %v320 = vpop.f32.mrb[0].mxu0
    %321 = vmatprep.mubr.bf16.mxu0 0
    %322 = vmatmul.mubr.bf16.gmra.mrb[0].mxu0 %v108
    %v323 = vpop.f32.mrb[0].mxu0
    %v324 = vadd.f32 0.0, %v323
    %v325 = vpop.f32.mrb[0].mxu0
    %v326 = vpop.f32.mrb[0].mxu0
    %v327 = vadd.f32 0.0, %v326
    %v328 = vpop.f32.mrb[0].mxu0
    %329 = vdwg.mxu0
    %v330 = vmax.f32 %v155, 0.0
    %v331 = vmax.f32 %v159, 0.0
    %v332 = vmax.f32 %v165, 0.0
    %v333 = vmax.f32 %v169, 0.0
    %v334 = vmax.f32 %v175, 0.0
    %v335 = vmax.f32 %v179, 0.0
    %v336 = vmax.f32 %v185, 0.0
    %v337 = vmax.f32 %v189, 0.0
    %v338 = vmax.f32 %v195, 0.0
    %v339 = vmax.f32 %v199, 0.0
    %v340 = vmax.f32 %v205, 0.0
    %v341 = vmax.f32 %v209, 0.0
    %v342 = vmax.f32 %v215, 0.0
    %v343 = vmax.f32 %v219, 0.0
    %v344 = vmax.f32 %v225, 0.0
    %v345 = vmax.f32 %v229, 0.0
    %v346 = vpack.c.bf16 %v331, %v330
    %v347 = vpack.c.bf16 %v333, %v332
    %v348 = vpack.c.bf16 %v335, %v334
    %v349 = vpack.c.bf16 %v337, %v336
    %v350 = vpack.c.bf16 %v339, %v338
    %v351 = vpack.c.bf16 %v341, %v340
    %v352 = vpack.c.bf16 %v343, %v342
    %v353 = vpack.c.bf16 %v345, %v344
    %v354 = vld [vmem:[%s2] sm:$0xf]
    %v355 = vld [vmem:[%s2 + $0x4] sm:$0xf]
    %v356 = vld [vmem:[%s2 + $0x8] sm:$0xf]
    %v357 = vld [vmem:[%s2 + $0xc] sm:$0xf]
    %v358 = vld [vmem:[%s2 + $0x10] sm:$0xf]
    %v359 = vld [vmem:[%s2 + $0x14] sm:$0xf]
    %v360 = vld [vmem:[%s2 + $0x18] sm:$0xf]
    %v361 = vld [vmem:[%s2 + $0x1c] sm:$0xf]
    %v362 = vld [vmem:[%s2 + $0x20] sm:$0xf]
    %v363 = vld [vmem:[%s2 + $0x24] sm:$0xf]
    %v364 = vld [vmem:[%s2 + $0x28] sm:$0xf]
    %v365 = vld [vmem:[%s2 + $0x2c] sm:$0xf]
    %v366 = vld [vmem:[%s2 + $0x30] sm:$0xf]
    %v367 = vld [vmem:[%s2 + $0x34] sm:$0xf]
    %v368 = vld [vmem:[%s2 + $0x38] sm:$0xf]
    %v369 = vld [vmem:[%s2 + $0x3c] sm:$0xf]
    %v386 = vunpack.c.l.b16 %v354
    %v387 = vunpack.c.l.b16 %v355
    %v388 = vunpack.c.l.b16 %v356
    %v389 = vunpack.c.l.b16 %v357
    %v390 = vunpack.c.l.b16 %v358
    %v391 = vunpack.c.l.b16 %v359
    %v392 = vunpack.c.l.b16 %v360
    %v393 = vunpack.c.l.b16 %v361
    %v394 = vunpack.c.l.b16 %v362
    %v395 = vunpack.c.l.b16 %v363
    %v396 = vunpack.c.l.b16 %v364
    %v397 = vunpack.c.l.b16 %v365
    %v398 = vunpack.c.l.b16 %v366
    %v399 = vunpack.c.l.b16 %v367
    %v400 = vunpack.c.l.b16 %v368
    %v401 = vunpack.c.l.b16 %v369
    %v402 = vpack.c.b16 %v387, %v386
    %v403 = vpack.c.b16 %v389, %v388
    %v404 = vpack.c.b16 %v391, %v390
    %v405 = vpack.c.b16 %v393, %v392
    %v406 = vpack.c.b16 %v395, %v394
    %v407 = vpack.c.b16 %v397, %v396
    %v408 = vpack.c.b16 %v399, %v398
    %v409 = vpack.c.b16 %v401, %v400
    %418 = vmatprep.subr.bf16.mxu0 0
    %419 = vmatpush1.bf16.msra.mxu0 %v402
    %420 = vmatprep.subr.bf16.mxu0 0
    %421 = vmatpush1.bf16.msra.mxu0 %v403
    %422 = vmatprep.subr.bf16.mxu0 0
    %423 = vmatpush1.bf16.msra.mxu0 %v404
    %424 = vmatprep.subr.bf16.mxu0 0
    %425 = vmatpush1.bf16.msra.mxu0 %v405
    %426 = vmatprep.subr.bf16.mxu0 0
    %427 = vmatpush1.bf16.msra.mxu0 %v406
    %428 = vmatprep.subr.bf16.mxu0 0
    %429 = vmatpush1.bf16.msra.mxu0 %v407
    %430 = vmatprep.subr.bf16.mxu0 0
    %431 = vmatpush1.bf16.msra.mxu0 %v408
    %432 = vmatprep.subr.bf16.mxu0 0
    %433 = vmatpush1.bf16.msra.mxu0 %v409
    %434 = vmatprep.subr.bf16.mxu0 0
    %435 = vmatpush1.bf16.msra.mxu0 0
    %436 = vmatprep.subr.bf16.mxu0 0
    %437 = vmatpush1.bf16.msra.mxu0 0
    %438 = vmatprep.subr.bf16.mxu0 0
    %439 = vmatpush1.bf16.msra.mxu0 0
    %440 = vmatprep.subr.bf16.mxu0 0
    %441 = vmatpush1.bf16.msra.mxu0 0
    %442 = vmatprep.subr.bf16.mxu0 0
    %443 = vmatpush1.bf16.msra.mxu0 0
    %444 = vmatprep.subr.bf16.mxu0 0
    %445 = vmatpush1.bf16.msra.mxu0 0
    %446 = vmatprep.subr.bf16.mxu0 0
    %447 = vmatpush1.bf16.msra.mxu0 0
    %448 = vmatprep.subr.bf16.mxu0 0
    %449 = vmatpush1.bf16.msra.mxu0 0
    %450 = vmatprep.mubr.bf16.mxu0 0
    %451 = vmatmul.mubr.bf16.gmra.mrb[0].mxu0 %v346
    %v452 = vpop.f32.mrb[0].mxu0
    %v453 = vadd.f32 %v157, %v452
    %v454 = vpop.f32.mrb[0].mxu0
    %v455 = vpop.f32.mrb[0].mxu0
    %v456 = vadd.f32 %v161, %v455
    %v457 = vpop.f32.mrb[0].mxu0
    %458 = vmatprep.mubr.bf16.mxu0 0
    %459 = vmatmul.mubr.bf16.gmra.mrb[0].mxu0 %v347
    %v460 = vpop.f32.mrb[0].mxu0
    %v461 = vadd.f32 %v167, %v460
    %v462 = vpop.f32.mrb[0].mxu0
    %v463 = vpop.f32.mrb[0].mxu0
    %v464 = vadd.f32 %v171, %v463
    %v465 = vpop.f32.mrb[0].mxu0
    %466 = vmatprep.mubr.bf16.mxu0 0
    %467 = vmatmul.mubr.bf16.gmra.mrb[0].mxu0 %v348
    %v468 = vpop.f32.mrb[0].mxu0
    %v469 = vadd.f32 %v177, %v468
    %v470 = vpop.f32.mrb[0].mxu0
    %v471 = vpop.f32.mrb[0].mxu0
    %v472 = vadd.f32 %v181, %v471
    %v473 = vpop.f32.mrb[0].mxu0
    %474 = vmatprep.mubr.bf16.mxu0 0
    %475 = vmatmul.mubr.bf16.gmra.mrb[0].mxu0 %v349
    %v476 = vpop.f32.mrb[0].mxu0
    %v477 = vadd.f32 %v187, %v476
    %v478 = vpop.f32.mrb[0].mxu0
    %v479 = vpop.f32.mrb[0].mxu0
    %v480 = vadd.f32 %v191, %v479
    %v481 = vpop.f32.mrb[0].mxu0
    %482 = vmatprep.mubr.bf16.mxu0 0
    %483 = vmatmul.mubr.bf16.gmra.mrb[0].mxu0 %v350
    %v484 = vpop.f32.mrb[0].mxu0
    %v485 = vadd.f32 %v197, %v484
    %v486 = vpop.f32.mrb[0].mxu0
    %v487 = vpop.f32.mrb[0].mxu0
    %v488 = vadd.f32 %v201, %v487
    %v489 = vpop.f32.mrb[0].mxu0
    %490 = vmatprep.mubr.bf16.mxu0 0
    %491 = vmatmul.mubr.bf16.gmra.mrb[0].mxu0 %v351
    %v492 = vpop.f32.mrb[0].mxu0
    %v493 = vadd.f32 %v207, %v492
    %v494 = vpop.f32.mrb[0].mxu0
    %v495 = vpop.f32.mrb[0].mxu0
    %v496 = vadd.f32 %v211, %v495
    %v497 = vpop.f32.mrb[0].mxu0
    %498 = vmatprep.mubr.bf16.mxu0 0
    %499 = vmatmul.mubr.bf16.gmra.mrb[0].mxu0 %v352
    %v500 = vpop.f32.mrb[0].mxu0
    %v501 = vadd.f32 %v217, %v500
    %v502 = vpop.f32.mrb[0].mxu0
    %v503 = vpop.f32.mrb[0].mxu0
    %v504 = vadd.f32 %v221, %v503
    %v505 = vpop.f32.mrb[0].mxu0
    %506 = vmatprep.mubr.bf16.mxu0 0
    %507 = vmatmul.mubr.bf16.gmra.mrb[0].mxu0 %v353
    %v508 = vpop.f32.mrb[0].mxu0
    %v509 = vadd.f32 %v227, %v508
    %v510 = vpop.f32.mrb[0].mxu0
    %v511 = vpop.f32.mrb[0].mxu0
    %v512 = vadd.f32 %v231, %v511
    %v513 = vpop.f32.mrb[0].mxu0
    %514 = vdwg.mxu0
    %v515 = vmax.f32 %v453, 0.0
    %v516 = vmax.f32 %v456, 0.0
    %v517 = vmax.f32 %v461, 0.0
    %v518 = vmax.f32 %v464, 0.0
    %v519 = vmax.f32 %v469, 0.0
    %v520 = vmax.f32 %v472, 0.0
    %v521 = vmax.f32 %v477, 0.0
    %v522 = vmax.f32 %v480, 0.0
    %v523 = vmax.f32 %v485, 0.0
    %v524 = vmax.f32 %v488, 0.0
    %v525 = vmax.f32 %v493, 0.0
    %v526 = vmax.f32 %v496, 0.0
    %v527 = vmax.f32 %v501, 0.0
    %v528 = vmax.f32 %v504, 0.0
    %v529 = vmax.f32 %v509, 0.0
    %v530 = vmax.f32 %v512, 0.0
    %v531 = vpack.c.bf16 %v516, %v515
    %v532 = vpack.c.bf16 %v518, %v517
    %v533 = vpack.c.bf16 %v520, %v519
    %v534 = vpack.c.bf16 %v522, %v521
    %v535 = vpack.c.bf16 %v524, %v523
    %v536 = vpack.c.bf16 %v526, %v525
    %v537 = vpack.c.bf16 %v528, %v527
    %v538 = vpack.c.bf16 %v530, %v529
    %v539 = vld [vmem:[%s3] sm:$0xf]
    %v540 = vld [vmem:[%s3 + $0x4] sm:$0xf]
    %v541 = vld [vmem:[%s3 + $0x8] sm:$0xf]
    %v542 = vld [vmem:[%s3 + $0xc] sm:$0xf]
    %v543 = vld [vmem:[%s3 + $0x10] sm:$0xf]
    %v544 = vld [vmem:[%s3 + $0x14] sm:$0xf]
    %v545 = vld [vmem:[%s3 + $0x18] sm:$0xf]
    %v546 = vld [vmem:[%s3 + $0x1c] sm:$0xf]
    %v547 = vld [vmem:[%s3 + $0x20] sm:$0xf]
    %v548 = vld [vmem:[%s3 + $0x24] sm:$0xf]
    %v549 = vld [vmem:[%s3 + $0x28] sm:$0xf]
    %v550 = vld [vmem:[%s3 + $0x2c] sm:$0xf]
    %v551 = vld [vmem:[%s3 + $0x30] sm:$0xf]
    %v552 = vld [vmem:[%s3 + $0x34] sm:$0xf]
    %v553 = vld [vmem:[%s3 + $0x38] sm:$0xf]
    %v554 = vld [vmem:[%s3 + $0x3c] sm:$0xf]
    %v571 = vunpack.c.l.b16 %v539
    %v572 = vunpack.c.l.b16 %v540
    %v573 = vunpack.c.l.b16 %v541
    %v574 = vunpack.c.l.b16 %v542
    %v575 = vunpack.c.l.b16 %v543
    %v576 = vunpack.c.l.b16 %v544
    %v577 = vunpack.c.l.b16 %v545
    %v578 = vunpack.c.l.b16 %v546
    %v579 = vunpack.c.l.b16 %v547
    %v580 = vunpack.c.l.b16 %v548
    %v581 = vunpack.c.l.b16 %v549
    %v582 = vunpack.c.l.b16 %v550
    %v583 = vunpack.c.l.b16 %v551
    %v584 = vunpack.c.l.b16 %v552
    %v585 = vunpack.c.l.b16 %v553
    %v586 = vunpack.c.l.b16 %v554
    %v587 = vpack.c.b16 %v572, %v571
    %v588 = vpack.c.b16 %v574, %v573
    %v589 = vpack.c.b16 %v576, %v575
    %v590 = vpack.c.b16 %v578, %v577
    %v591 = vpack.c.b16 %v580, %v579
    %v592 = vpack.c.b16 %v582, %v581
    %v593 = vpack.c.b16 %v584, %v583
    %v594 = vpack.c.b16 %v586, %v585
    %603 = vmatprep.subr.bf16.mxu0 0
    %604 = vmatpush1.bf16.msra.mxu0 %v587
    %605 = vmatprep.subr.bf16.mxu0 0
    %606 = vmatpush1.bf16.msra.mxu0 %v588
    %607 = vmatprep.subr.bf16.mxu0 0
    %608 = vmatpush1.bf16.msra.mxu0 %v589
    %609 = vmatprep.subr.bf16.mxu0 0
    %610 = vmatpush1.bf16.msra.mxu0 %v590
    %611 = vmatprep.subr.bf16.mxu0 0
    %612 = vmatpush1.bf16.msra.mxu0 %v591
    %613 = vmatprep.subr.bf16.mxu0 0
    %614 = vmatpush1.bf16.msra.mxu0 %v592
    %615 = vmatprep.subr.bf16.mxu0 0
    %616 = vmatpush1.bf16.msra.mxu0 %v593
    %617 = vmatprep.subr.bf16.mxu0 0
    %618 = vmatpush1.bf16.msra.mxu0 %v594
    %619 = vmatprep.subr.bf16.mxu0 0
    %620 = vmatpush1.bf16.msra.mxu0 0
    %621 = vmatprep.subr.bf16.mxu0 0
    %622 = vmatpush1.bf16.msra.mxu0 0
    %623 = vmatprep.subr.bf16.mxu0 0
    %624 = vmatpush1.bf16.msra.mxu0 0
    %625 = vmatprep.subr.bf16.mxu0 0
    %626 = vmatpush1.bf16.msra.mxu0 0
    %627 = vmatprep.subr.bf16.mxu0 0
    %628 = vmatpush1.bf16.msra.mxu0 0
    %629 = vmatprep.subr.bf16.mxu0 0
    %630 = vmatpush1.bf16.msra.mxu0 0
    %631 = vmatprep.subr.bf16.mxu0 0
    %632 = vmatpush1.bf16.msra.mxu0 0
    %633 = vmatprep.subr.bf16.mxu0 0
    %634 = vmatpush1.bf16.msra.mxu0 0
    %635 = vmatprep.mubr.bf16.mxu0 0
    %636 = vmatmul.mubr.bf16.gmra.mrb[0].mxu0 %v531
    %v637 = vpop.f32.mrb[0].mxu0
    %v638 = vadd.f32 %v268, %v637
    %v639 = vpop.f32.mrb[0].mxu0
    %v640 = vpop.f32.mrb[0].mxu0
    %v641 = vadd.f32 %v271, %v640
    %v642 = vpop.f32.mrb[0].mxu0
    %643 = vmatprep.mubr.bf16.mxu0 0
    %644 = vmatmul.mubr.bf16.gmra.mrb[0].mxu0 %v532
    %v645 = vpop.f32.mrb[0].mxu0
    %v646 = vadd.f32 %v276, %v645
    %v647 = vpop.f32.mrb[0].mxu0
    %v648 = vpop.f32.mrb[0].mxu0
    %v649 = vadd.f32 %v279, %v648
    %v650 = vpop.f32.mrb[0].mxu0
    %651 = vmatprep.mubr.bf16.mxu0 0
    %652 = vmatmul.mubr.bf16.gmra.mrb[0].mxu0 %v533
    %v653 = vpop.f32.mrb[0].mxu0
    %v654 = vadd.f32 %v284, %v653
    %v655 = vpop.f32.mrb[0].mxu0
    %v656 = vpop.f32.mrb[0].mxu0
    %v657 = vadd.f32 %v287, %v656
    %v658 = vpop.f32.mrb[0].mxu0
    %659 = vmatprep.mubr.bf16.mxu0 0
    %660 = vmatmul.mubr.bf16.gmra.mrb[0].mxu0 %v534
    %v661 = vpop.f32.mrb[0].mxu0
    %v662 = vadd.f32 %v292, %v661
    %v663 = vpop.f32.mrb[0].mxu0
    %v664 = vpop.f32.mrb[0].mxu0
    %v665 = vadd.f32 %v295, %v664
    %v666 = vpop.f32.mrb[0].mxu0
    %667 = vmatprep.mubr.bf16.mxu0 0
    %668 = vmatmul.mubr.bf16.gmra.mrb[0].mxu0 %v535
    %v669 = vpop.f32.mrb[0].mxu0
    %v670 = vadd.f32 %v300, %v669
    %v671 = vpop.f32.mrb[0].mxu0
    %v672 = vpop.f32.mrb[0].mxu0
    %v673 = vadd.f32 %v303, %v672
    %v674 = vpop.f32.mrb[0].mxu0
    %675 = vmatprep.mubr.bf16.mxu0 0
    %676 = vmatmul.mubr.bf16.gmra.mrb[0].mxu0 %v536
    %v677 = vpop.f32.mrb[0].mxu0
    %v678 = vadd.f32 %v308, %v677
    %v679 = vpop.f32.mrb[0].mxu0
    %v680 = vpop.f32.mrb[0].mxu0
    %v681 = vadd.f32 %v311, %v680
    %v682 = vpop.f32.mrb[0].mxu0
    %683 = vmatprep.mubr.bf16.mxu0 0
    %684 = vmatmul.mubr.bf16.gmra.mrb[0].mxu0 %v537
    %v685 = vpop.f32.mrb[0].mxu0
    %v686 = vadd.f32 %v316, %v685
    %v687 = vpop.f32.mrb[0].mxu0
    %v688 = vpop.f32.mrb[0].mxu0
    %v689 = vadd.f32 %v319, %v688
    %v690 = vpop.f32.mrb[0].mxu0
    %691 = vmatprep.mubr.bf16.mxu0 0
    %692 = vmatmul.mubr.bf16.gmra.mrb[0].mxu0 %v538
    %v693 = vpop.f32.mrb[0].mxu0
    %v694 = vadd.f32 %v324, %v693
    %v695 = vpop.f32.mrb[0].mxu0
    %v696 = vpop.f32.mrb[0].mxu0
    %v697 = vadd.f32 %v327, %v696
    %v698 = vpop.f32.mrb[0].mxu0
    %699 = vdwg.mxu0
    %v700 = vpack.c.bf16 %v641, %v638
    %v701 = vpack.c.bf16 %v649, %v646
    %v702 = vpack.c.bf16 %v657, %v654
    %v703 = vpack.c.bf16 %v665, %v662
    %v704 = vpack.c.bf16 %v673, %v670
    %v705 = vpack.c.bf16 %v681, %v678
    %v706 = vpack.c.bf16 %v689, %v686
    %v707 = vpack.c.bf16 %v697, %v694
    %v716 = vunpack.c.l.b16 %v700
    %v717 = vunpack.c.h.b16 %v700
    %v718 = vunpack.c.l.b16 %v701
    %v719 = vunpack.c.h.b16 %v701
    %v720 = vunpack.c.l.b16 %v702
    %v721 = vunpack.c.h.b16 %v702
    %v722 = vunpack.c.l.b16 %v703
    %v723 = vunpack.c.h.b16 %v703
    %v724 = vunpack.c.l.b16 %v704
    %v725 = vunpack.c.h.b16 %v704
    %v726 = vunpack.c.l.b16 %v705
    %v727 = vunpack.c.h.b16 %v705
    %v728 = vunpack.c.l.b16 %v706
    %v729 = vunpack.c.h.b16 %v706
    %v730 = vunpack.c.l.b16 %v707
    %v731 = vunpack.c.h.b16 %v707
    %v732 = vpack.c.b16 %v716, %v716
    %v733 = vpack.c.b16 %v717, %v717
    %v734 = vpack.c.b16 %v718, %v718
    %v735 = vpack.c.b16 %v719, %v719
    %v736 = vpack.c.b16 %v720, %v720
    %v737 = vpack.c.b16 %v721, %v721
    %v738 = vpack.c.b16 %v722, %v722
    %v739 = vpack.c.b16 %v723, %v723
    %v740 = vpack.c.b16 %v724, %v724
    %v741 = vpack.c.b16 %v725, %v725
    %v742 = vpack.c.b16 %v726, %v726
    %v743 = vpack.c.b16 %v727, %v727
    %v744 = vpack.c.b16 %v728, %v728
    %v745 = vpack.c.b16 %v729, %v729
    %v746 = vpack.c.b16 %v730, %v730
    %v747 = vpack.c.b16 %v731, %v731
    %764 = vst [vmem:[#allocation2] sm:$0xf] %v732
    %765 = vst [vmem:[#allocation2 + $0x4] sm:$0xf] %v733
    %766 = vst [vmem:[#allocation2 + $0x8] sm:$0xf] %v734
    %767 = vst [vmem:[#allocation2 + $0xc] sm:$0xf] %v735
    %768 = vst [vmem:[#allocation2 + $0x10] sm:$0xf] %v736
    %769 = vst [vmem:[#allocation2 + $0x14] sm:$0xf] %v737
    %770 = vst [vmem:[#allocation2 + $0x18] sm:$0xf] %v738
    %771 = vst [vmem:[#allocation2 + $0x1c] sm:$0xf] %v739
    %772 = vst [vmem:[#allocation2 + $0x20] sm:$0xf] %v740
    %773 = vst [vmem:[#allocation2 + $0x24] sm:$0xf] %v741
    %774 = vst [vmem:[#allocation2 + $0x28] sm:$0xf] %v742
    %775 = vst [vmem:[#allocation2 + $0x2c] sm:$0xf] %v743
    %776 = vst [vmem:[#allocation2 + $0x30] sm:$0xf] %v744
    %777 = vst [vmem:[#allocation2 + $0x34] sm:$0xf] %v745
    %778 = vst [vmem:[#allocation2 + $0x38] sm:$0xf] %v746
    %779 = vst [vmem:[#allocation2 + $0x3c] sm:$0xf] %v747
    %s780 = scalar_lea.vmem %s0, 64
    %v781 = vld [vmem:[%s780] sm:$0xf]
    %v782 = vld [vmem:[%s780 + $0x4] sm:$0xf]
    %v783 = vld [vmem:[%s780 + $0x8] sm:$0xf]
    %v784 = vld [vmem:[%s780 + $0xc] sm:$0xf]
    %v785 = vld [vmem:[%s780 + $0x10] sm:$0xf]
    %v786 = vld [vmem:[%s780 + $0x14] sm:$0xf]
    %v787 = vld [vmem:[%s780 + $0x18] sm:$0xf]
    %v788 = vld [vmem:[%s780 + $0x1c] sm:$0xf]
    %v789 = vld [vmem:[%s780 + $0x20] sm:$0xf]
    %v790 = vld [vmem:[%s780 + $0x24] sm:$0xf]
    %v791 = vld [vmem:[%s780 + $0x28] sm:$0xf]
    %v792 = vld [vmem:[%s780 + $0x2c] sm:$0xf]
    %v793 = vld [vmem:[%s780 + $0x30] sm:$0xf]
    %v794 = vld [vmem:[%s780 + $0x34] sm:$0xf]
    %v795 = vld [vmem:[%s780 + $0x38] sm:$0xf]
    %v796 = vld [vmem:[%s780 + $0x3c] sm:$0xf]
    %v797 = vld [vmem:[%s1] sm:$0xff]
    %v798 = vld [vmem:[%s1 + $0x8] sm:$0xf]
    %v815 = vunpack.c.l.b16 %v781
    %v816 = vunpack.c.l.b16 %v782
    %v817 = vunpack.c.l.b16 %v783
    %v818 = vunpack.c.l.b16 %v784
    %v819 = vunpack.c.l.b16 %v785
    %v820 = vunpack.c.l.b16 %v786
    %v821 = vunpack.c.l.b16 %v787
    %v822 = vunpack.c.l.b16 %v788
    %v823 = vunpack.c.l.b16 %v789
    %v824 = vunpack.c.l.b16 %v790
    %v825 = vunpack.c.l.b16 %v791
    %v826 = vunpack.c.l.b16 %v792
    %v827 = vunpack.c.l.b16 %v793
    %v828 = vunpack.c.l.b16 %v794
    %v829 = vunpack.c.l.b16 %v795
    %v830 = vunpack.c.l.b16 %v796
    %v831 = vpack.c.b16 %v816, %v815
    %v832 = vpack.c.b16 %v818, %v817
    %v833 = vpack.c.b16 %v820, %v819
    %v834 = vpack.c.b16 %v822, %v821
    %v835 = vpack.c.b16 %v824, %v823
    %v836 = vpack.c.b16 %v826, %v825
    %v837 = vpack.c.b16 %v828, %v827
    %v838 = vpack.c.b16 %v830, %v829
    %v841 = vunpack.c.l.b16 %v797
    %v842 = vunpack.c.h.b16 %v797
    %v843 = vunpack.c.l.b16 %v798
    %v844 = vpack.c.b16 %v841, %v841
    %v845 = vpack.c.b16 %v842, %v842
    %v846 = vpack.c.b16 %v843, %v843
    %v848 = vsel %vm85, %v831, 0
    %v851 = vsel %vm85, %v832, 0
    %v854 = vsel %vm85, %v833, 0
    %v857 = vsel %vm85, %v834, 0
    %v860 = vsel %vm85, %v835, 0
    %v863 = vsel %vm85, %v836, 0
    %v866 = vsel %vm85, %v837, 0
    %v869 = vsel %vm85, %v838, 0
    %v872 = vsel %vm110, %v844, 0
    %v875 = vsel %vm110, %v845, 0
    %v878 = vsel %vm110, %v846, 0
    %880 = vmatprep.subr.bf16.mxu0 %v875
    %881 = vmatpush1.bf16.msra.mxu0 %v872
    %882 = vmatprep.subr.bf16.mxu0 0
    %883 = vmatpush1.bf16.msra.mxu0 0
    %884 = vmatprep.subr.bf16.mxu0 0
    %885 = vmatpush1.bf16.msra.mxu0 0
    %886 = vmatprep.subr.bf16.mxu0 0
    %887 = vmatpush1.bf16.msra.mxu0 0
    %888 = vmatprep.subr.bf16.mxu0 0
    %889 = vmatpush1.bf16.msra.mxu0 0
    %890 = vmatprep.subr.bf16.mxu0 0
    %891 = vmatpush1.bf16.msra.mxu0 0
    %892 = vmatprep.subr.bf16.mxu0 0
    %893 = vmatpush1.bf16.msra.mxu0 0
    %894 = vmatprep.subr.bf16.mxu0 0
    %895 = vmatpush1.bf16.msra.mxu0 0
    %896 = vmatprep.subr.bf16.mxu0 0
    %897 = vmatpush1.bf16.msra.mxu0 0
    %898 = vmatprep.subr.bf16.mxu0 0
    %899 = vmatpush1.bf16.msra.mxu0 0
    %900 = vmatprep.subr.bf16.mxu0 0
    %901 = vmatpush1.bf16.msra.mxu0 0
    %902 = vmatprep.subr.bf16.mxu0 0
    %903 = vmatpush1.bf16.msra.mxu0 0
    %904 = vmatprep.subr.bf16.mxu0 0
    %905 = vmatpush1.bf16.msra.mxu0 0
    %906 = vmatprep.subr.bf16.mxu0 0
    %907 = vmatpush1.bf16.msra.mxu0 0
    %908 = vmatprep.subr.bf16.mxu0 0
    %909 = vmatpush1.bf16.msra.mxu0 0
    %910 = vmatprep.subr.bf16.mxu0 0
    %911 = vmatpush1.bf16.msra.mxu0 0
    %912 = vmatprep.mubr.bf16.mxu0 0
    %913 = vmatmul.mubr.bf16.gmra.mrb[0].mxu0 %v848
    %v914 = vpop.f32.mrb[0].mxu0
    %v915 = vadd.f32 0.0, %v914
    %v916 = vpop.f32.mrb[0].mxu0
    %v917 = vadd.f32 0.0, %v916
    %v918 = vpop.f32.mrb[0].mxu0
    %v919 = vadd.f32 0.0, %v918
    %v920 = vpop.f32.mrb[0].mxu0
    %v921 = vadd.f32 0.0, %v920
    %922 = vmatprep.mubr.bf16.mxu0 0
    %923 = vmatmul.mubr.bf16.gmra.mrb[0].mxu0 %v851
    %v924 = vpop.f32.mrb[0].mxu0
    %v925 = vadd.f32 0.0, %v924
    %v926 = vpop.f32.mrb[0].mxu0
    %v927 = vadd.f32 0.0, %v926
    %v928 = vpop.f32.mrb[0].mxu0
    %v929 = vadd.f32 0.0, %v928
    %v930 = vpop.f32.mrb[0].mxu0
    %v931 = vadd.f32 0.0, %v930
    %932 = vmatprep.mubr.bf16.mxu0 0
    %933 = vmatmul.mubr.bf16.gmra.mrb[0].mxu0 %v854
    %v934 = vpop.f32.mrb[0].mxu0
    %v935 = vadd.f32 0.0, %v934
    %v936 = vpop.f32.mrb[0].mxu0
    %v937 = vadd.f32 0.0, %v936
    %v938 = vpop.f32.mrb[0].mxu0
    %v939 = vadd.f32 0.0, %v938
    %v940 = vpop.f32.mrb[0].mxu0
    %v941 = vadd.f32 0.0, %v940
    %942 = vmatprep.mubr.bf16.mxu0 0
    %943 = vmatmul.mubr.bf16.gmra.mrb[0].mxu0 %v857
    %v944 = vpop.f32.mrb[0].mxu0
    %v945 = vadd.f32 0.0, %v944
    %v946 = vpop.f32.mrb[0].mxu0
    %v947 = vadd.f32 0.0, %v946
    %v948 = vpop.f32.mrb[0].mxu0
    %v949 = vadd.f32 0.0, %v948
    %v950 = vpop.f32.mrb[0].mxu0
    %v951 = vadd.f32 0.0, %v950
    %952 = vmatprep.mubr.bf16.mxu0 0
    %953 = vmatmul.mubr.bf16.gmra.mrb[0].mxu0 %v860
    %v954 = vpop.f32.mrb[0].mxu0
    %v955 = vadd.f32 0.0, %v954
    %v956 = vpop.f32.mrb[0].mxu0
    %v957 = vadd.f32 0.0, %v956
    %v958 = vpop.f32.mrb[0].mxu0
    %v959 = vadd.f32 0.0, %v958
    %v960 = vpop.f32.mrb[0].mxu0
    %v961 = vadd.f32 0.0, %v960
    %962 = vmatprep.mubr.bf16.mxu0 0
    %963 = vmatmul.mubr.bf16.gmra.mrb[0].mxu0 %v863
    %v964 = vpop.f32.mrb[0].mxu0
    %v965 = vadd.f32 0.0, %v964
    %v966 = vpop.f32.mrb[0].mxu0
    %v967 = vadd.f32 0.0, %v966
    %v968 = vpop.f32.mrb[0].mxu0
    %v969 = vadd.f32 0.0, %v968
    %v970 = vpop.f32.mrb[0].mxu0
    %v971 = vadd.f32 0.0, %v970
    %972 = vmatprep.mubr.bf16.mxu0 0
    %973 = vmatmul.mubr.bf16.gmra.mrb[0].mxu0 %v866
    %v974 = vpop.f32.mrb[0].mxu0
    %v975 = vadd.f32 0.0, %v974
    %v976 = vpop.f32.mrb[0].mxu0
    %v977 = vadd.f32 0.0, %v976
    %v978 = vpop.f32.mrb[0].mxu0
    %v979 = vadd.f32 0.0, %v978
    %v980 = vpop.f32.mrb[0].mxu0
    %v981 = vadd.f32 0.0, %v980
    %982 = vmatprep.mubr.bf16.mxu0 0
    %983 = vmatmul.mubr.bf16.gmra.mrb[0].mxu0 %v869
    %v984 = vpop.f32.mrb[0].mxu0
    %v985 = vadd.f32 0.0, %v984
    %v986 = vpop.f32.mrb[0].mxu0
    %v987 = vadd.f32 0.0, %v986
    %v988 = vpop.f32.mrb[0].mxu0
    %v989 = vadd.f32 0.0, %v988
    %v990 = vpop.f32.mrb[0].mxu0
    %v991 = vadd.f32 0.0, %v990
    %992 = vdwg.mxu0
    %993 = vmatprep.subr.bf16.mxu0 0
    %994 = vmatpush1.bf16.msra.mxu0 %v878
    %995 = vmatprep.subr.bf16.mxu0 0
    %996 = vmatpush1.bf16.msra.mxu0 0
    %997 = vmatprep.subr.bf16.mxu0 0
    %998 = vmatpush1.bf16.msra.mxu0 0
    %999 = vmatprep.subr.bf16.mxu0 0
    %1000 = vmatpush1.bf16.msra.mxu0 0
    %1001 = vmatprep.subr.bf16.mxu0 0
    %1002 = vmatpush1.bf16.msra.mxu0 0
    %1003 = vmatprep.subr.bf16.mxu0 0
    %1004 = vmatpush1.bf16.msra.mxu0 0
    %1005 = vmatprep.subr.bf16.mxu0 0
    %1006 = vmatpush1.bf16.msra.mxu0 0
    %1007 = vmatprep.subr.bf16.mxu0 0
    %1008 = vmatpush1.bf16.msra.mxu0 0
    %1009 = vmatprep.subr.bf16.mxu0 0
    %1010 = vmatpush1.bf16.msra.mxu0 0
    %1011 = vmatprep.subr.bf16.mxu0 0
    %1012 = vmatpush1.bf16.msra.mxu0 0
    %1013 = vmatprep.subr.bf16.mxu0 0
    %1014 = vmatpush1.bf16.msra.mxu0 0
    %1015 = vmatprep.subr.bf16.mxu0 0
    %1016 = vmatpush1.bf16.msra.mxu0 0
    %1017 = vmatprep.subr.bf16.mxu0 0
    %1018 = vmatpush1.bf16.msra.mxu0 0
    %1019 = vmatprep.subr.bf16.mxu0 0
    %1020 = vmatpush1.bf16.msra.mxu0 0
    %1021 = vmatprep.subr.bf16.mxu0 0
    %1022 = vmatpush1.bf16.msra.mxu0 0
    %1023 = vmatprep.subr.bf16.mxu0 0
    %1024 = vmatpush1.bf16.msra.mxu0 0
    %1025 = vmatprep.mubr.bf16.mxu0 0
    %1026 = vmatmul.mubr.bf16.gmra.mrb[0].mxu0 %v848
    %v1027 = vpop.f32.mrb[0].mxu0
    %v1028 = vadd.f32 0.0, %v1027
    %v1029 = vpop.f32.mrb[0].mxu0
    %v1030 = vpop.f32.mrb[0].mxu0
    %v1031 = vadd.f32 0.0, %v1030
    %v1032 = vpop.f32.mrb[0].mxu0
    %1033 = vmatprep.mubr.bf16.mxu0 0
    %1034 = vmatmul.mubr.bf16.gmra.mrb[0].mxu0 %v851
    %v1035 = vpop.f32.mrb[0].mxu0
    %v1036 = vadd.f32 0.0, %v1035
    %v1037 = vpop.f32.mrb[0].mxu0
    %v1038 = vpop.f32.mrb[0].mxu0
    %v1039 = vadd.f32 0.0, %v1038
    %v1040 = vpop.f32.mrb[0].mxu0
    %1041 = vmatprep.mubr.bf16.mxu0 0
    %1042 = vmatmul.mubr.bf16.gmra.mrb[0].mxu0 %v854
    %v1043 = vpop.f32.mrb[0].mxu0
    %v1044 = vadd.f32 0.0, %v1043
    %v1045 = vpop.f32.mrb[0].mxu0
    %v1046 = vpop.f32.mrb[0].mxu0
    %v1047 = vadd.f32 0.0, %v1046
    %v1048 = vpop.f32.mrb[0].mxu0
    %1049 = vmatprep.mubr.bf16.mxu0 0
    %1050 = vmatmul.mubr.bf16.gmra.mrb[0].mxu0 %v857
    %v1051 = vpop.f32.mrb[0].mxu0
    %v1052 = vadd.f32 0.0, %v1051
    %v1053 = vpop.f32.mrb[0].mxu0
    %v1054 = vpop.f32.mrb[0].mxu0
    %v1055 = vadd.f32 0.0, %v1054
    %v1056 = vpop.f32.mrb[0].mxu0
    %1057 = vmatprep.mubr.bf16.mxu0 0
    %1058 = vmatmul.mubr.bf16.gmra.mrb[0].mxu0 %v860
    %v1059 = vpop.f32.mrb[0].mxu0
    %v1060 = vadd.f32 0.0, %v1059
    %v1061 = vpop.f32.mrb[0].mxu0
    %v1062 = vpop.f32.mrb[0].mxu0
    %v1063 = vadd.f32 0.0, %v1062
    %v1064 = vpop.f32.mrb[0].mxu0
    %1065 = vmatprep.mubr.bf16.mxu0 0
    %1066 = vmatmul.mubr.bf16.gmra.mrb[0].mxu0 %v863
    %v1067 = vpop.f32.mrb[0].mxu0
    %v1068 = vadd.f32 0.0, %v1067
    %v1069 = vpop.f32.mrb[0].mxu0
    %v1070 = vpop.f32.mrb[0].mxu0
    %v1071 = vadd.f32 0.0, %v1070
    %v1072 = vpop.f32.mrb[0].mxu0
    %1073 = vmatprep.mubr.bf16.mxu0 0
    %1074 = vmatmul.mubr.bf16.gmra.mrb[0].mxu0 %v866
    %v1075 = vpop.f32.mrb[0].mxu0
    %v1076 = vadd.f32 0.0, %v1075
    %v1077 = vpop.f32.mrb[0].mxu0
    %v1078 = vpop.f32.mrb[0].mxu0
    %v1079 = vadd.f32 0.0, %v1078
    %v1080 = vpop.f32.mrb[0].mxu0
    %1081 = vmatprep.mubr.bf16.mxu0 0
    %1082 = vmatmul.mubr.bf16.gmra.mrb[0].mxu0 %v869
    %v1083 = vpop.f32.mrb[0].mxu0
    %v1084 = vadd.f32 0.0, %v1083
    %v1085 = vpop.f32.mrb[0].mxu0
    %v1086 = vpop.f32.mrb[0].mxu0
    %v1087 = vadd.f32 0.0, %v1086
    %v1088 = vpop.f32.mrb[0].mxu0
    %1089 = vdwg.mxu0
    %v1090 = vmax.f32 %v915, 0.0
    %v1091 = vmax.f32 %v919, 0.0
    %v1092 = vmax.f32 %v925, 0.0
    %v1093 = vmax.f32 %v929, 0.0
    %v1094 = vmax.f32 %v935, 0.0
    %v1095 = vmax.f32 %v939, 0.0
    %v1096 = vmax.f32 %v945, 0.0
    %v1097 = vmax.f32 %v949, 0.0
    %v1098 = vmax.f32 %v955, 0.0
    %v1099 = vmax.f32 %v959, 0.0
    %v1100 = vmax.f32 %v965, 0.0
    %v1101 = vmax.f32 %v969, 0.0
    %v1102 = vmax.f32 %v975, 0.0
    %v1103 = vmax.f32 %v979, 0.0
    %v1104 = vmax.f32 %v985, 0.0
    %v1105 = vmax.f32 %v989, 0.0
    %v1106 = vpack.c.bf16 %v1091, %v1090
    %v1107 = vpack.c.bf16 %v1093, %v1092
    %v1108 = vpack.c.bf16 %v1095, %v1094
    %v1109 = vpack.c.bf16 %v1097, %v1096
    %v1110 = vpack.c.bf16 %v1099, %v1098
    %v1111 = vpack.c.bf16 %v1101, %v1100
    %v1112 = vpack.c.bf16 %v1103, %v1102
    %v1113 = vpack.c.bf16 %v1105, %v1104
    %v1114 = vld [vmem:[%s2] sm:$0xf]
    %v1115 = vld [vmem:[%s2 + $0x4] sm:$0xf]
    %v1116 = vld [vmem:[%s2 + $0x8] sm:$0xf]
    %v1117 = vld [vmem:[%s2 + $0xc] sm:$0xf]
    %v1118 = vld [vmem:[%s2 + $0x10] sm:$0xf]
    %v1119 = vld [vmem:[%s2 + $0x14] sm:$0xf]
    %v1120 = vld [vmem:[%s2 + $0x18] sm:$0xf]
    %v1121 = vld [vmem:[%s2 + $0x1c] sm:$0xf]
    %v1122 = vld [vmem:[%s2 + $0x20] sm:$0xf]
    %v1123 = vld [vmem:[%s2 + $0x24] sm:$0xf]
    %v1124 = vld [vmem:[%s2 + $0x28] sm:$0xf]
    %v1125 = vld [vmem:[%s2 + $0x2c] sm:$0xf]
    %v1126 = vld [vmem:[%s2 + $0x30] sm:$0xf]
    %v1127 = vld [vmem:[%s2 + $0x34] sm:$0xf]
    %v1128 = vld [vmem:[%s2 + $0x38] sm:$0xf]
    %v1129 = vld [vmem:[%s2 + $0x3c] sm:$0xf]
    %v1146 = vunpack.c.l.b16 %v1114
    %v1147 = vunpack.c.l.b16 %v1115
    %v1148 = vunpack.c.l.b16 %v1116
    %v1149 = vunpack.c.l.b16 %v1117
    %v1150 = vunpack.c.l.b16 %v1118
    %v1151 = vunpack.c.l.b16 %v1119
    %v1152 = vunpack.c.l.b16 %v1120
    %v1153 = vunpack.c.l.b16 %v1121
    %v1154 = vunpack.c.l.b16 %v1122
    %v1155 = vunpack.c.l.b16 %v1123
    %v1156 = vunpack.c.l.b16 %v1124
    %v1157 = vunpack.c.l.b16 %v1125
    %v1158 = vunpack.c.l.b16 %v1126
    %v1159 = vunpack.c.l.b16 %v1127
    %v1160 = vunpack.c.l.b16 %v1128
    %v1161 = vunpack.c.l.b16 %v1129
    %v1162 = vpack.c.b16 %v1147, %v1146
    %v1163 = vpack.c.b16 %v1149, %v1148
    %v1164 = vpack.c.b16 %v1151, %v1150
    %v1165 = vpack.c.b16 %v1153, %v1152
    %v1166 = vpack.c.b16 %v1155, %v1154
    %v1167 = vpack.c.b16 %v1157, %v1156
    %v1168 = vpack.c.b16 %v1159, %v1158
    %v1169 = vpack.c.b16 %v1161, %v1160
    %1178 = vmatprep.subr.bf16.mxu0 0
    %1179 = vmatpush1.bf16.msra.mxu0 %v1162
    %1180 = vmatprep.subr.bf16.mxu0 0
    %1181 = vmatpush1.bf16.msra.mxu0 %v1163
    %1182 = vmatprep.subr.bf16.mxu0 0
    %1183 = vmatpush1.bf16.msra.mxu0 %v1164
    %1184 = vmatprep.subr.bf16.mxu0 0
    %1185 = vmatpush1.bf16.msra.mxu0 %v1165
    %1186 = vmatprep.subr.bf16.mxu0 0
    %1187 = vmatpush1.bf16.msra.mxu0 %v1166
    %1188 = vmatprep.subr.bf16.mxu0 0
    %1189 = vmatpush1.bf16.msra.mxu0 %v1167
    %1190 = vmatprep.subr.bf16.mxu0 0
    %1191 = vmatpush1.bf16.msra.mxu0 %v1168
    %1192 = vmatprep.subr.bf16.mxu0 0
    %1193 = vmatpush1.bf16.msra.mxu0 %v1169
    %1194 = vmatprep.subr.bf16.mxu0 0
    %1195 = vmatpush1.bf16.msra.mxu0 0
    %1196 = vmatprep.subr.bf16.mxu0 0
    %1197 = vmatpush1.bf16.msra.mxu0 0
    %1198 = vmatprep.subr.bf16.mxu0 0
    %1199 = vmatpush1.bf16.msra.mxu0 0
    %1200 = vmatprep.subr.bf16.mxu0 0
    %1201 = vmatpush1.bf16.msra.mxu0 0
    %1202 = vmatprep.subr.bf16.mxu0 0
    %1203 = vmatpush1.bf16.msra.mxu0 0
    %1204 = vmatprep.subr.bf16.mxu0 0
    %1205 = vmatpush1.bf16.msra.mxu0 0
    %1206 = vmatprep.subr.bf16.mxu0 0
    %1207 = vmatpush1.bf16.msra.mxu0 0
    %1208 = vmatprep.subr.bf16.mxu0 0
    %1209 = vmatpush1.bf16.msra.mxu0 0
    %1210 = vmatprep.mubr.bf16.mxu0 0
    %1211 = vmatmul.mubr.bf16.gmra.mrb[0].mxu0 %v1106
    %v1212 = vpop.f32.mrb[0].mxu0
    %v1213 = vadd.f32 %v917, %v1212
    %v1214 = vpop.f32.mrb[0].mxu0
    %v1215 = vpop.f32.mrb[0].mxu0
    %v1216 = vadd.f32 %v921, %v1215
    %v1217 = vpop.f32.mrb[0].mxu0
    %1218 = vmatprep.mubr.bf16.mxu0 0
    %1219 = vmatmul.mubr.bf16.gmra.mrb[0].mxu0 %v1107
    %v1220 = vpop.f32.mrb[0].mxu0
    %v1221 = vadd.f32 %v927, %v1220
    %v1222 = vpop.f32.mrb[0].mxu0
    %v1223 = vpop.f32.mrb[0].mxu0
    %v1224 = vadd.f32 %v931, %v1223
    %v1225 = vpop.f32.mrb[0].mxu0
    %1226 = vmatprep.mubr.bf16.mxu0 0
    %1227 = vmatmul.mubr.bf16.gmra.mrb[0].mxu0 %v1108
    %v1228 = vpop.f32.mrb[0].mxu0
    %v1229 = vadd.f32 %v937, %v1228
    %v1230 = vpop.f32.mrb[0].mxu0
    %v1231 = vpop.f32.mrb[0].mxu0
    %v1232 = vadd.f32 %v941, %v1231
    %v1233 = vpop.f32.mrb[0].mxu0
    %1234 = vmatprep.mubr.bf16.mxu0 0
    %1235 = vmatmul.mubr.bf16.gmra.mrb[0].mxu0 %v1109
    %v1236 = vpop.f32.mrb[0].mxu0
    %v1237 = vadd.f32 %v947, %v1236
    %v1238 = vpop.f32.mrb[0].mxu0
    %v1239 = vpop.f32.mrb[0].mxu0
    %v1240 = vadd.f32 %v951, %v1239
    %v1241 = vpop.f32.mrb[0].mxu0
    %1242 = vmatprep.mubr.bf16.mxu0 0
    %1243 = vmatmul.mubr.bf16.gmra.mrb[0].mxu0 %v1110
    %v1244 = vpop.f32.mrb[0].mxu0
    %v1245 = vadd.f32 %v957, %v1244
    %v1246 = vpop.f32.mrb[0].mxu0
    %v1247 = vpop.f32.mrb[0].mxu0
    %v1248 = vadd.f32 %v961, %v1247
    %v1249 = vpop.f32.mrb[0].mxu0
    %1250 = vmatprep.mubr.bf16.mxu0 0
    %1251 = vmatmul.mubr.bf16.gmra.mrb[0].mxu0 %v1111
    %v1252 = vpop.f32.mrb[0].mxu0
    %v1253 = vadd.f32 %v967, %v1252
    %v1254 = vpop.f32.mrb[0].mxu0
    %v1255 = vpop.f32.mrb[0].mxu0
    %v1256 = vadd.f32 %v971, %v1255
    %v1257 = vpop.f32.mrb[0].mxu0
    %1258 = vmatprep.mubr.bf16.mxu0 0
    %1259 = vmatmul.mubr.bf16.gmra.mrb[0].mxu0 %v1112
    %v1260 = vpop.f32.mrb[0].mxu0
    %v1261 = vadd.f32 %v977, %v1260
    %v1262 = vpop.f32.mrb[0].mxu0
    %v1263 = vpop.f32.mrb[0].mxu0
    %v1264 = vadd.f32 %v981, %v1263
    %v1265 = vpop.f32.mrb[0].mxu0
    %1266 = vmatprep.mubr.bf16.mxu0 0
    %1267 = vmatmul.mubr.bf16.gmra.mrb[0].mxu0 %v1113
    %v1268 = vpop.f32.mrb[0].mxu0
    %v1269 = vadd.f32 %v987, %v1268
    %v1270 = vpop.f32.mrb[0].mxu0
    %v1271 = vpop.f32.mrb[0].mxu0
    %v1272 = vadd.f32 %v991, %v1271
    %v1273 = vpop.f32.mrb[0].mxu0
    %1274 = vdwg.mxu0
    %v1275 = vmax.f32 %v1213, 0.0
    %v1276 = vmax.f32 %v1216, 0.0
    %v1277 = vmax.f32 %v1221, 0.0
    %v1278 = vmax.f32 %v1224, 0.0
    %v1279 = vmax.f32 %v1229, 0.0
    %v1280 = vmax.f32 %v1232, 0.0
    %v1281 = vmax.f32 %v1237, 0.0
    %v1282 = vmax.f32 %v1240, 0.0
    %v1283 = vmax.f32 %v1245, 0.0
    %v1284 = vmax.f32 %v1248, 0.0
    %v1285 = vmax.f32 %v1253, 0.0
    %v1286 = vmax.f32 %v1256, 0.0
    %v1287 = vmax.f32 %v1261, 0.0
    %v1288 = vmax.f32 %v1264, 0.0
    %v1289 = vmax.f32 %v1269, 0.0
    %v1290 = vmax.f32 %v1272, 0.0
    %v1291 = vpack.c.bf16 %v1276, %v1275
    %v1292 = vpack.c.bf16 %v1278, %v1277
    %v1293 = vpack.c.bf16 %v1280, %v1279
    %v1294 = vpack.c.bf16 %v1282, %v1281
    %v1295 = vpack.c.bf16 %v1284, %v1283
    %v1296 = vpack.c.bf16 %v1286, %v1285
    %v1297 = vpack.c.bf16 %v1288, %v1287
    %v1298 = vpack.c.bf16 %v1290, %v1289
    %v1299 = vld [vmem:[%s3] sm:$0xf]
    %v1300 = vld [vmem:[%s3 + $0x4] sm:$0xf]
    %v1301 = vld [vmem:[%s3 + $0x8] sm:$0xf]
    %v1302 = vld [vmem:[%s3 + $0xc] sm:$0xf]
    %v1303 = vld [vmem:[%s3 + $0x10] sm:$0xf]
    %v1304 = vld [vmem:[%s3 + $0x14] sm:$0xf]
    %v1305 = vld [vmem:[%s3 + $0x18] sm:$0xf]
    %v1306 = vld [vmem:[%s3 + $0x1c] sm:$0xf]
    %v1307 = vld [vmem:[%s3 + $0x20] sm:$0xf]
    %v1308 = vld [vmem:[%s3 + $0x24] sm:$0xf]
    %v1309 = vld [vmem:[%s3 + $0x28] sm:$0xf]
    %v1310 = vld [vmem:[%s3 + $0x2c] sm:$0xf]
    %v1311 = vld [vmem:[%s3 + $0x30] sm:$0xf]
    %v1312 = vld [vmem:[%s3 + $0x34] sm:$0xf]
    %v1313 = vld [vmem:[%s3 + $0x38] sm:$0xf]
    %v1314 = vld [vmem:[%s3 + $0x3c] sm:$0xf]
    %v1331 = vunpack.c.l.b16 %v1299
    %v1332 = vunpack.c.l.b16 %v1300
    %v1333 = vunpack.c.l.b16 %v1301
    %v1334 = vunpack.c.l.b16 %v1302
    %v1335 = vunpack.c.l.b16 %v1303
    %v1336 = vunpack.c.l.b16 %v1304
    %v1337 = vunpack.c.l.b16 %v1305
    %v1338 = vunpack.c.l.b16 %v1306
    %v1339 = vunpack.c.l.b16 %v1307
    %v1340 = vunpack.c.l.b16 %v1308
    %v1341 = vunpack.c.l.b16 %v1309
    %v1342 = vunpack.c.l.b16 %v1310
    %v1343 = vunpack.c.l.b16 %v1311
    %v1344 = vunpack.c.l.b16 %v1312
    %v1345 = vunpack.c.l.b16 %v1313
    %v1346 = vunpack.c.l.b16 %v1314
    %v1347 = vpack.c.b16 %v1332, %v1331
    %v1348 = vpack.c.b16 %v1334, %v1333
    %v1349 = vpack.c.b16 %v1336, %v1335
    %v1350 = vpack.c.b16 %v1338, %v1337
    %v1351 = vpack.c.b16 %v1340, %v1339
    %v1352 = vpack.c.b16 %v1342, %v1341
    %v1353 = vpack.c.b16 %v1344, %v1343
    %v1354 = vpack.c.b16 %v1346, %v1345
    %1363 = vmatprep.subr.bf16.mxu0 0
    %1364 = vmatpush1.bf16.msra.mxu0 %v1347
    %1365 = vmatprep.subr.bf16.mxu0 0
    %1366 = vmatpush1.bf16.msra.mxu0 %v1348
    %1367 = vmatprep.subr.bf16.mxu0 0
    %1368 = vmatpush1.bf16.msra.mxu0 %v1349
    %1369 = vmatprep.subr.bf16.mxu0 0
    %1370 = vmatpush1.bf16.msra.mxu0 %v1350
    %1371 = vmatprep.subr.bf16.mxu0 0
    %1372 = vmatpush1.bf16.msra.mxu0 %v1351
    %1373 = vmatprep.subr.bf16.mxu0 0
    %1374 = vmatpush1.bf16.msra.mxu0 %v1352
    %1375 = vmatprep.subr.bf16.mxu0 0
    %1376 = vmatpush1.bf16.msra.mxu0 %v1353
    %1377 = vmatprep.subr.bf16.mxu0 0
    %1378 = vmatpush1.bf16.msra.mxu0 %v1354
    %1379 = vmatprep.subr.bf16.mxu0 0
    %1380 = vmatpush1.bf16.msra.mxu0 0
    %1381 = vmatprep.subr.bf16.mxu0 0
    %1382 = vmatpush1.bf16.msra.mxu0 0
    %1383 = vmatprep.subr.bf16.mxu0 0
    %1384 = vmatpush1.bf16.msra.mxu0 0
    %1385 = vmatprep.subr.bf16.mxu0 0
    %1386 = vmatpush1.bf16.msra.mxu0 0
    %1387 = vmatprep.subr.bf16.mxu0 0
    %1388 = vmatpush1.bf16.msra.mxu0 0
    %1389 = vmatprep.subr.bf16.mxu0 0
    %1390 = vmatpush1.bf16.msra.mxu0 0
    %1391 = vmatprep.subr.bf16.mxu0 0
    %1392 = vmatpush1.bf16.msra.mxu0 0
    %1393 = vmatprep.subr.bf16.mxu0 0
    %1394 = vmatpush1.bf16.msra.mxu0 0
    %1395 = vmatprep.mubr.bf16.mxu0 0
    %1396 = vmatmul.mubr.bf16.gmra.mrb[0].mxu0 %v1291
    %v1397 = vpop.f32.mrb[0].mxu0
    %v1398 = vadd.f32 %v1028, %v1397
    %v1399 = vpop.f32.mrb[0].mxu0
    %v1400 = vpop.f32.mrb[0].mxu0
    %v1401 = vadd.f32 %v1031, %v1400
    %v1402 = vpop.f32.mrb[0].mxu0
    %1403 = vmatprep.mubr.bf16.mxu0 0
    %1404 = vmatmul.mubr.bf16.gmra.mrb[0].mxu0 %v1292
    %v1405 = vpop.f32.mrb[0].mxu0
    %v1406 = vadd.f32 %v1036, %v1405
    %v1407 = vpop.f32.mrb[0].mxu0
    %v1408 = vpop.f32.mrb[0].mxu0
    %v1409 = vadd.f32 %v1039, %v1408
    %v1410 = vpop.f32.mrb[0].mxu0
    %1411 = vmatprep.mubr.bf16.mxu0 0
    %1412 = vmatmul.mubr.bf16.gmra.mrb[0].mxu0 %v1293
    %v1413 = vpop.f32.mrb[0].mxu0
    %v1414 = vadd.f32 %v1044, %v1413
    %v1415 = vpop.f32.mrb[0].mxu0
    %v1416 = vpop.f32.mrb[0].mxu0
    %v1417 = vadd.f32 %v1047, %v1416
    %v1418 = vpop.f32.mrb[0].mxu0
    %1419 = vmatprep.mubr.bf16.mxu0 0
    %1420 = vmatmul.mubr.bf16.gmra.mrb[0].mxu0 %v1294
    %v1421 = vpop.f32.mrb[0].mxu0
    %v1422 = vadd.f32 %v1052, %v1421
    %v1423 = vpop.f32.mrb[0].mxu0
    %v1424 = vpop.f32.mrb[0].mxu0
    %v1425 = vadd.f32 %v1055, %v1424
    %v1426 = vpop.f32.mrb[0].mxu0
    %1427 = vmatprep.mubr.bf16.mxu0 0
    %1428 = vmatmul.mubr.bf16.gmra.mrb[0].mxu0 %v1295
    %v1429 = vpop.f32.mrb[0].mxu0
    %v1430 = vadd.f32 %v1060, %v1429
    %v1431 = vpop.f32.mrb[0].mxu0
    %v1432 = vpop.f32.mrb[0].mxu0
    %v1433 = vadd.f32 %v1063, %v1432
    %v1434 = vpop.f32.mrb[0].mxu0
    %1435 = vmatprep.mubr.bf16.mxu0 0
    %1436 = vmatmul.mubr.bf16.gmra.mrb[0].mxu0 %v1296
    %v1437 = vpop.f32.mrb[0].mxu0
    %v1438 = vadd.f32 %v1068, %v1437
    %v1439 = vpop.f32.mrb[0].mxu0
    %v1440 = vpop.f32.mrb[0].mxu0
    %v1441 = vadd.f32 %v1071, %v1440
    %v1442 = vpop.f32.mrb[0].mxu0
    %1443 = vmatprep.mubr.bf16.mxu0 0
    %1444 = vmatmul.mubr.bf16.gmra.mrb[0].mxu0 %v1297
    %v1445 = vpop.f32.mrb[0].mxu0
    %v1446 = vadd.f32 %v1076, %v1445
    %v1447 = vpop.f32.mrb[0].mxu0
    %v1448 = vpop.f32.mrb[0].mxu0
    %v1449 = vadd.f32 %v1079, %v1448
    %v1450 = vpop.f32.mrb[0].mxu0
    %1451 = vmatprep.mubr.bf16.mxu0 0
    %1452 = vmatmul.mubr.bf16.gmra.mrb[0].mxu0 %v1298
    %v1453 = vpop.f32.mrb[0].mxu0
    %v1454 = vadd.f32 %v1084, %v1453
    %v1455 = vpop.f32.mrb[0].mxu0
    %v1456 = vpop.f32.mrb[0].mxu0
    %v1457 = vadd.f32 %v1087, %v1456
    %v1458 = vpop.f32.mrb[0].mxu0
    %1459 = vdwg.mxu0
    %v1460 = vpack.c.bf16 %v1401, %v1398
    %v1461 = vpack.c.bf16 %v1409, %v1406
    %v1462 = vpack.c.bf16 %v1417, %v1414
    %v1463 = vpack.c.bf16 %v1425, %v1422
    %v1464 = vpack.c.bf16 %v1433, %v1430
    %v1465 = vpack.c.bf16 %v1441, %v1438
    %v1466 = vpack.c.bf16 %v1449, %v1446
    %v1467 = vpack.c.bf16 %v1457, %v1454
    %v1476 = vunpack.c.l.b16 %v1460
    %v1477 = vunpack.c.h.b16 %v1460
    %v1478 = vunpack.c.l.b16 %v1461
    %v1479 = vunpack.c.h.b16 %v1461
    %v1480 = vunpack.c.l.b16 %v1462
    %v1481 = vunpack.c.h.b16 %v1462
    %v1482 = vunpack.c.l.b16 %v1463
    %v1483 = vunpack.c.h.b16 %v1463
    %v1484 = vunpack.c.l.b16 %v1464
    %v1485 = vunpack.c.h.b16 %v1464
    %v1486 = vunpack.c.l.b16 %v1465
    %v1487 = vunpack.c.h.b16 %v1465
    %v1488 = vunpack.c.l.b16 %v1466
    %v1489 = vunpack.c.h.b16 %v1466
    %v1490 = vunpack.c.l.b16 %v1467
    %v1491 = vunpack.c.h.b16 %v1467
    %v1492 = vpack.c.b16 %v1476, %v1476
    %v1493 = vpack.c.b16 %v1477, %v1477
    %v1494 = vpack.c.b16 %v1478, %v1478
    %v1495 = vpack.c.b16 %v1479, %v1479
    %v1496 = vpack.c.b16 %v1480, %v1480
    %v1497 = vpack.c.b16 %v1481, %v1481
    %v1498 = vpack.c.b16 %v1482, %v1482
    %v1499 = vpack.c.b16 %v1483, %v1483
    %v1500 = vpack.c.b16 %v1484, %v1484
    %v1501 = vpack.c.b16 %v1485, %v1485
    %v1502 = vpack.c.b16 %v1486, %v1486
    %v1503 = vpack.c.b16 %v1487, %v1487
    %v1504 = vpack.c.b16 %v1488, %v1488
    %v1505 = vpack.c.b16 %v1489, %v1489
    %v1506 = vpack.c.b16 %v1490, %v1490
    %v1507 = vpack.c.b16 %v1491, %v1491
    %s1524 = scalar_lea.vmem [#allocation2], 64
    %1525 = vst [vmem:[%s1524] sm:$0xf] %v1492
    %1526 = vst [vmem:[%s1524 + $0x4] sm:$0xf] %v1493
    %1527 = vst [vmem:[%s1524 + $0x8] sm:$0xf] %v1494
    %1528 = vst [vmem:[%s1524 + $0xc] sm:$0xf] %v1495
    %1529 = vst [vmem:[%s1524 + $0x10] sm:$0xf] %v1496
    %1530 = vst [vmem:[%s1524 + $0x14] sm:$0xf] %v1497
    %1531 = vst [vmem:[%s1524 + $0x18] sm:$0xf] %v1498
    %1532 = vst [vmem:[%s1524 + $0x1c] sm:$0xf] %v1499
    %1533 = vst [vmem:[%s1524 + $0x20] sm:$0xf] %v1500
    %1534 = vst [vmem:[%s1524 + $0x24] sm:$0xf] %v1501
    %1535 = vst [vmem:[%s1524 + $0x28] sm:$0xf] %v1502
    %1536 = vst [vmem:[%s1524 + $0x2c] sm:$0xf] %v1503
    %1537 = vst [vmem:[%s1524 + $0x30] sm:$0xf] %v1504
    %1538 = vst [vmem:[%s1524 + $0x34] sm:$0xf] %v1505
    %1539 = vst [vmem:[%s1524 + $0x38] sm:$0xf] %v1506
    %1540 = vst [vmem:[%s1524 + $0x3c] sm:$0xf] %v1507
    %s1541 = scalar_lea.vmem %s0, 128
    %v1542 = vld [vmem:[%s1541] sm:$0xf]
    %v1543 = vld [vmem:[%s1541 + $0x4] sm:$0xf]
    %v1544 = vld [vmem:[%s1541 + $0x8] sm:$0xf]
    %v1545 = vld [vmem:[%s1541 + $0xc] sm:$0xf]
    %v1546 = vld [vmem:[%s1541 + $0x10] sm:$0xf]
    %v1547 = vld [vmem:[%s1541 + $0x14] sm:$0xf]
    %v1548 = vld [vmem:[%s1541 + $0x18] sm:$0xf]
    %v1549 = vld [vmem:[%s1541 + $0x1c] sm:$0xf]
    %v1550 = vld [vmem:[%s1541 + $0x20] sm:$0xf]
    %v1551 = vld [vmem:[%s1541 + $0x24] sm:$0xf]
    %v1552 = vld [vmem:[%s1541 + $0x28] sm:$0xf]
    %v1553 = vld [vmem:[%s1541 + $0x2c] sm:$0xf]
    %v1554 = vld [vmem:[%s1541 + $0x30] sm:$0xf]
    %v1555 = vld [vmem:[%s1541 + $0x34] sm:$0xf]
    %v1556 = vld [vmem:[%s1541 + $0x38] sm:$0xf]
    %v1557 = vld [vmem:[%s1541 + $0x3c] sm:$0xf]
    %v1558 = vld [vmem:[%s1] sm:$0xff]
    %v1559 = vld [vmem:[%s1 + $0x8] sm:$0xf]
    %v1576 = vunpack.c.l.b16 %v1542
    %v1577 = vunpack.c.l.b16 %v1543
    %v1578 = vunpack.c.l.b16 %v1544
    %v1579 = vunpack.c.l.b16 %v1545
    %v1580 = vunpack.c.l.b16 %v1546
    %v1581 = vunpack.c.l.b16 %v1547
    %v1582 = vunpack.c.l.b16 %v1548
    %v1583 = vunpack.c.l.b16 %v1549
    %v1584 = vunpack.c.l.b16 %v1550
    %v1585 = vunpack.c.l.b16 %v1551
    %v1586 = vunpack.c.l.b16 %v1552
    %v1587 = vunpack.c.l.b16 %v1553
    %v1588 = vunpack.c.l.b16 %v1554
    %v1589 = vunpack.c.l.b16 %v1555
    %v1590 = vunpack.c.l.b16 %v1556
    %v1591 = vunpack.c.l.b16 %v1557
    %v1592 = vpack.c.b16 %v1577, %v1576
    %v1593 = vpack.c.b16 %v1579, %v1578
    %v1594 = vpack.c.b16 %v1581, %v1580
    %v1595 = vpack.c.b16 %v1583, %v1582
    %v1596 = vpack.c.b16 %v1585, %v1584
    %v1597 = vpack.c.b16 %v1587, %v1586
    %v1598 = vpack.c.b16 %v1589, %v1588
    %v1599 = vpack.c.b16 %v1591, %v1590
    %v1602 = vunpack.c.l.b16 %v1558
    %v1603 = vunpack.c.h.b16 %v1558
    %v1604 = vunpack.c.l.b16 %v1559
    %v1605 = vpack.c.b16 %v1602, %v1602
    %v1606 = vpack.c.b16 %v1603, %v1603
    %v1607 = vpack.c.b16 %v1604, %v1604
    %v1609 = vsel %vm85, %v1592, 0
    %v1612 = vsel %vm85, %v1593, 0
    %v1615 = vsel %vm85, %v1594, 0
    %v1618 = vsel %vm85, %v1595, 0
    %v1621 = vsel %vm85, %v1596, 0
    %v1624 = vsel %vm85, %v1597, 0
    %v1627 = vsel %vm85, %v1598, 0
    %v1630 = vsel %vm85, %v1599, 0
    %v1633 = vsel %vm110, %v1605, 0
    %v1636 = vsel %vm110, %v1606, 0
    %v1639 = vsel %vm110, %v1607, 0
    %1641 = vmatprep.subr.bf16.mxu0 %v1636
    %1642 = vmatpush1.bf16.msra.mxu0 %v1633
    %1643 = vmatprep.subr.bf16.mxu0 0
    %1644 = vmatpush1.bf16.msra.mxu0 0
    %1645 = vmatprep.subr.bf16.mxu0 0
    %1646 = vmatpush1.bf16.msra.mxu0 0
    %1647 = vmatprep.subr.bf16.mxu0 0
    %1648 = vmatpush1.bf16.msra.mxu0 0
    %1649 = vmatprep.subr.bf16.mxu0 0
    %1650 = vmatpush1.bf16.msra.mxu0 0
    %1651 = vmatprep.subr.bf16.mxu0 0
    %1652 = vmatpush1.bf16.msra.mxu0 0
    %1653 = vmatprep.subr.bf16.mxu0 0
    %1654 = vmatpush1.bf16.msra.mxu0 0
    %1655 = vmatprep.subr.bf16.mxu0 0
    %1656 = vmatpush1.bf16.msra.mxu0 0
    %1657 = vmatprep.subr.bf16.mxu0 0
    %1658 = vmatpush1.bf16.msra.mxu0 0
    %1659 = vmatprep.subr.bf16.mxu0 0
    %1660 = vmatpush1.bf16.msra.mxu0 0
    %1661 = vmatprep.subr.bf16.mxu0 0
    %1662 = vmatpush1.bf16.msra.mxu0 0
    %1663 = vmatprep.subr.bf16.mxu0 0
    %1664 = vmatpush1.bf16.msra.mxu0 0
    %1665 = vmatprep.subr.bf16.mxu0 0
    %1666 = vmatpush1.bf16.msra.mxu0 0
    %1667 = vmatprep.subr.bf16.mxu0 0
    %1668 = vmatpush1.bf16.msra.mxu0 0
    %1669 = vmatprep.subr.bf16.mxu0 0
    %1670 = vmatpush1.bf16.msra.mxu0 0
    %1671 = vmatprep.subr.bf16.mxu0 0
    %1672 = vmatpush1.bf16.msra.mxu0 0
    %1673 = vmatprep.mubr.bf16.mxu0 0
    %1674 = vmatmul.mubr.bf16.gmra.mrb[0].mxu0 %v1609
    %v1675 = vpop.f32.mrb[0].mxu0
    %v1676 = vadd.f32 0.0, %v1675
    %v1677 = vpop.f32.mrb[0].mxu0
    %v1678 = vadd.f32 0.0, %v1677
    %v1679 = vpop.f32.mrb[0].mxu0
    %v1680 = vadd.f32 0.0, %v1679
    %v1681 = vpop.f32.mrb[0].mxu0
    %v1682 = vadd.f32 0.0, %v1681
    %1683 = vmatprep.mubr.bf16.mxu0 0
    %1684 = vmatmul.mubr.bf16.gmra.mrb[0].mxu0 %v1612
    %v1685 = vpop.f32.mrb[0].mxu0
    %v1686 = vadd.f32 0.0, %v1685
    %v1687 = vpop.f32.mrb[0].mxu0
    %v1688 = vadd.f32 0.0, %v1687
    %v1689 = vpop.f32.mrb[0].mxu0
    %v1690 = vadd.f32 0.0, %v1689
    %v1691 = vpop.f32.mrb[0].mxu0
    %v1692 = vadd.f32 0.0, %v1691
    %1693 = vmatprep.mubr.bf16.mxu0 0
    %1694 = vmatmul.mubr.bf16.gmra.mrb[0].mxu0 %v1615
    %v1695 = vpop.f32.mrb[0].mxu0
    %v1696 = vadd.f32 0.0, %v1695
    %v1697 = vpop.f32.mrb[0].mxu0
    %v1698 = vadd.f32 0.0, %v1697
    %v1699 = vpop.f32.mrb[0].mxu0
    %v1700 = vadd.f32 0.0, %v1699
    %v1701 = vpop.f32.mrb[0].mxu0
    %v1702 = vadd.f32 0.0, %v1701
    %1703 = vmatprep.mubr.bf16.mxu0 0
    %1704 = vmatmul.mubr.bf16.gmra.mrb[0].mxu0 %v1618
    %v1705 = vpop.f32.mrb[0].mxu0
    %v1706 = vadd.f32 0.0, %v1705
    %v1707 = vpop.f32.mrb[0].mxu0
    %v1708 = vadd.f32 0.0, %v1707
    %v1709 = vpop.f32.mrb[0].mxu0
    %v1710 = vadd.f32 0.0, %v1709
    %v1711 = vpop.f32.mrb[0].mxu0
    %v1712 = vadd.f32 0.0, %v1711
    %1713 = vmatprep.mubr.bf16.mxu0 0
    %1714 = vmatmul.mubr.bf16.gmra.mrb[0].mxu0 %v1621
    %v1715 = vpop.f32.mrb[0].mxu0
    %v1716 = vadd.f32 0.0, %v1715
    %v1717 = vpop.f32.mrb[0].mxu0
    %v1718 = vadd.f32 0.0, %v1717
    %v1719 = vpop.f32.mrb[0].mxu0
    %v1720 = vadd.f32 0.0, %v1719
    %v1721 = vpop.f32.mrb[0].mxu0
    %v1722 = vadd.f32 0.0, %v1721
    %1723 = vmatprep.mubr.bf16.mxu0 0
    %1724 = vmatmul.mubr.bf16.gmra.mrb[0].mxu0 %v1624
    %v1725 = vpop.f32.mrb[0].mxu0
    %v1726 = vadd.f32 0.0, %v1725
    %v1727 = vpop.f32.mrb[0].mxu0
    %v1728 = vadd.f32 0.0, %v1727
    %v1729 = vpop.f32.mrb[0].mxu0
    %v1730 = vadd.f32 0.0, %v1729
    %v1731 = vpop.f32.mrb[0].mxu0
    %v1732 = vadd.f32 0.0, %v1731
    %1733 = vmatprep.mubr.bf16.mxu0 0
    %1734 = vmatmul.mubr.bf16.gmra.mrb[0].mxu0 %v1627
    %v1735 = vpop.f32.mrb[0].mxu0
    %v1736 = vadd.f32 0.0, %v1735
    %v1737 = vpop.f32.mrb[0].mxu0
    %v1738 = vadd.f32 0.0, %v1737
    %v1739 = vpop.f32.mrb[0].mxu0
    %v1740 = vadd.f32 0.0, %v1739
    %v1741 = vpop.f32.mrb[0].mxu0
    %v1742 = vadd.f32 0.0, %v1741
    %1743 = vmatprep.mubr.bf16.mxu0 0
    %1744 = vmatmul.mubr.bf16.gmra.mrb[0].mxu0 %v1630
    %v1745 = vpop.f32.mrb[0].mxu0
    %v1746 = vadd.f32 0.0, %v1745
    %v1747 = vpop.f32.mrb[0].mxu0
    %v1748 = vadd.f32 0.0, %v1747
    %v1749 = vpop.f32.mrb[0].mxu0
    %v1750 = vadd.f32 0.0, %v1749
    %v1751 = vpop.f32.mrb[0].mxu0
    %v1752 = vadd.f32 0.0, %v1751
    %1753 = vdwg.mxu0
    %1754 = vmatprep.subr.bf16.mxu0 0
    %1755 = vmatpush1.bf16.msra.mxu0 %v1639
    %1756 = vmatprep.subr.bf16.mxu0 0
    %1757 = vmatpush1.bf16.msra.mxu0 0
    %1758 = vmatprep.subr.bf16.mxu0 0
    %1759 = vmatpush1.bf16.msra.mxu0 0
    %1760 = vmatprep.subr.bf16.mxu0 0
    %1761 = vmatpush1.bf16.msra.mxu0 0
    %1762 = vmatprep.subr.bf16.mxu0 0
    %1763 = vmatpush1.bf16.msra.mxu0 0
    %1764 = vmatprep.subr.bf16.mxu0 0
    %1765 = vmatpush1.bf16.msra.mxu0 0
    %1766 = vmatprep.subr.bf16.mxu0 0
    %1767 = vmatpush1.bf16.msra.mxu0 0
    %1768 = vmatprep.subr.bf16.mxu0 0
    %1769 = vmatpush1.bf16.msra.mxu0 0
    %1770 = vmatprep.subr.bf16.mxu0 0
    %1771 = vmatpush1.bf16.msra.mxu0 0
    %1772 = vmatprep.subr.bf16.mxu0 0
    %1773 = vmatpush1.bf16.msra.mxu0 0
    %1774 = vmatprep.subr.bf16.mxu0 0
    %1775 = vmatpush1.bf16.msra.mxu0 0
    %1776 = vmatprep.subr.bf16.mxu0 0
    %1777 = vmatpush1.bf16.msra.mxu0 0
    %1778 = vmatprep.subr.bf16.mxu0 0
    %1779 = vmatpush1.bf16.msra.mxu0 0
    %1780 = vmatprep.subr.bf16.mxu0 0
    %1781 = vmatpush1.bf16.msra.mxu0 0
    %1782 = vmatprep.subr.bf16.mxu0 0
    %1783 = vmatpush1.bf16.msra.mxu0 0
    %1784 = vmatprep.subr.bf16.mxu0 0
    %1785 = vmatpush1.bf16.msra.mxu0 0
    %1786 = vmatprep.mubr.bf16.mxu0 0
    %1787 = vmatmul.mubr.bf16.gmra.mrb[0].mxu0 %v1609
    %v1788 = vpop.f32.mrb[0].mxu0
    %v1789 = vadd.f32 0.0, %v1788
    %v1790 = vpop.f32.mrb[0].mxu0
    %v1791 = vpop.f32.mrb[0].mxu0
    %v1792 = vadd.f32 0.0, %v1791
    %v1793 = vpop.f32.mrb[0].mxu0
    %1794 = vmatprep.mubr.bf16.mxu0 0
    %1795 = vmatmul.mubr.bf16.gmra.mrb[0].mxu0 %v1612
    %v1796 = vpop.f32.mrb[0].mxu0
    %v1797 = vadd.f32 0.0, %v1796
    %v1798 = vpop.f32.mrb[0].mxu0
    %v1799 = vpop.f32.mrb[0].mxu0
    %v1800 = vadd.f32 0.0, %v1799
    %v1801 = vpop.f32.mrb[0].mxu0
    %1802 = vmatprep.mubr.bf16.mxu0 0
    %1803 = vmatmul.mubr.bf16.gmra.mrb[0].mxu0 %v1615
    %v1804 = vpop.f32.mrb[0].mxu0
    %v1805 = vadd.f32 0.0, %v1804
    %v1806 = vpop.f32.mrb[0].mxu0
    %v1807 = vpop.f32.mrb[0].mxu0
    %v1808 = vadd.f32 0.0, %v1807
    %v1809 = vpop.f32.mrb[0].mxu0
    %1810 = vmatprep.mubr.bf16.mxu0 0
    %1811 = vmatmul.mubr.bf16.gmra.mrb[0].mxu0 %v1618
    %v1812 = vpop.f32.mrb[0].mxu0
    %v1813 = vadd.f32 0.0, %v1812
    %v1814 = vpop.f32.mrb[0].mxu0
    %v1815 = vpop.f32.mrb[0].mxu0
    %v1816 = vadd.f32 0.0, %v1815
    %v1817 = vpop.f32.mrb[0].mxu0
    %1818 = vmatprep.mubr.bf16.mxu0 0
    %1819 = vmatmul.mubr.bf16.gmra.mrb[0].mxu0 %v1621
    %v1820 = vpop.f32.mrb[0].mxu0
    %v1821 = vadd.f32 0.0, %v1820
    %v1822 = vpop.f32.mrb[0].mxu0
    %v1823 = vpop.f32.mrb[0].mxu0
    %v1824 = vadd.f32 0.0, %v1823
    %v1825 = vpop.f32.mrb[0].mxu0
    %1826 = vmatprep.mubr.bf16.mxu0 0
    %1827 = vmatmul.mubr.bf16.gmra.mrb[0].mxu0 %v1624
    %v1828 = vpop.f32.mrb[0].mxu0
    %v1829 = vadd.f32 0.0, %v1828
    %v1830 = vpop.f32.mrb[0].mxu0
    %v1831 = vpop.f32.mrb[0].mxu0
    %v1832 = vadd.f32 0.0, %v1831
    %v1833 = vpop.f32.mrb[0].mxu0
    %1834 = vmatprep.mubr.bf16.mxu0 0
    %1835 = vmatmul.mubr.bf16.gmra.mrb[0].mxu0 %v1627
    %v1836 = vpop.f32.mrb[0].mxu0
    %v1837 = vadd.f32 0.0, %v1836
    %v1838 = vpop.f32.mrb[0].mxu0
    %v1839 = vpop.f32.mrb[0].mxu0
    %v1840 = vadd.f32 0.0, %v1839
    %v1841 = vpop.f32.mrb[0].mxu0
    %1842 = vmatprep.mubr.bf16.mxu0 0
    %1843 = vmatmul.mubr.bf16.gmra.mrb[0].mxu0 %v1630
    %v1844 = vpop.f32.mrb[0].mxu0
    %v1845 = vadd.f32 0.0, %v1844
    %v1846 = vpop.f32.mrb[0].mxu0
    %v1847 = vpop.f32.mrb[0].mxu0
    %v1848 = vadd.f32 0.0, %v1847
    %v1849 = vpop.f32.mrb[0].mxu0
    %1850 = vdwg.mxu0
    %v1851 = vmax.f32 %v1676, 0.0
    %v1852 = vmax.f32 %v1680, 0.0
    %v1853 = vmax.f32 %v1686, 0.0
    %v1854 = vmax.f32 %v1690, 0.0
    %v1855 = vmax.f32 %v1696, 0.0
    %v1856 = vmax.f32 %v1700, 0.0
    %v1857 = vmax.f32 %v1706, 0.0
    %v1858 = vmax.f32 %v1710, 0.0
    %v1859 = vmax.f32 %v1716, 0.0
    %v1860 = vmax.f32 %v1720, 0.0
    %v1861 = vmax.f32 %v1726, 0.0
    %v1862 = vmax.f32 %v1730, 0.0
    %v1863 = vmax.f32 %v1736, 0.0
    %v1864 = vmax.f32 %v1740, 0.0
    %v1865 = vmax.f32 %v1746, 0.0
    %v1866 = vmax.f32 %v1750, 0.0
    %v1867 = vpack.c.bf16 %v1852, %v1851
    %v1868 = vpack.c.bf16 %v1854, %v1853
    %v1869 = vpack.c.bf16 %v1856, %v1855
    %v1870 = vpack.c.bf16 %v1858, %v1857
    %v1871 = vpack.c.bf16 %v1860, %v1859
    %v1872 = vpack.c.bf16 %v1862, %v1861
    %v1873 = vpack.c.bf16 %v1864, %v1863
    %v1874 = vpack.c.bf16 %v1866, %v1865
    %v1875 = vld [vmem:[%s2] sm:$0xf]
    %v1876 = vld [vmem:[%s2 + $0x4] sm:$0xf]
    %v1877 = vld [vmem:[%s2 + $0x8] sm:$0xf]
    %v1878 = vld [vmem:[%s2 + $0xc] sm:$0xf]
    %v1879 = vld [vmem:[%s2 + $0x10] sm:$0xf]
    %v1880 = vld [vmem:[%s2 + $0x14] sm:$0xf]
    %v1881 = vld [vmem:[%s2 + $0x18] sm:$0xf]
    %v1882 = vld [vmem:[%s2 + $0x1c] sm:$0xf]
    %v1883 = vld [vmem:[%s2 + $0x20] sm:$0xf]
    %v1884 = vld [vmem:[%s2 + $0x24] sm:$0xf]
    %v1885 = vld [vmem:[%s2 + $0x28] sm:$0xf]
    %v1886 = vld [vmem:[%s2 + $0x2c] sm:$0xf]
    %v1887 = vld [vmem:[%s2 + $0x30] sm:$0xf]
    %v1888 = vld [vmem:[%s2 + $0x34] sm:$0xf]
    %v1889 = vld [vmem:[%s2 + $0x38] sm:$0xf]
    %v1890 = vld [vmem:[%s2 + $0x3c] sm:$0xf]
    %v1907 = vunpack.c.l.b16 %v1875
    %v1908 = vunpack.c.l.b16 %v1876
    %v1909 = vunpack.c.l.b16 %v1877
    %v1910 = vunpack.c.l.b16 %v1878
    %v1911 = vunpack.c.l.b16 %v1879
    %v1912 = vunpack.c.l.b16 %v1880
    %v1913 = vunpack.c.l.b16 %v1881
    %v1914 = vunpack.c.l.b16 %v1882
    %v1915 = vunpack.c.l.b16 %v1883
    %v1916 = vunpack.c.l.b16 %v1884
    %v1917 = vunpack.c.l.b16 %v1885
    %v1918 = vunpack.c.l.b16 %v1886
    %v1919 = vunpack.c.l.b16 %v1887
    %v1920 = vunpack.c.l.b16 %v1888
    %v1921 = vunpack.c.l.b16 %v1889
    %v1922 = vunpack.c.l.b16 %v1890
    %v1923 = vpack.c.b16 %v1908, %v1907
    %v1924 = vpack.c.b16 %v1910, %v1909
    %v1925 = vpack.c.b16 %v1912, %v1911
    %v1926 = vpack.c.b16 %v1914, %v1913
    %v1927 = vpack.c.b16 %v1916, %v1915
    %v1928 = vpack.c.b16 %v1918, %v1917
    %v1929 = vpack.c.b16 %v1920, %v1919
    %v1930 = vpack.c.b16 %v1922, %v1921
    %1939 = vmatprep.subr.bf16.mxu0 0
    %1940 = vmatpush1.bf16.msra.mxu0 %v1923
    %1941 = vmatprep.subr.bf16.mxu0 0
    %1942 = vmatpush1.bf16.msra.mxu0 %v1924
    %1943 = vmatprep.subr.bf16.mxu0 0
    %1944 = vmatpush1.bf16.msra.mxu0 %v1925
    %1945 = vmatprep.subr.bf16.mxu0 0
    %1946 = vmatpush1.bf16.msra.mxu0 %v1926
    %1947 = vmatprep.subr.bf16.mxu0 0
    %1948 = vmatpush1.bf16.msra.mxu0 %v1927
    %1949 = vmatprep.subr.bf16.mxu0 0
    %1950 = vmatpush1.bf16.msra.mxu0 %v1928
    %1951 = vmatprep.subr.bf16.mxu0 0
    %1952 = vmatpush1.bf16.msra.mxu0 %v1929
    %1953 = vmatprep.subr.bf16.mxu0 0
    %1954 = vmatpush1.bf16.msra.mxu0 %v1930
    %1955 = vmatprep.subr.bf16.mxu0 0
    %1956 = vmatpush1.bf16.msra.mxu0 0
    %1957 = vmatprep.subr.bf16.mxu0 0
    %1958 = vmatpush1.bf16.msra.mxu0 0
    %1959 = vmatprep.subr.bf16.mxu0 0
    %1960 = vmatpush1.bf16.msra.mxu0 0
    %1961 = vmatprep.subr.bf16.mxu0 0
    %1962 = vmatpush1.bf16.msra.mxu0 0
    %1963 = vmatprep.subr.bf16.mxu0 0
    %1964 = vmatpush1.bf16.msra.mxu0 0
    %1965 = vmatprep.subr.bf16.mxu0 0
    %1966 = vmatpush1.bf16.msra.mxu0 0
    %1967 = vmatprep.subr.bf16.mxu0 0
    %1968 = vmatpush1.bf16.msra.mxu0 0
    %1969 = vmatprep.subr.bf16.mxu0 0
    %1970 = vmatpush1.bf16.msra.mxu0 0
    %1971 = vmatprep.mubr.bf16.mxu0 0
    %1972 = vmatmul.mubr.bf16.gmra.mrb[0].mxu0 %v1867
    %v1973 = vpop.f32.mrb[0].mxu0
    %v1974 = vadd.f32 %v1678, %v1973
    %v1975 = vpop.f32.mrb[0].mxu0
    %v1976 = vpop.f32.mrb[0].mxu0
    %v1977 = vadd.f32 %v1682, %v1976
    %v1978 = vpop.f32.mrb[0].mxu0
    %1979 = vmatprep.mubr.bf16.mxu0 0
    %1980 = vmatmul.mubr.bf16.gmra.mrb[0].mxu0 %v1868
    %v1981 = vpop.f32.mrb[0].mxu0
    %v1982 = vadd.f32 %v1688, %v1981
    %v1983 = vpop.f32.mrb[0].mxu0
    %v1984 = vpop.f32.mrb[0].mxu0
    %v1985 = vadd.f32 %v1692, %v1984
    %v1986 = vpop.f32.mrb[0].mxu0
    %1987 = vmatprep.mubr.bf16.mxu0 0
    %1988 = vmatmul.mubr.bf16.gmra.mrb[0].mxu0 %v1869
    %v1989 = vpop.f32.mrb[0].mxu0
    %v1990 = vadd.f32 %v1698, %v1989
    %v1991 = vpop.f32.mrb[0].mxu0
    %v1992 = vpop.f32.mrb[0].mxu0
    %v1993 = vadd.f32 %v1702, %v1992
    %v1994 = vpop.f32.mrb[0].mxu0
    %1995 = vmatprep.mubr.bf16.mxu0 0
    %1996 = vmatmul.mubr.bf16.gmra.mrb[0].mxu0 %v1870
    %v1997 = vpop.f32.mrb[0].mxu0
    %v1998 = vadd.f32 %v1708, %v1997
    %v1999 = vpop.f32.mrb[0].mxu0
    %v2000 = vpop.f32.mrb[0].mxu0
    %v2001 = vadd.f32 %v1712, %v2000
    %v2002 = vpop.f32.mrb[0].mxu0
    %2003 = vmatprep.mubr.bf16.mxu0 0
    %2004 = vmatmul.mubr.bf16.gmra.mrb[0].mxu0 %v1871
    %v2005 = vpop.f32.mrb[0].mxu0
    %v2006 = vadd.f32 %v1718, %v2005
    %v2007 = vpop.f32.mrb[0].mxu0
    %v2008 = vpop.f32.mrb[0].mxu0
    %v2009 = vadd.f32 %v1722, %v2008
    %v2010 = vpop.f32.mrb[0].mxu0
    %2011 = vmatprep.mubr.bf16.mxu0 0
    %2012 = vmatmul.mubr.bf16.gmra.mrb[0].mxu0 %v1872
    %v2013 = vpop.f32.mrb[0].mxu0
    %v2014 = vadd.f32 %v1728, %v2013
    %v2015 = vpop.f32.mrb[0].mxu0
    %v2016 = vpop.f32.mrb[0].mxu0
    %v2017 = vadd.f32 %v1732, %v2016
    %v2018 = vpop.f32.mrb[0].mxu0
    %2019 = vmatprep.mubr.bf16.mxu0 0
    %2020 = vmatmul.mubr.bf16.gmra.mrb[0].mxu0 %v1873
    %v2021 = vpop.f32.mrb[0].mxu0
    %v2022 = vadd.f32 %v1738, %v2021
    %v2023 = vpop.f32.mrb[0].mxu0
    %v2024 = vpop.f32.mrb[0].mxu0
    %v2025 = vadd.f32 %v1742, %v2024
    %v2026 = vpop.f32.mrb[0].mxu0
    %2027 = vmatprep.mubr.bf16.mxu0 0
    %2028 = vmatmul.mubr.bf16.gmra.mrb[0].mxu0 %v1874
    %v2029 = vpop.f32.mrb[0].mxu0
    %v2030 = vadd.f32 %v1748, %v2029
    %v2031 = vpop.f32.mrb[0].mxu0
    %v2032 = vpop.f32.mrb[0].mxu0
    %v2033 = vadd.f32 %v1752, %v2032
    %v2034 = vpop.f32.mrb[0].mxu0
    %2035 = vdwg.mxu0
    %v2036 = vmax.f32 %v1974, 0.0
    %v2037 = vmax.f32 %v1977, 0.0
    %v2038 = vmax.f32 %v1982, 0.0
    %v2039 = vmax.f32 %v1985, 0.0
    %v2040 = vmax.f32 %v1990, 0.0
    %v2041 = vmax.f32 %v1993, 0.0
    %v2042 = vmax.f32 %v1998, 0.0
    %v2043 = vmax.f32 %v2001, 0.0
    %v2044 = vmax.f32 %v2006, 0.0
    %v2045 = vmax.f32 %v2009, 0.0
    %v2046 = vmax.f32 %v2014, 0.0
    %v2047 = vmax.f32 %v2017, 0.0
    %v2048 = vmax.f32 %v2022, 0.0
    %v2049 = vmax.f32 %v2025, 0.0
    %v2050 = vmax.f32 %v2030, 0.0
    %v2051 = vmax.f32 %v2033, 0.0
    %v2052 = vpack.c.bf16 %v2037, %v2036
    %v2053 = vpack.c.bf16 %v2039, %v2038
    %v2054 = vpack.c.bf16 %v2041, %v2040
    %v2055 = vpack.c.bf16 %v2043, %v2042
    %v2056 = vpack.c.bf16 %v2045, %v2044
    %v2057 = vpack.c.bf16 %v2047, %v2046
    %v2058 = vpack.c.bf16 %v2049, %v2048
    %v2059 = vpack.c.bf16 %v2051, %v2050
    %v2060 = vld [vmem:[%s3] sm:$0xf]
    %v2061 = vld [vmem:[%s3 + $0x4] sm:$0xf]
    %v2062 = vld [vmem:[%s3 + $0x8] sm:$0xf]
    %v2063 = vld [vmem:[%s3 + $0xc] sm:$0xf]
    %v2064 = vld [vmem:[%s3 + $0x10] sm:$0xf]
    %v2065 = vld [vmem:[%s3 + $0x14] sm:$0xf]
    %v2066 = vld [vmem:[%s3 + $0x18] sm:$0xf]
    %v2067 = vld [vmem:[%s3 + $0x1c] sm:$0xf]
    %v2068 = vld [vmem:[%s3 + $0x20] sm:$0xf]
    %v2069 = vld [vmem:[%s3 + $0x24] sm:$0xf]
    %v2070 = vld [vmem:[%s3 + $0x28] sm:$0xf]
    %v2071 = vld [vmem:[%s3 + $0x2c] sm:$0xf]
    %v2072 = vld [vmem:[%s3 + $0x30] sm:$0xf]
    %v2073 = vld [vmem:[%s3 + $0x34] sm:$0xf]
    %v2074 = vld [vmem:[%s3 + $0x38] sm:$0xf]
    %v2075 = vld [vmem:[%s3 + $0x3c] sm:$0xf]
    %v2092 = vunpack.c.l.b16 %v2060
    %v2093 = vunpack.c.l.b16 %v2061
    %v2094 = vunpack.c.l.b16 %v2062
    %v2095 = vunpack.c.l.b16 %v2063
    %v2096 = vunpack.c.l.b16 %v2064
    %v2097 = vunpack.c.l.b16 %v2065
    %v2098 = vunpack.c.l.b16 %v2066
    %v2099 = vunpack.c.l.b16 %v2067
    %v2100 = vunpack.c.l.b16 %v2068
    %v2101 = vunpack.c.l.b16 %v2069
    %v2102 = vunpack.c.l.b16 %v2070
    %v2103 = vunpack.c.l.b16 %v2071
    %v2104 = vunpack.c.l.b16 %v2072
    %v2105 = vunpack.c.l.b16 %v2073
    %v2106 = vunpack.c.l.b16 %v2074
    %v2107 = vunpack.c.l.b16 %v2075
    %v2108 = vpack.c.b16 %v2093, %v2092
    %v2109 = vpack.c.b16 %v2095, %v2094
    %v2110 = vpack.c.b16 %v2097, %v2096
    %v2111 = vpack.c.b16 %v2099, %v2098
    %v2112 = vpack.c.b16 %v2101, %v2100
    %v2113 = vpack.c.b16 %v2103, %v2102
    %v2114 = vpack.c.b16 %v2105, %v2104
    %v2115 = vpack.c.b16 %v2107, %v2106
    %2124 = vmatprep.subr.bf16.mxu0 0
    %2125 = vmatpush1.bf16.msra.mxu0 %v2108
    %2126 = vmatprep.subr.bf16.mxu0 0
    %2127 = vmatpush1.bf16.msra.mxu0 %v2109
    %2128 = vmatprep.subr.bf16.mxu0 0
    %2129 = vmatpush1.bf16.msra.mxu0 %v2110
    %2130 = vmatprep.subr.bf16.mxu0 0
    %2131 = vmatpush1.bf16.msra.mxu0 %v2111
    %2132 = vmatprep.subr.bf16.mxu0 0
    %2133 = vmatpush1.bf16.msra.mxu0 %v2112
    %2134 = vmatprep.subr.bf16.mxu0 0
    %2135 = vmatpush1.bf16.msra.mxu0 %v2113
    %2136 = vmatprep.subr.bf16.mxu0 0
    %2137 = vmatpush1.bf16.msra.mxu0 %v2114
    %2138 = vmatprep.subr.bf16.mxu0 0
    %2139 = vmatpush1.bf16.msra.mxu0 %v2115
    %2140 = vmatprep.subr.bf16.mxu0 0
    %2141 = vmatpush1.bf16.msra.mxu0 0
    %2142 = vmatprep.subr.bf16.mxu0 0
    %2143 = vmatpush1.bf16.msra.mxu0 0
    %2144 = vmatprep.subr.bf16.mxu0 0
    %2145 = vmatpush1.bf16.msra.mxu0 0
    %2146 = vmatprep.subr.bf16.mxu0 0
    %2147 = vmatpush1.bf16.msra.mxu0 0
    %2148 = vmatprep.subr.bf16.mxu0 0
    %2149 = vmatpush1.bf16.msra.mxu0 0
    %2150 = vmatprep.subr.bf16.mxu0 0
    %2151 = vmatpush1.bf16.msra.mxu0 0
    %2152 = vmatprep.subr.bf16.mxu0 0
    %2153 = vmatpush1.bf16.msra.mxu0 0
    %2154 = vmatprep.subr.bf16.mxu0 0
    %2155 = vmatpush1.bf16.msra.mxu0 0
    %2156 = vmatprep.mubr.bf16.mxu0 0
    %2157 = vmatmul.mubr.bf16.gmra.mrb[0].mxu0 %v2052
    %v2158 = vpop.f32.mrb[0].mxu0
    %v2159 = vadd.f32 %v1789, %v2158
    %v2160 = vpop.f32.mrb[0].mxu0
    %v2161 = vpop.f32.mrb[0].mxu0
    %v2162 = vadd.f32 %v1792, %v2161
    %v2163 = vpop.f32.mrb[0].mxu0
    %2164 = vmatprep.mubr.bf16.mxu0 0
    %2165 = vmatmul.mubr.bf16.gmra.mrb[0].mxu0 %v2053
    %v2166 = vpop.f32.mrb[0].mxu0
    %v2167 = vadd.f32 %v1797, %v2166
    %v2168 = vpop.f32.mrb[0].mxu0
    %v2169 = vpop.f32.mrb[0].mxu0
    %v2170 = vadd.f32 %v1800, %v2169
    %v2171 = vpop.f32.mrb[0].mxu0
    %2172 = vmatprep.mubr.bf16.mxu0 0
    %2173 = vmatmul.mubr.bf16.gmra.mrb[0].mxu0 %v2054
    %v2174 = vpop.f32.mrb[0].mxu0
    %v2175 = vadd.f32 %v1805, %v2174
    %v2176 = vpop.f32.mrb[0].mxu0
    %v2177 = vpop.f32.mrb[0].mxu0
    %v2178 = vadd.f32 %v1808, %v2177
    %v2179 = vpop.f32.mrb[0].mxu0
    %2180 = vmatprep.mubr.bf16.mxu0 0
    %2181 = vmatmul.mubr.bf16.gmra.mrb[0].mxu0 %v2055
    %v2182 = vpop.f32.mrb[0].mxu0
    %v2183 = vadd.f32 %v1813, %v2182
    %v2184 = vpop.f32.mrb[0].mxu0
    %v2185 = vpop.f32.mrb[0].mxu0
    %v2186 = vadd.f32 %v1816, %v2185
    %v2187 = vpop.f32.mrb[0].mxu0
    %2188 = vmatprep.mubr.bf16.mxu0 0
    %2189 = vmatmul.mubr.bf16.gmra.mrb[0].mxu0 %v2056
    %v2190 = vpop.f32.mrb[0].mxu0
    %v2191 = vadd.f32 %v1821, %v2190
    %v2192 = vpop.f32.mrb[0].mxu0
    %v2193 = vpop.f32.mrb[0].mxu0
    %v2194 = vadd.f32 %v1824, %v2193
    %v2195 = vpop.f32.mrb[0].mxu0
    %2196 = vmatprep.mubr.bf16.mxu0 0
    %2197 = vmatmul.mubr.bf16.gmra.mrb[0].mxu0 %v2057
    %v2198 = vpop.f32.mrb[0].mxu0
    %v2199 = vadd.f32 %v1829, %v2198
    %v2200 = vpop.f32.mrb[0].mxu0
    %v2201 = vpop.f32.mrb[0].mxu0
    %v2202 = vadd.f32 %v1832, %v2201
    %v2203 = vpop.f32.mrb[0].mxu0
    %2204 = vmatprep.mubr.bf16.mxu0 0
    %2205 = vmatmul.mubr.bf16.gmra.mrb[0].mxu0 %v2058
    %v2206 = vpop.f32.mrb[0].mxu0
    %v2207 = vadd.f32 %v1837, %v2206
    %v2208 = vpop.f32.mrb[0].mxu0
    %v2209 = vpop.f32.mrb[0].mxu0
    %v2210 = vadd.f32 %v1840, %v2209
    %v2211 = vpop.f32.mrb[0].mxu0
    %2212 = vmatprep.mubr.bf16.mxu0 0
    %2213 = vmatmul.mubr.bf16.gmra.mrb[0].mxu0 %v2059
    %v2214 = vpop.f32.mrb[0].mxu0
    %v2215 = vadd.f32 %v1845, %v2214
    %v2216 = vpop.f32.mrb[0].mxu0
    %v2217 = vpop.f32.mrb[0].mxu0
    %v2218 = vadd.f32 %v1848, %v2217
    %v2219 = vpop.f32.mrb[0].mxu0
    %2220 = vdwg.mxu0
    %v2221 = vpack.c.bf16 %v2162, %v2159
    %v2222 = vpack.c.bf16 %v2170, %v2167
    %v2223 = vpack.c.bf16 %v2178, %v2175
    %v2224 = vpack.c.bf16 %v2186, %v2183
    %v2225 = vpack.c.bf16 %v2194, %v2191
    %v2226 = vpack.c.bf16 %v2202, %v2199
    %v2227 = vpack.c.bf16 %v2210, %v2207
    %v2228 = vpack.c.bf16 %v2218, %v2215
    %v2237 = vunpack.c.l.b16 %v2221
    %v2238 = vunpack.c.h.b16 %v2221
    %v2239 = vunpack.c.l.b16 %v2222
    %v2240 = vunpack.c.h.b16 %v2222
    %v2241 = vunpack.c.l.b16 %v2223
    %v2242 = vunpack.c.h.b16 %v2223
    %v2243 = vunpack.c.l.b16 %v2224
    %v2244 = vunpack.c.h.b16 %v2224
    %v2245 = vunpack.c.l.b16 %v2225
    %v2246 = vunpack.c.h.b16 %v2225
    %v2247 = vunpack.c.l.b16 %v2226
    %v2248 = vunpack.c.h.b16 %v2226
    %v2249 = vunpack.c.l.b16 %v2227
    %v2250 = vunpack.c.h.b16 %v2227
    %v2251 = vunpack.c.l.b16 %v2228
    %v2252 = vunpack.c.h.b16 %v2228
    %v2253 = vpack.c.b16 %v2237, %v2237
    %v2254 = vpack.c.b16 %v2238, %v2238
    %v2255 = vpack.c.b16 %v2239, %v2239
    %v2256 = vpack.c.b16 %v2240, %v2240
    %v2257 = vpack.c.b16 %v2241, %v2241
    %v2258 = vpack.c.b16 %v2242, %v2242
    %v2259 = vpack.c.b16 %v2243, %v2243
    %v2260 = vpack.c.b16 %v2244, %v2244
    %v2261 = vpack.c.b16 %v2245, %v2245
    %v2262 = vpack.c.b16 %v2246, %v2246
    %v2263 = vpack.c.b16 %v2247, %v2247
    %v2264 = vpack.c.b16 %v2248, %v2248
    %v2265 = vpack.c.b16 %v2249, %v2249
    %v2266 = vpack.c.b16 %v2250, %v2250
    %v2267 = vpack.c.b16 %v2251, %v2251
    %v2268 = vpack.c.b16 %v2252, %v2252
    %s2285 = scalar_lea.vmem [#allocation2], 128
    %2286 = vst [vmem:[%s2285] sm:$0xf] %v2253
    %2287 = vst [vmem:[%s2285 + $0x4] sm:$0xf] %v2254
    %2288 = vst [vmem:[%s2285 + $0x8] sm:$0xf] %v2255
    %2289 = vst [vmem:[%s2285 + $0xc] sm:$0xf] %v2256
    %2290 = vst [vmem:[%s2285 + $0x10] sm:$0xf] %v2257
    %2291 = vst [vmem:[%s2285 + $0x14] sm:$0xf] %v2258
    %2292 = vst [vmem:[%s2285 + $0x18] sm:$0xf] %v2259
    %2293 = vst [vmem:[%s2285 + $0x1c] sm:$0xf] %v2260
    %2294 = vst [vmem:[%s2285 + $0x20] sm:$0xf] %v2261
    %2295 = vst [vmem:[%s2285 + $0x24] sm:$0xf] %v2262
    %2296 = vst [vmem:[%s2285 + $0x28] sm:$0xf] %v2263
    %2297 = vst [vmem:[%s2285 + $0x2c] sm:$0xf] %v2264
    %2298 = vst [vmem:[%s2285 + $0x30] sm:$0xf] %v2265
    %2299 = vst [vmem:[%s2285 + $0x34] sm:$0xf] %v2266
    %2300 = vst [vmem:[%s2285 + $0x38] sm:$0xf] %v2267
    %2301 = vst [vmem:[%s2285 + $0x3c] sm:$0xf] %v2268
    %s2302 = scalar_lea.vmem %s0, 192
    %v2303 = vld [vmem:[%s2302] sm:$0xf]
    %v2304 = vld [vmem:[%s2302 + $0x4] sm:$0xf]
    %v2305 = vld [vmem:[%s2302 + $0x8] sm:$0xf]
    %v2306 = vld [vmem:[%s2302 + $0xc] sm:$0xf]
    %v2307 = vld [vmem:[%s2302 + $0x10] sm:$0xf]
    %v2308 = vld [vmem:[%s2302 + $0x14] sm:$0xf]
    %v2309 = vld [vmem:[%s2302 + $0x18] sm:$0xf]
    %v2310 = vld [vmem:[%s2302 + $0x1c] sm:$0xf]
    %v2311 = vld [vmem:[%s2302 + $0x20] sm:$0xf]
    %v2312 = vld [vmem:[%s2302 + $0x24] sm:$0xf]
    %v2313 = vld [vmem:[%s2302 + $0x28] sm:$0xf]
    %v2314 = vld [vmem:[%s2302 + $0x2c] sm:$0xf]
    %v2315 = vld [vmem:[%s2302 + $0x30] sm:$0xf]
    %v2316 = vld [vmem:[%s2302 + $0x34] sm:$0xf]
    %v2317 = vld [vmem:[%s2302 + $0x38] sm:$0xf]
    %v2318 = vld [vmem:[%s2302 + $0x3c] sm:$0xf]
    %v2319 = vld [vmem:[%s1] sm:$0xff]
    %v2320 = vld [vmem:[%s1 + $0x8] sm:$0xf]
    %v2337 = vunpack.c.l.b16 %v2303
    %v2338 = vunpack.c.l.b16 %v2304
    %v2339 = vunpack.c.l.b16 %v2305
    %v2340 = vunpack.c.l.b16 %v2306
    %v2341 = vunpack.c.l.b16 %v2307
    %v2342 = vunpack.c.l.b16 %v2308
    %v2343 = vunpack.c.l.b16 %v2309
    %v2344 = vunpack.c.l.b16 %v2310
    %v2345 = vunpack.c.l.b16 %v2311
    %v2346 = vunpack.c.l.b16 %v2312
    %v2347 = vunpack.c.l.b16 %v2313
    %v2348 = vunpack.c.l.b16 %v2314
    %v2349 = vunpack.c.l.b16 %v2315
    %v2350 = vunpack.c.l.b16 %v2316
    %v2351 = vunpack.c.l.b16 %v2317
    %v2352 = vunpack.c.l.b16 %v2318
    %v2353 = vpack.c.b16 %v2338, %v2337
    %v2354 = vpack.c.b16 %v2340, %v2339
    %v2355 = vpack.c.b16 %v2342, %v2341
    %v2356 = vpack.c.b16 %v2344, %v2343
    %v2357 = vpack.c.b16 %v2346, %v2345
    %v2358 = vpack.c.b16 %v2348, %v2347
    %v2359 = vpack.c.b16 %v2350, %v2349
    %v2360 = vpack.c.b16 %v2352, %v2351
    %v2363 = vunpack.c.l.b16 %v2319
    %v2364 = vunpack.c.h.b16 %v2319
    %v2365 = vunpack.c.l.b16 %v2320
    %v2366 = vpack.c.b16 %v2363, %v2363
    %v2367 = vpack.c.b16 %v2364, %v2364
    %v2368 = vpack.c.b16 %v2365, %v2365
    %v2370 = vsel %vm85, %v2353, 0
    %v2373 = vsel %vm85, %v2354, 0
    %v2376 = vsel %vm85, %v2355, 0
    %v2379 = vsel %vm85, %v2356, 0
    %v2382 = vsel %vm85, %v2357, 0
    %v2385 = vsel %vm85, %v2358, 0
    %v2388 = vsel %vm85, %v2359, 0
    %v2391 = vsel %vm85, %v2360, 0
    %v2394 = vsel %vm110, %v2366, 0
    %v2397 = vsel %vm110, %v2367, 0
    %v2400 = vsel %vm110, %v2368, 0
    %2402 = vmatprep.subr.bf16.mxu0 %v2397
    %2403 = vmatpush1.bf16.msra.mxu0 %v2394
    %2404 = vmatprep.subr.bf16.mxu0 0
    %2405 = vmatpush1.bf16.msra.mxu0 0
    %2406 = vmatprep.subr.bf16.mxu0 0
    %2407 = vmatpush1.bf16.msra.mxu0 0
    %2408 = vmatprep.subr.bf16.mxu0 0
    %2409 = vmatpush1.bf16.msra.mxu0 0
    %2410 = vmatprep.subr.bf16.mxu0 0
    %2411 = vmatpush1.bf16.msra.mxu0 0
    %2412 = vmatprep.subr.bf16.mxu0 0
    %2413 = vmatpush1.bf16.msra.mxu0 0
    %2414 = vmatprep.subr.bf16.mxu0 0
    %2415 = vmatpush1.bf16.msra.mxu0 0
    %2416 = vmatprep.subr.bf16.mxu0 0
    %2417 = vmatpush1.bf16.msra.mxu0 0
    %2418 = vmatprep.subr.bf16.mxu0 0
    %2419 = vmatpush1.bf16.msra.mxu0 0
    %2420 = vmatprep.subr.bf16.mxu0 0
    %2421 = vmatpush1.bf16.msra.mxu0 0
    %2422 = vmatprep.subr.bf16.mxu0 0
    %2423 = vmatpush1.bf16.msra.mxu0 0
    %2424 = vmatprep.subr.bf16.mxu0 0
    %2425 = vmatpush1.bf16.msra.mxu0 0
    %2426 = vmatprep.subr.bf16.mxu0 0
    %2427 = vmatpush1.bf16.msra.mxu0 0
    %2428 = vmatprep.subr.bf16.mxu0 0
    %2429 = vmatpush1.bf16.msra.mxu0 0
    %2430 = vmatprep.subr.bf16.mxu0 0
    %2431 = vmatpush1.bf16.msra.mxu0 0
    %2432 = vmatprep.subr.bf16.mxu0 0
    %2433 = vmatpush1.bf16.msra.mxu0 0
    %2434 = vmatprep.mubr.bf16.mxu0 0
    %2435 = vmatmul.mubr.bf16.gmra.mrb[0].mxu0 %v2370
    %v2436 = vpop.f32.mrb[0].mxu0
    %v2437 = vadd.f32 0.0, %v2436
    %v2438 = vpop.f32.mrb[0].mxu0
    %v2439 = vadd.f32 0.0, %v2438
    %v2440 = vpop.f32.mrb[0].mxu0
    %v2441 = vadd.f32 0.0, %v2440
    %v2442 = vpop.f32.mrb[0].mxu0
    %v2443 = vadd.f32 0.0, %v2442
    %2444 = vmatprep.mubr.bf16.mxu0 0
    %2445 = vmatmul.mubr.bf16.gmra.mrb[0].mxu0 %v2373
    %v2446 = vpop.f32.mrb[0].mxu0
    %v2447 = vadd.f32 0.0, %v2446
    %v2448 = vpop.f32.mrb[0].mxu0
    %v2449 = vadd.f32 0.0, %v2448
    %v2450 = vpop.f32.mrb[0].mxu0
    %v2451 = vadd.f32 0.0, %v2450
    %v2452 = vpop.f32.mrb[0].mxu0
    %v2453 = vadd.f32 0.0, %v2452
    %2454 = vmatprep.mubr.bf16.mxu0 0
    %2455 = vmatmul.mubr.bf16.gmra.mrb[0].mxu0 %v2376
    %v2456 = vpop.f32.mrb[0].mxu0
    %v2457 = vadd.f32 0.0, %v2456
    %v2458 = vpop.f32.mrb[0].mxu0
    %v2459 = vadd.f32 0.0, %v2458
    %v2460 = vpop.f32.mrb[0].mxu0
    %v2461 = vadd.f32 0.0, %v2460
    %v2462 = vpop.f32.mrb[0].mxu0
    %v2463 = vadd.f32 0.0, %v2462
    %2464 = vmatprep.mubr.bf16.mxu0 0
    %2465 = vmatmul.mubr.bf16.gmra.mrb[0].mxu0 %v2379
    %v2466 = vpop.f32.mrb[0].mxu0
    %v2467 = vadd.f32 0.0, %v2466
    %v2468 = vpop.f32.mrb[0].mxu0
    %v2469 = vadd.f32 0.0, %v2468
    %v2470 = vpop.f32.mrb[0].mxu0
    %v2471 = vadd.f32 0.0, %v2470
    %v2472 = vpop.f32.mrb[0].mxu0
    %v2473 = vadd.f32 0.0, %v2472
    %2474 = vmatprep.mubr.bf16.mxu0 0
    %2475 = vmatmul.mubr.bf16.gmra.mrb[0].mxu0 %v2382
    %v2476 = vpop.f32.mrb[0].mxu0
    %v2477 = vadd.f32 0.0, %v2476
    %v2478 = vpop.f32.mrb[0].mxu0
    %v2479 = vadd.f32 0.0, %v2478
    %v2480 = vpop.f32.mrb[0].mxu0
    %v2481 = vadd.f32 0.0, %v2480
    %v2482 = vpop.f32.mrb[0].mxu0
    %v2483 = vadd.f32 0.0, %v2482
    %2484 = vmatprep.mubr.bf16.mxu0 0
    %2485 = vmatmul.mubr.bf16.gmra.mrb[0].mxu0 %v2385
    %v2486 = vpop.f32.mrb[0].mxu0
    %v2487 = vadd.f32 0.0, %v2486
    %v2488 = vpop.f32.mrb[0].mxu0
    %v2489 = vadd.f32 0.0, %v2488
    %v2490 = vpop.f32.mrb[0].mxu0
    %v2491 = vadd.f32 0.0, %v2490
    %v2492 = vpop.f32.mrb[0].mxu0
    %v2493 = vadd.f32 0.0, %v2492
    %2494 = vmatprep.mubr.bf16.mxu0 0
    %2495 = vmatmul.mubr.bf16.gmra.mrb[0].mxu0 %v2388
    %v2496 = vpop.f32.mrb[0].mxu0
    %v2497 = vadd.f32 0.0, %v2496
    %v2498 = vpop.f32.mrb[0].mxu0
    %v2499 = vadd.f32 0.0, %v2498
    %v2500 = vpop.f32.mrb[0].mxu0
    %v2501 = vadd.f32 0.0, %v2500
    %v2502 = vpop.f32.mrb[0].mxu0
    %v2503 = vadd.f32 0.0, %v2502
    %2504 = vmatprep.mubr.bf16.mxu0 0
    %2505 = vmatmul.mubr.bf16.gmra.mrb[0].mxu0 %v2391
    %v2506 = vpop.f32.mrb[0].mxu0
    %v2507 = vadd.f32 0.0, %v2506
    %v2508 = vpop.f32.mrb[0].mxu0
    %v2509 = vadd.f32 0.0, %v2508
    %v2510 = vpop.f32.mrb[0].mxu0
    %v2511 = vadd.f32 0.0, %v2510
    %v2512 = vpop.f32.mrb[0].mxu0
    %v2513 = vadd.f32 0.0, %v2512
    %2514 = vdwg.mxu0
    %2515 = vmatprep.subr.bf16.mxu0 0
    %2516 = vmatpush1.bf16.msra.mxu0 %v2400
    %2517 = vmatprep.subr.bf16.mxu0 0
    %2518 = vmatpush1.bf16.msra.mxu0 0
    %2519 = vmatprep.subr.bf16.mxu0 0
    %2520 = vmatpush1.bf16.msra.mxu0 0
    %2521 = vmatprep.subr.bf16.mxu0 0
    %2522 = vmatpush1.bf16.msra.mxu0 0
    %2523 = vmatprep.subr.bf16.mxu0 0
    %2524 = vmatpush1.bf16.msra.mxu0 0
    %2525 = vmatprep.subr.bf16.mxu0 0
    %2526 = vmatpush1.bf16.msra.mxu0 0
    %2527 = vmatprep.subr.bf16.mxu0 0
    %2528 = vmatpush1.bf16.msra.mxu0 0
    %2529 = vmatprep.subr.bf16.mxu0 0
    %2530 = vmatpush1.bf16.msra.mxu0 0
    %2531 = vmatprep.subr.bf16.mxu0 0
    %2532 = vmatpush1.bf16.msra.mxu0 0
    %2533 = vmatprep.subr.bf16.mxu0 0
    %2534 = vmatpush1.bf16.msra.mxu0 0
    %2535 = vmatprep.subr.bf16.mxu0 0
    %2536 = vmatpush1.bf16.msra.mxu0 0
    %2537 = vmatprep.subr.bf16.mxu0 0
    %2538 = vmatpush1.bf16.msra.mxu0 0
    %2539 = vmatprep.subr.bf16.mxu0 0
    %2540 = vmatpush1.bf16.msra.mxu0 0
    %2541 = vmatprep.subr.bf16.mxu0 0
    %2542 = vmatpush1.bf16.msra.mxu0 0
    %2543 = vmatprep.subr.bf16.mxu0 0
    %2544 = vmatpush1.bf16.msra.mxu0 0
    %2545 = vmatprep.subr.bf16.mxu0 0
    %2546 = vmatpush1.bf16.msra.mxu0 0
    %2547 = vmatprep.mubr.bf16.mxu0 0
    %2548 = vmatmul.mubr.bf16.gmra.mrb[0].mxu0 %v2370
    %v2549 = vpop.f32.mrb[0].mxu0
    %v2550 = vadd.f32 0.0, %v2549
    %v2551 = vpop.f32.mrb[0].mxu0
    %v2552 = vpop.f32.mrb[0].mxu0
    %v2553 = vadd.f32 0.0, %v2552
    %v2554 = vpop.f32.mrb[0].mxu0
    %2555 = vmatprep.mubr.bf16.mxu0 0
    %2556 = vmatmul.mubr.bf16.gmra.mrb[0].mxu0 %v2373
    %v2557 = vpop.f32.mrb[0].mxu0
    %v2558 = vadd.f32 0.0, %v2557
    %v2559 = vpop.f32.mrb[0].mxu0
    %v2560 = vpop.f32.mrb[0].mxu0
    %v2561 = vadd.f32 0.0, %v2560
    %v2562 = vpop.f32.mrb[0].mxu0
    %2563 = vmatprep.mubr.bf16.mxu0 0
    %2564 = vmatmul.mubr.bf16.gmra.mrb[0].mxu0 %v2376
    %v2565 = vpop.f32.mrb[0].mxu0
    %v2566 = vadd.f32 0.0, %v2565
    %v2567 = vpop.f32.mrb[0].mxu0
    %v2568 = vpop.f32.mrb[0].mxu0
    %v2569 = vadd.f32 0.0, %v2568
    %v2570 = vpop.f32.mrb[0].mxu0
    %2571 = vmatprep.mubr.bf16.mxu0 0
    %2572 = vmatmul.mubr.bf16.gmra.mrb[0].mxu0 %v2379
    %v2573 = vpop.f32.mrb[0].mxu0
    %v2574 = vadd.f32 0.0, %v2573
    %v2575 = vpop.f32.mrb[0].mxu0
    %v2576 = vpop.f32.mrb[0].mxu0
    %v2577 = vadd.f32 0.0, %v2576
    %v2578 = vpop.f32.mrb[0].mxu0
    %2579 = vmatprep.mubr.bf16.mxu0 0
    %2580 = vmatmul.mubr.bf16.gmra.mrb[0].mxu0 %v2382
    %v2581 = vpop.f32.mrb[0].mxu0
    %v2582 = vadd.f32 0.0, %v2581
    %v2583 = vpop.f32.mrb[0].mxu0
    %v2584 = vpop.f32.mrb[0].mxu0
    %v2585 = vadd.f32 0.0, %v2584
    %v2586 = vpop.f32.mrb[0].mxu0
    %2587 = vmatprep.mubr.bf16.mxu0 0
    %2588 = vmatmul.mubr.bf16.gmra.mrb[0].mxu0 %v2385
    %v2589 = vpop.f32.mrb[0].mxu0
    %v2590 = vadd.f32 0.0, %v2589
    %v2591 = vpop.f32.mrb[0].mxu0
    %v2592 = vpop.f32.mrb[0].mxu0
    %v2593 = vadd.f32 0.0, %v2592
    %v2594 = vpop.f32.mrb[0].mxu0
    %2595 = vmatprep.mubr.bf16.mxu0 0
    %2596 = vmatmul.mubr.bf16.gmra.mrb[0].mxu0 %v2388
    %v2597 = vpop.f32.mrb[0].mxu0
    %v2598 = vadd.f32 0.0, %v2597
    %v2599 = vpop.f32.mrb[0].mxu0
    %v2600 = vpop.f32.mrb[0].mxu0
    %v2601 = vadd.f32 0.0, %v2600
    %v2602 = vpop.f32.mrb[0].mxu0
    %2603 = vmatprep.mubr.bf16.mxu0 0
    %2604 = vmatmul.mubr.bf16.gmra.mrb[0].mxu0 %v2391
    %v2605 = vpop.f32.mrb[0].mxu0
    %v2606 = vadd.f32 0.0, %v2605
    %v2607 = vpop.f32.mrb[0].mxu0
    %v2608 = vpop.f32.mrb[0].mxu0
    %v2609 = vadd.f32 0.0, %v2608
    %v2610 = vpop.f32.mrb[0].mxu0
    %2611 = vdwg.mxu0
    %v2612 = vmax.f32 %v2437, 0.0
    %v2613 = vmax.f32 %v2441, 0.0
    %v2614 = vmax.f32 %v2447, 0.0
    %v2615 = vmax.f32 %v2451, 0.0
    %v2616 = vmax.f32 %v2457, 0.0
    %v2617 = vmax.f32 %v2461, 0.0
    %v2618 = vmax.f32 %v2467, 0.0
    %v2619 = vmax.f32 %v2471, 0.0
    %v2620 = vmax.f32 %v2477, 0.0
    %v2621 = vmax.f32 %v2481, 0.0
    %v2622 = vmax.f32 %v2487, 0.0
    %v2623 = vmax.f32 %v2491, 0.0
    %v2624 = vmax.f32 %v2497, 0.0
    %v2625 = vmax.f32 %v2501, 0.0
    %v2626 = vmax.f32 %v2507, 0.0
    %v2627 = vmax.f32 %v2511, 0.0
    %v2628 = vpack.c.bf16 %v2613, %v2612
    %v2629 = vpack.c.bf16 %v2615, %v2614
    %v2630 = vpack.c.bf16 %v2617, %v2616
    %v2631 = vpack.c.bf16 %v2619, %v2618
    %v2632 = vpack.c.bf16 %v2621, %v2620
    %v2633 = vpack.c.bf16 %v2623, %v2622
    %v2634 = vpack.c.bf16 %v2625, %v2624
    %v2635 = vpack.c.bf16 %v2627, %v2626
    %v2636 = vld [vmem:[%s2] sm:$0xf]
    %v2637 = vld [vmem:[%s2 + $0x4] sm:$0xf]
    %v2638 = vld [vmem:[%s2 + $0x8] sm:$0xf]
    %v2639 = vld [vmem:[%s2 + $0xc] sm:$0xf]
    %v2640 = vld [vmem:[%s2 + $0x10] sm:$0xf]
    %v2641 = vld [vmem:[%s2 + $0x14] sm:$0xf]
    %v2642 = vld [vmem:[%s2 + $0x18] sm:$0xf]
    %v2643 = vld [vmem:[%s2 + $0x1c] sm:$0xf]
    %v2644 = vld [vmem:[%s2 + $0x20] sm:$0xf]
    %v2645 = vld [vmem:[%s2 + $0x24] sm:$0xf]
    %v2646 = vld [vmem:[%s2 + $0x28] sm:$0xf]
    %v2647 = vld [vmem:[%s2 + $0x2c] sm:$0xf]
    %v2648 = vld [vmem:[%s2 + $0x30] sm:$0xf]
    %v2649 = vld [vmem:[%s2 + $0x34] sm:$0xf]
    %v2650 = vld [vmem:[%s2 + $0x38] sm:$0xf]
    %v2651 = vld [vmem:[%s2 + $0x3c] sm:$0xf]
    %v2668 = vunpack.c.l.b16 %v2636
    %v2669 = vunpack.c.l.b16 %v2637
    %v2670 = vunpack.c.l.b16 %v2638
    %v2671 = vunpack.c.l.b16 %v2639
    %v2672 = vunpack.c.l.b16 %v2640
    %v2673 = vunpack.c.l.b16 %v2641
    %v2674 = vunpack.c.l.b16 %v2642
    %v2675 = vunpack.c.l.b16 %v2643
    %v2676 = vunpack.c.l.b16 %v2644
    %v2677 = vunpack.c.l.b16 %v2645
    %v2678 = vunpack.c.l.b16 %v2646
    %v2679 = vunpack.c.l.b16 %v2647
    %v2680 = vunpack.c.l.b16 %v2648
    %v2681 = vunpack.c.l.b16 %v2649
    %v2682 = vunpack.c.l.b16 %v2650
    %v2683 = vunpack.c.l.b16 %v2651
    %v2684 = vpack.c.b16 %v2669, %v2668
    %v2685 = vpack.c.b16 %v2671, %v2670
    %v2686 = vpack.c.b16 %v2673, %v2672
    %v2687 = vpack.c.b16 %v2675, %v2674
    %v2688 = vpack.c.b16 %v2677, %v2676
    %v2689 = vpack.c.b16 %v2679, %v2678
    %v2690 = vpack.c.b16 %v2681, %v2680
    %v2691 = vpack.c.b16 %v2683, %v2682
    %2700 = vmatprep.subr.bf16.mxu0 0
    %2701 = vmatpush1.bf16.msra.mxu0 %v2684
    %2702 = vmatprep.subr.bf16.mxu0 0
    %2703 = vmatpush1.bf16.msra.mxu0 %v2685
    %2704 = vmatprep.subr.bf16.mxu0 0
    %2705 = vmatpush1.bf16.msra.mxu0 %v2686
    %2706 = vmatprep.subr.bf16.mxu0 0
    %2707 = vmatpush1.bf16.msra.mxu0 %v2687
    %2708 = vmatprep.subr.bf16.mxu0 0
    %2709 = vmatpush1.bf16.msra.mxu0 %v2688
    %2710 = vmatprep.subr.bf16.mxu0 0
    %2711 = vmatpush1.bf16.msra.mxu0 %v2689
    %2712 = vmatprep.subr.bf16.mxu0 0
    %2713 = vmatpush1.bf16.msra.mxu0 %v2690
    %2714 = vmatprep.subr.bf16.mxu0 0
    %2715 = vmatpush1.bf16.msra.mxu0 %v2691
    %2716 = vmatprep.subr.bf16.mxu0 0
    %2717 = vmatpush1.bf16.msra.mxu0 0
    %2718 = vmatprep.subr.bf16.mxu0 0
    %2719 = vmatpush1.bf16.msra.mxu0 0
    %2720 = vmatprep.subr.bf16.mxu0 0
    %2721 = vmatpush1.bf16.msra.mxu0 0
    %2722 = vmatprep.subr.bf16.mxu0 0
    %2723 = vmatpush1.bf16.msra.mxu0 0
    %2724 = vmatprep.subr.bf16.mxu0 0
    %2725 = vmatpush1.bf16.msra.mxu0 0
    %2726 = vmatprep.subr.bf16.mxu0 0
    %2727 = vmatpush1.bf16.msra.mxu0 0
    %2728 = vmatprep.subr.bf16.mxu0 0
    %2729 = vmatpush1.bf16.msra.mxu0 0
    %2730 = vmatprep.subr.bf16.mxu0 0
    %2731 = vmatpush1.bf16.msra.mxu0 0
    %2732 = vmatprep.mubr.bf16.mxu0 0
    %2733 = vmatmul.mubr.bf16.gmra.mrb[0].mxu0 %v2628
    %v2734 = vpop.f32.mrb[0].mxu0
    %v2735 = vadd.f32 %v2439, %v2734
    %v2736 = vpop.f32.mrb[0].mxu0
    %v2737 = vpop.f32.mrb[0].mxu0
    %v2738 = vadd.f32 %v2443, %v2737
    %v2739 = vpop.f32.mrb[0].mxu0
    %2740 = vmatprep.mubr.bf16.mxu0 0
    %2741 = vmatmul.mubr.bf16.gmra.mrb[0].mxu0 %v2629
    %v2742 = vpop.f32.mrb[0].mxu0
    %v2743 = vadd.f32 %v2449, %v2742
    %v2744 = vpop.f32.mrb[0].mxu0
    %v2745 = vpop.f32.mrb[0].mxu0
    %v2746 = vadd.f32 %v2453, %v2745
    %v2747 = vpop.f32.mrb[0].mxu0
    %2748 = vmatprep.mubr.bf16.mxu0 0
    %2749 = vmatmul.mubr.bf16.gmra.mrb[0].mxu0 %v2630
    %v2750 = vpop.f32.mrb[0].mxu0
    %v2751 = vadd.f32 %v2459, %v2750
    %v2752 = vpop.f32.mrb[0].mxu0
    %v2753 = vpop.f32.mrb[0].mxu0
    %v2754 = vadd.f32 %v2463, %v2753
    %v2755 = vpop.f32.mrb[0].mxu0
    %2756 = vmatprep.mubr.bf16.mxu0 0
    %2757 = vmatmul.mubr.bf16.gmra.mrb[0].mxu0 %v2631
    %v2758 = vpop.f32.mrb[0].mxu0
    %v2759 = vadd.f32 %v2469, %v2758
    %v2760 = vpop.f32.mrb[0].mxu0
    %v2761 = vpop.f32.mrb[0].mxu0
    %v2762 = vadd.f32 %v2473, %v2761
    %v2763 = vpop.f32.mrb[0].mxu0
    %2764 = vmatprep.mubr.bf16.mxu0 0
    %2765 = vmatmul.mubr.bf16.gmra.mrb[0].mxu0 %v2632
    %v2766 = vpop.f32.mrb[0].mxu0
    %v2767 = vadd.f32 %v2479, %v2766
    %v2768 = vpop.f32.mrb[0].mxu0
    %v2769 = vpop.f32.mrb[0].mxu0
    %v2770 = vadd.f32 %v2483, %v2769
    %v2771 = vpop.f32.mrb[0].mxu0
    %2772 = vmatprep.mubr.bf16.mxu0 0
    %2773 = vmatmul.mubr.bf16.gmra.mrb[0].mxu0 %v2633
    %v2774 = vpop.f32.mrb[0].mxu0
    %v2775 = vadd.f32 %v2489, %v2774
    %v2776 = vpop.f32.mrb[0].mxu0
    %v2777 = vpop.f32.mrb[0].mxu0
    %v2778 = vadd.f32 %v2493, %v2777
    %v2779 = vpop.f32.mrb[0].mxu0
    %2780 = vmatprep.mubr.bf16.mxu0 0
    %2781 = vmatmul.mubr.bf16.gmra.mrb[0].mxu0 %v2634
    %v2782 = vpop.f32.mrb[0].mxu0
    %v2783 = vadd.f32 %v2499, %v2782
    %v2784 = vpop.f32.mrb[0].mxu0
    %v2785 = vpop.f32.mrb[0].mxu0
    %v2786 = vadd.f32 %v2503, %v2785
    %v2787 = vpop.f32.mrb[0].mxu0
    %2788 = vmatprep.mubr.bf16.mxu0 0
    %2789 = vmatmul.mubr.bf16.gmra.mrb[0].mxu0 %v2635
    %v2790 = vpop.f32.mrb[0].mxu0
    %v2791 = vadd.f32 %v2509, %v2790
    %v2792 = vpop.f32.mrb[0].mxu0
    %v2793 = vpop.f32.mrb[0].mxu0
    %v2794 = vadd.f32 %v2513, %v2793
    %v2795 = vpop.f32.mrb[0].mxu0
    %2796 = vdwg.mxu0
    %v2797 = vmax.f32 %v2735, 0.0
    %v2798 = vmax.f32 %v2738, 0.0
    %v2799 = vmax.f32 %v2743, 0.0
    %v2800 = vmax.f32 %v2746, 0.0
    %v2801 = vmax.f32 %v2751, 0.0
    %v2802 = vmax.f32 %v2754, 0.0
    %v2803 = vmax.f32 %v2759, 0.0
    %v2804 = vmax.f32 %v2762, 0.0
    %v2805 = vmax.f32 %v2767, 0.0
    %v2806 = vmax.f32 %v2770, 0.0
    %v2807 = vmax.f32 %v2775, 0.0
    %v2808 = vmax.f32 %v2778, 0.0
    %v2809 = vmax.f32 %v2783, 0.0
    %v2810 = vmax.f32 %v2786, 0.0
    %v2811 = vmax.f32 %v2791, 0.0
    %v2812 = vmax.f32 %v2794, 0.0
    %v2813 = vpack.c.bf16 %v2798, %v2797
    %v2814 = vpack.c.bf16 %v2800, %v2799
    %v2815 = vpack.c.bf16 %v2802, %v2801
    %v2816 = vpack.c.bf16 %v2804, %v2803
    %v2817 = vpack.c.bf16 %v2806, %v2805
    %v2818 = vpack.c.bf16 %v2808, %v2807
    %v2819 = vpack.c.bf16 %v2810, %v2809
    %v2820 = vpack.c.bf16 %v2812, %v2811
    %v2821 = vld [vmem:[%s3] sm:$0xf]
    %v2822 = vld [vmem:[%s3 + $0x4] sm:$0xf]
    %v2823 = vld [vmem:[%s3 + $0x8] sm:$0xf]
    %v2824 = vld [vmem:[%s3 + $0xc] sm:$0xf]
    %v2825 = vld [vmem:[%s3 + $0x10] sm:$0xf]
    %v2826 = vld [vmem:[%s3 + $0x14] sm:$0xf]
    %v2827 = vld [vmem:[%s3 + $0x18] sm:$0xf]
    %v2828 = vld [vmem:[%s3 + $0x1c] sm:$0xf]
    %v2829 = vld [vmem:[%s3 + $0x20] sm:$0xf]
    %v2830 = vld [vmem:[%s3 + $0x24] sm:$0xf]
    %v2831 = vld [vmem:[%s3 + $0x28] sm:$0xf]
    %v2832 = vld [vmem:[%s3 + $0x2c] sm:$0xf]
    %v2833 = vld [vmem:[%s3 + $0x30] sm:$0xf]
    %v2834 = vld [vmem:[%s3 + $0x34] sm:$0xf]
    %v2835 = vld [vmem:[%s3 + $0x38] sm:$0xf]
    %v2836 = vld [vmem:[%s3 + $0x3c] sm:$0xf]
    %v2853 = vunpack.c.l.b16 %v2821
    %v2854 = vunpack.c.l.b16 %v2822
    %v2855 = vunpack.c.l.b16 %v2823
    %v2856 = vunpack.c.l.b16 %v2824
    %v2857 = vunpack.c.l.b16 %v2825
    %v2858 = vunpack.c.l.b16 %v2826
    %v2859 = vunpack.c.l.b16 %v2827
    %v2860 = vunpack.c.l.b16 %v2828
    %v2861 = vunpack.c.l.b16 %v2829
    %v2862 = vunpack.c.l.b16 %v2830
    %v2863 = vunpack.c.l.b16 %v2831
    %v2864 = vunpack.c.l.b16 %v2832
    %v2865 = vunpack.c.l.b16 %v2833
    %v2866 = vunpack.c.l.b16 %v2834
    %v2867 = vunpack.c.l.b16 %v2835
    %v2868 = vunpack.c.l.b16 %v2836
    %v2869 = vpack.c.b16 %v2854, %v2853
    %v2870 = vpack.c.b16 %v2856, %v2855
    %v2871 = vpack.c.b16 %v2858, %v2857
    %v2872 = vpack.c.b16 %v2860, %v2859
    %v2873 = vpack.c.b16 %v2862, %v2861
    %v2874 = vpack.c.b16 %v2864, %v2863
    %v2875 = vpack.c.b16 %v2866, %v2865
    %v2876 = vpack.c.b16 %v2868, %v2867
    %2885 = vmatprep.subr.bf16.mxu0 0
    %2886 = vmatpush1.bf16.msra.mxu0 %v2869
    %2887 = vmatprep.subr.bf16.mxu0 0
    %2888 = vmatpush1.bf16.msra.mxu0 %v2870
    %2889 = vmatprep.subr.bf16.mxu0 0
    %2890 = vmatpush1.bf16.msra.mxu0 %v2871
    %2891 = vmatprep.subr.bf16.mxu0 0
    %2892 = vmatpush1.bf16.msra.mxu0 %v2872
    %2893 = vmatprep.subr.bf16.mxu0 0
    %2894 = vmatpush1.bf16.msra.mxu0 %v2873
    %2895 = vmatprep.subr.bf16.mxu0 0
    %2896 = vmatpush1.bf16.msra.mxu0 %v2874
    %2897 = vmatprep.subr.bf16.mxu0 0
    %2898 = vmatpush1.bf16.msra.mxu0 %v2875
    %2899 = vmatprep.subr.bf16.mxu0 0
    %2900 = vmatpush1.bf16.msra.mxu0 %v2876
    %2901 = vmatprep.subr.bf16.mxu0 0
    %2902 = vmatpush1.bf16.msra.mxu0 0
    %2903 = vmatprep.subr.bf16.mxu0 0
    %2904 = vmatpush1.bf16.msra.mxu0 0
    %2905 = vmatprep.subr.bf16.mxu0 0
    %2906 = vmatpush1.bf16.msra.mxu0 0
    %2907 = vmatprep.subr.bf16.mxu0 0
    %2908 = vmatpush1.bf16.msra.mxu0 0
    %2909 = vmatprep.subr.bf16.mxu0 0
    %2910 = vmatpush1.bf16.msra.mxu0 0
    %2911 = vmatprep.subr.bf16.mxu0 0
    %2912 = vmatpush1.bf16.msra.mxu0 0
    %2913 = vmatprep.subr.bf16.mxu0 0
    %2914 = vmatpush1.bf16.msra.mxu0 0
    %2915 = vmatprep.subr.bf16.mxu0 0
    %2916 = vmatpush1.bf16.msra.mxu0 0
    %2917 = vmatprep.mubr.bf16.mxu0 0
    %2918 = vmatmul.mubr.bf16.gmra.mrb[0].mxu0 %v2813
    %v2919 = vpop.f32.mrb[0].mxu0
    %v2920 = vadd.f32 %v2550, %v2919
    %v2921 = vpop.f32.mrb[0].mxu0
    %v2922 = vpop.f32.mrb[0].mxu0
    %v2923 = vadd.f32 %v2553, %v2922
    %v2924 = vpop.f32.mrb[0].mxu0
    %2925 = vmatprep.mubr.bf16.mxu0 0
    %2926 = vmatmul.mubr.bf16.gmra.mrb[0].mxu0 %v2814
    %v2927 = vpop.f32.mrb[0].mxu0
    %v2928 = vadd.f32 %v2558, %v2927
    %v2929 = vpop.f32.mrb[0].mxu0
    %v2930 = vpop.f32.mrb[0].mxu0
    %v2931 = vadd.f32 %v2561, %v2930
    %v2932 = vpop.f32.mrb[0].mxu0
    %2933 = vmatprep.mubr.bf16.mxu0 0
    %2934 = vmatmul.mubr.bf16.gmra.mrb[0].mxu0 %v2815
    %v2935 = vpop.f32.mrb[0].mxu0
    %v2936 = vadd.f32 %v2566, %v2935
    %v2937 = vpop.f32.mrb[0].mxu0
    %v2938 = vpop.f32.mrb[0].mxu0
    %v2939 = vadd.f32 %v2569, %v2938
    %v2940 = vpop.f32.mrb[0].mxu0
    %2941 = vmatprep.mubr.bf16.mxu0 0
    %2942 = vmatmul.mubr.bf16.gmra.mrb[0].mxu0 %v2816
    %v2943 = vpop.f32.mrb[0].mxu0
    %v2944 = vadd.f32 %v2574, %v2943
    %v2945 = vpop.f32.mrb[0].mxu0
    %v2946 = vpop.f32.mrb[0].mxu0
    %v2947 = vadd.f32 %v2577, %v2946
    %v2948 = vpop.f32.mrb[0].mxu0
    %2949 = vmatprep.mubr.bf16.mxu0 0
    %2950 = vmatmul.mubr.bf16.gmra.mrb[0].mxu0 %v2817
    %v2951 = vpop.f32.mrb[0].mxu0
    %v2952 = vadd.f32 %v2582, %v2951
    %v2953 = vpop.f32.mrb[0].mxu0
    %v2954 = vpop.f32.mrb[0].mxu0
    %v2955 = vadd.f32 %v2585, %v2954
    %v2956 = vpop.f32.mrb[0].mxu0
    %2957 = vmatprep.mubr.bf16.mxu0 0
    %2958 = vmatmul.mubr.bf16.gmra.mrb[0].mxu0 %v2818
    %v2959 = vpop.f32.mrb[0].mxu0
    %v2960 = vadd.f32 %v2590, %v2959
    %v2961 = vpop.f32.mrb[0].mxu0
    %v2962 = vpop.f32.mrb[0].mxu0
    %v2963 = vadd.f32 %v2593, %v2962
    %v2964 = vpop.f32.mrb[0].mxu0
    %2965 = vmatprep.mubr.bf16.mxu0 0
    %2966 = vmatmul.mubr.bf16.gmra.mrb[0].mxu0 %v2819
    %v2967 = vpop.f32.mrb[0].mxu0
    %v2968 = vadd.f32 %v2598, %v2967
    %v2969 = vpop.f32.mrb[0].mxu0
    %v2970 = vpop.f32.mrb[0].mxu0
    %v2971 = vadd.f32 %v2601, %v2970
    %v2972 = vpop.f32.mrb[0].mxu0
    %2973 = vmatprep.mubr.bf16.mxu0 0
    %2974 = vmatmul.mubr.bf16.gmra.mrb[0].mxu0 %v2820
    %v2975 = vpop.f32.mrb[0].mxu0
    %v2976 = vadd.f32 %v2606, %v2975
    %v2977 = vpop.f32.mrb[0].mxu0
    %v2978 = vpop.f32.mrb[0].mxu0
    %v2979 = vadd.f32 %v2609, %v2978
    %v2980 = vpop.f32.mrb[0].mxu0
    %2981 = vdwg.mxu0
    %v2982 = vpack.c.bf16 %v2923, %v2920
    %v2983 = vpack.c.bf16 %v2931, %v2928
    %v2984 = vpack.c.bf16 %v2939, %v2936
    %v2985 = vpack.c.bf16 %v2947, %v2944
    %v2986 = vpack.c.bf16 %v2955, %v2952
    %v2987 = vpack.c.bf16 %v2963, %v2960
    %v2988 = vpack.c.bf16 %v2971, %v2968
    %v2989 = vpack.c.bf16 %v2979, %v2976
    %v2998 = vunpack.c.l.b16 %v2982
    %v2999 = vunpack.c.h.b16 %v2982
    %v3000 = vunpack.c.l.b16 %v2983
    %v3001 = vunpack.c.h.b16 %v2983
    %v3002 = vunpack.c.l.b16 %v2984
    %v3003 = vunpack.c.h.b16 %v2984
    %v3004 = vunpack.c.l.b16 %v2985
    %v3005 = vunpack.c.h.b16 %v2985
    %v3006 = vunpack.c.l.b16 %v2986
    %v3007 = vunpack.c.h.b16 %v2986
    %v3008 = vunpack.c.l.b16 %v2987
    %v3009 = vunpack.c.h.b16 %v2987
    %v3010 = vunpack.c.l.b16 %v2988
    %v3011 = vunpack.c.h.b16 %v2988
    %v3012 = vunpack.c.l.b16 %v2989
    %v3013 = vunpack.c.h.b16 %v2989
    %v3014 = vpack.c.b16 %v2998, %v2998
    %v3015 = vpack.c.b16 %v2999, %v2999
    %v3016 = vpack.c.b16 %v3000, %v3000
    %v3017 = vpack.c.b16 %v3001, %v3001
    %v3018 = vpack.c.b16 %v3002, %v3002
    %v3019 = vpack.c.b16 %v3003, %v3003
    %v3020 = vpack.c.b16 %v3004, %v3004
    %v3021 = vpack.c.b16 %v3005, %v3005
    %v3022 = vpack.c.b16 %v3006, %v3006
    %v3023 = vpack.c.b16 %v3007, %v3007
    %v3024 = vpack.c.b16 %v3008, %v3008
    %v3025 = vpack.c.b16 %v3009, %v3009
    %v3026 = vpack.c.b16 %v3010, %v3010
    %v3027 = vpack.c.b16 %v3011, %v3011
    %v3028 = vpack.c.b16 %v3012, %v3012
    %v3029 = vpack.c.b16 %v3013, %v3013
    %s3046 = scalar_lea.vmem [#allocation2], 192
    %3047 = vst [vmem:[%s3046] sm:$0xf] %v3014
    %3048 = vst [vmem:[%s3046 + $0x4] sm:$0xf] %v3015
    %3049 = vst [vmem:[%s3046 + $0x8] sm:$0xf] %v3016
    %3050 = vst [vmem:[%s3046 + $0xc] sm:$0xf] %v3017
    %3051 = vst [vmem:[%s3046 + $0x10] sm:$0xf] %v3018
    %3052 = vst [vmem:[%s3046 + $0x14] sm:$0xf] %v3019
    %3053 = vst [vmem:[%s3046 + $0x18] sm:$0xf] %v3020
    %3054 = vst [vmem:[%s3046 + $0x1c] sm:$0xf] %v3021
    %3055 = vst [vmem:[%s3046 + $0x20] sm:$0xf] %v3022
    %3056 = vst [vmem:[%s3046 + $0x24] sm:$0xf] %v3023
    %3057 = vst [vmem:[%s3046 + $0x28] sm:$0xf] %v3024
    %3058 = vst [vmem:[%s3046 + $0x2c] sm:$0xf] %v3025
    %3059 = vst [vmem:[%s3046 + $0x30] sm:$0xf] %v3026
    %3060 = vst [vmem:[%s3046 + $0x34] sm:$0xf] %v3027
    %3061 = vst [vmem:[%s3046 + $0x38] sm:$0xf] %v3028
    %3062 = vst [vmem:[%s3046 + $0x3c] sm:$0xf] %v3029
    // Predicated region
    $region18: #{tpu_custom_call.1} parent=1 // pred_check
      _
    $region19: #{tpu_custom_call.1} parent=1 // pred_check_branch
      %3064 = sbr.rel (0) target = $region21
    $region20: #{tpu_custom_call.1} parent=1 // pred_region
      %s3066 = ssub.s32 4096, 4096
      %3067 = vsyncadd [#allocation3], %s3066
      %s3068 = sshll.u32 [#allocation2], 4
      %s3069 = int_to_ptr.vmem [resolvable:$true] %s3068
      %3074 = dma.vmem_to_hbm [thread:$0]  %s3069, 4096, %s4, [#allocation3], 64, 64, 4
    $region21: #{tpu_custom_call.1} parent=1 // pred_fallthru
      _
    // Predicated region
    $region22: #{tpu_custom_call.1} parent=1 // pred_check
      _
    $region23: #{tpu_custom_call.1} parent=1 // pred_check_branch
      %3076 = sbr.rel (0) target = $region25
    $region24: #{tpu_custom_call.1} parent=1 // pred_region
      %3077 = dma.done [#allocation3], 4096
    $region25: #{tpu_custom_call.1} parent=1 // pred_fallthru
      _
    %3078 = vsyncpa [#allocation3], 1

// kernel: tpu_custom_call.1
$region0: #{tpu_custom_call.1}
  #allocation0 [shape = 'u32[]', space=smem, size = 0x4, offset = 0x4, fixed_abs, tag = 'smem constant byte address 0x4 - core index']
  #allocation1 [shape = 'u32[144,128]{1,0:T(1,128)}', space=vmem, size = 0x12000, scoped, tag = 'internal scratch']
  %s0 = inlined_call_operand.vmem [shape: bf16[512,8], index: 0, kind: input, shape index: {}]
  %s1 = inlined_call_operand.vmem [shape: bf16[8,384], index: 1, kind: input, shape index: {}]
  %s2 = inlined_call_operand.vmem [shape: bf16[128,128], index: 2, kind: input, shape index: {}]
  %s3 = inlined_call_operand.vmem [shape: bf16[128,128], index: 3, kind: input, shape index: {}]
  %s4 = inlined_call_operand.hbm [shape: bf16[512,128], index: 4, kind: output, shape index: {}]
  %s5 = sld [smem:[#allocation0]]
  $region26: #{tpu_custom_call.1} parent=0
    _
  %s7 = ssub.s32 1, %s5
  %s8 = scalar_select 0, %s7, %s5
  $region1: #{tpu_custom_call.1} parent=0
    #allocation2 [shape = 'u8[131072]{0}', space=vmem, size = 0x20000, scoped, tag = 'output window, operand 0, single buffered']
    #allocation3 [shape = 's32[1]{0}', space=sflag, size = 0x4, scoped, tag = 'scoped memory for tpu_custom_call.1']
    %9 = vsyncpa [#allocation3], 0
    // Predicated region
    $region2: #{tpu_custom_call.1} parent=1 // pred_check
      _
    $region3: #{tpu_custom_call.1} parent=1 // pred_check_branch
      %11 = sbr.rel (0) target = $region5
    $region4: #{tpu_custom_call.1} parent=1 // pred_region
      _
    $region5: #{tpu_custom_call.1} parent=1 // pred_fallthru
      _
    // Predicated region
    $region6: #{tpu_custom_call.1} parent=1 // pred_check
      _
    $region7: #{tpu_custom_call.1} parent=1 // pred_check_branch
      %13 = sbr.rel (0) target = $region9
    $region8: #{tpu_custom_call.1} parent=1 // pred_region
      _
    $region9: #{tpu_custom_call.1} parent=1 // pred_fallthru
      _
    // Predicated region
    $region10: #{tpu_custom_call.1} parent=1 // pred_check
      _
    $region11: #{tpu_custom_call.1} parent=1 // pred_check_branch
      %15 = sbr.rel (0) target = $region13
    $region12: #{tpu_custom_call.1} parent=1 // pred_region
      _
    $region13: #{tpu_custom_call.1} parent=1 // pred_fallthru
      _
    // Predicated region
    $region14: #{tpu_custom_call.1} parent=1 // pred_check
      _
    $region15: #{tpu_custom_call.1} parent=1 // pred_check_branch
      %17 = sbr.rel (0) target = $region17
    $region16: #{tpu_custom_call.1} parent=1 // pred_region
      _
    $region17: #{tpu_custom_call.1} parent=1 // pred_fallthru
      _
    %v19 = vld [vmem:[%s0] sm:$0xf]
    %v20 = vld [vmem:[%s0 + $0x4] sm:$0xf]
    %v21 = vld [vmem:[%s0 + $0x8] sm:$0xf]
    %v22 = vld [vmem:[%s0 + $0xc] sm:$0xf]
    %v23 = vld [vmem:[%s0 + $0x10] sm:$0xf]
    %v24 = vld [vmem:[%s0 + $0x14] sm:$0xf]
    %v25 = vld [vmem:[%s0 + $0x18] sm:$0xf]
    %v26 = vld [vmem:[%s0 + $0x1c] sm:$0xf]
    %v27 = vld [vmem:[%s0 + $0x20] sm:$0xf]
    %v28 = vld [vmem:[%s0 + $0x24] sm:$0xf]
    %v29 = vld [vmem:[%s0 + $0x28] sm:$0xf]
    %v30 = vld [vmem:[%s0 + $0x2c] sm:$0xf]
    %v31 = vld [vmem:[%s0 + $0x30] sm:$0xf]
    %v32 = vld [vmem:[%s0 + $0x34] sm:$0xf]
    %v33 = vld [vmem:[%s0 + $0x38] sm:$0xf]
    %v34 = vld [vmem:[%s0 + $0x3c] sm:$0xf]
    %v35 = vld [vmem:[%s1] sm:$0xff]
    %v36 = vld [vmem:[%s1 + $0x8] sm:$0xf]
    %v53 = vunpack.c.l.b16 %v19
    %v54 = vunpack.c.l.b16 %v20
    %v55 = vunpack.c.l.b16 %v21
    %v56 = vunpack.c.l.b16 %v22
    %v57 = vunpack.c.l.b16 %v23
    %v58 = vunpack.c.l.b16 %v24
    %v59 = vunpack.c.l.b16 %v25
    %v60 = vunpack.c.l.b16 %v26
    %v61 = vunpack.c.l.b16 %v27
    %v62 = vunpack.c.l.b16 %v28
    %v63 = vunpack.c.l.b16 %v29
    %v64 = vunpack.c.l.b16 %v30
    %v65 = vunpack.c.l.b16 %v31
    %v66 = vunpack.c.l.b16 %v32
    %v67 = vunpack.c.l.b16 %v33
    %v68 = vunpack.c.l.b16 %v34
    %v69 = vpack.c.b16 %v54, %v53
    %v70 = vpack.c.b16 %v56, %v55
    %v71 = vpack.c.b16 %v58, %v57
    %v72 = vpack.c.b16 %v60, %v59
    %v73 = vpack.c.b16 %v62, %v61
    %v74 = vpack.c.b16 %v64, %v63
    %v75 = vpack.c.b16 %v66, %v65
    %v76 = vpack.c.b16 %v68, %v67
    %v79 = vunpack.c.l.b16 %v35
    %v80 = vunpack.c.h.b16 %v35
    %v81 = vunpack.c.l.b16 %v36
    %v82 = vpack.c.b16 %v79, %v79
    %v83 = vpack.c.b16 %v80, %v80
    %v84 = vpack.c.b16 %v81, %v81
    %vm85 = vcmask 64512
    %v87 = vsel %vm85, %v69, 0
    %v90 = vsel %vm85, %v70, 0
    %v93 = vsel %vm85, %v71, 0
    %v96 = vsel %vm85, %v72, 0
    %v99 = vsel %vm85, %v73, 0
    %v102 = vsel %vm85, %v74, 0
    %v105 = vsel %vm85, %v75, 0
    %v108 = vsel %vm85, %v76, 0
    %vm110 = vcmask 1043456
    %v112 = vsel %vm110, %v82, 0
    %v115 = vsel %vm110, %v83, 0
    %v118 = vsel %vm110, %v84, 0
    %120 = vmatprep.subr.bf16.mxu0 %v115
    %121 = vmatpush1.bf16.msra.mxu0 %v112
    %122 = vmatprep.subr.bf16.mxu0 0
    %123 = vmatpush1.bf16.msra.mxu0 0
    %124 = vmatprep.subr.bf16.mxu0 0
    %125 = vmatpush1.bf16.msra.mxu0 0
    %126 = vmatprep.subr.bf16.mxu0 0
    %127 = vmatpush1.bf16.msra.mxu0 0
    %128 = vmatprep.subr.bf16.mxu0 0
    %129 = vmatpush1.bf16.msra.mxu0 0
    %130 = vmatprep.subr.bf16.mxu0 0
    %131 = vmatpush1.bf16.msra.mxu0 0
    %132 = vmatprep.subr.bf16.mxu0 0
    %133 = vmatpush1.bf16.msra.mxu0 0
    %134 = vmatprep.subr.bf16.mxu0 0
    %135 = vmatpush1.bf16.msra.mxu0 0
    %136 = vmatprep.subr.bf16.mxu0 0
    %137 = vmatpush1.bf16.msra.mxu0 0
    %138 = vmatprep.subr.bf16.mxu0 0
    %139 = vmatpush1.bf16.msra.mxu0 0
    %140 = vmatprep.subr.bf16.mxu0 0
    %141 = vmatpush1.bf16.msra.mxu0 0
    %142 = vmatprep.subr.bf16.mxu0 0
    %143 = vmatpush1.bf16.msra.mxu0 0
    %144 = vmatprep.subr.bf16.mxu0 0
    %145 = vmatpush1.bf16.msra.mxu0 0
    %146 = vmatprep.subr.bf16.mxu0 0
    %147 = vmatpush1.bf16.msra.mxu0 0
    %148 = vmatprep.subr.bf16.mxu0 0
    %149 = vmatpush1.bf16.msra.mxu0 0
    %150 = vmatprep.subr.bf16.mxu0 0
    %151 = vmatpush1.bf16.msra.mxu0 0
    %152 = vmatprep.mubr.bf16.mxu0 0
    %153 = vmatmul.mubr.bf16.gmra.mrb[0].mxu0 %v87
    %v154 = vpop.f32.mrb[0].mxu0
    %v155 = vadd.f32 0.0, %v154
    %v156 = vpop.f32.mrb[0].mxu0
    %v157 = vadd.f32 0.0, %v156
    %v158 = vpop.f32.mrb[0].mxu0
    %v159 = vadd.f32 0.0, %v158
    %v160 = vpop.f32.mrb[0].mxu0
    %v161 = vadd.f32 0.0, %v160
    %162 = vmatprep.mubr.bf16.mxu0 0
    %163 = vmatmul.mubr.bf16.gmra.mrb[0].mxu0 %v90
    %v164 = vpop.f32.mrb[0].mxu0
    %v165 = vadd.f32 0.0, %v164
    %v166 = vpop.f32.mrb[0].mxu0
    %v167 = vadd.f32 0.0, %v166
    %v168 = vpop.f32.mrb[0].mxu0
    %v169 = vadd.f32 0.0, %v168
    %v170 = vpop.f32.mrb[0].mxu0
    %v171 = vadd.f32 0.0, %v170
    %172 = vmatprep.mubr.bf16.mxu0 0
    %173 = vmatmul.mubr.bf16.gmra.mrb[0].mxu0 %v93
    %v174 = vpop.f32.mrb[0].mxu0
    %v175 = vadd.f32 0.0, %v174
    %v176 = vpop.f32.mrb[0].mxu0
    %v177 = vadd.f32 0.0, %v176
    %v178 = vpop.f32.mrb[0].mxu0
    %v179 = vadd.f32 0.0, %v178
    %v180 = vpop.f32.mrb[0].mxu0
    %v181 = vadd.f32 0.0, %v180
    %182 = vmatprep.mubr.bf16.mxu0 0
    %183 = vmatmul.mubr.bf16.gmra.mrb[0].mxu0 %v96
    %v184 = vpop.f32.mrb[0].mxu0
    %v185 = vadd.f32 0.0, %v184
    %v186 = vpop.f32.mrb[0].mxu0
    %v187 = vadd.f32 0.0, %v186
    %v188 = vpop.f32.mrb[0].mxu0
    %v189 = vadd.f32 0.0, %v188
    %v190 = vpop.f32.mrb[0].mxu0
    %v191 = vadd.f32 0.0, %v190
    %192 = vmatprep.mubr.bf16.mxu0 0
    %193 = vmatmul.mubr.bf16.gmra.mrb[0].mxu0 %v99
    %v194 = vpop.f32.mrb[0].mxu0
    %v195 = vadd.f32 0.0, %v194
    %v196 = vpop.f32.mrb[0].mxu0
    %v197 = vadd.f32 0.0, %v196
    %v198 = vpop.f32.mrb[0].mxu0
    %v199 = vadd.f32 0.0, %v198
    %v200 = vpop.f32.mrb[0].mxu0
    %v201 = vadd.f32 0.0, %v200
    %202 = vmatprep.mubr.bf16.mxu0 0
    %203 = vmatmul.mubr.bf16.gmra.mrb[0].mxu0 %v102
    %v204 = vpop.f32.mrb[0].mxu0
    %v205 = vadd.f32 0.0, %v204
    %v206 = vpop.f32.mrb[0].mxu0
    %v207 = vadd.f32 0.0, %v206
    %v208 = vpop.f32.mrb[0].mxu0
    %v209 = vadd.f32 0.0, %v208
    %v210 = vpop.f32.mrb[0].mxu0
    %v211 = vadd.f32 0.0, %v210
    %212 = vmatprep.mubr.bf16.mxu0 0
    %213 = vmatmul.mubr.bf16.gmra.mrb[0].mxu0 %v105
    %v214 = vpop.f32.mrb[0].mxu0
    %v215 = vadd.f32 0.0, %v214
    %v216 = vpop.f32.mrb[0].mxu0
    %v217 = vadd.f32 0.0, %v216
    %v218 = vpop.f32.mrb[0].mxu0
    %v219 = vadd.f32 0.0, %v218
    %v220 = vpop.f32.mrb[0].mxu0
    %v221 = vadd.f32 0.0, %v220
    %222 = vmatprep.mubr.bf16.mxu0 0
    %223 = vmatmul.mubr.bf16.gmra.mrb[0].mxu0 %v108
    %v224 = vpop.f32.mrb[0].mxu0
    %v225 = vadd.f32 0.0, %v224
    %v226 = vpop.f32.mrb[0].mxu0
    %v227 = vadd.f32 0.0, %v226
    %v228 = vpop.f32.mrb[0].mxu0
    %v229 = vadd.f32 0.0, %v228
    %v230 = vpop.f32.mrb[0].mxu0
    %v231 = vadd.f32 0.0, %v230
    %232 = vdwg.mxu0
    %233 = vmatprep.subr.bf16.mxu0 0
    %234 = vmatpush1.bf16.msra.mxu0 %v118
    %235 = vmatprep.subr.bf16.mxu0 0
    %236 = vmatpush1.bf16.msra.mxu0 0
    %237 = vmatprep.subr.bf16.mxu0 0
    %238 = vmatpush1.bf16.msra.mxu0 0
    %239 = vmatprep.subr.bf16.mxu0 0
    %240 = vmatpush1.bf16.msra.mxu0 0
    %241 = vmatprep.subr.bf16.mxu0 0
    %242 = vmatpush1.bf16.msra.mxu0 0
    %243 = vmatprep.subr.bf16.mxu0 0
    %244 = vmatpush1.bf16.msra.mxu0 0
    %245 = vmatprep.subr.bf16.mxu0 0
    %246 = vmatpush1.bf16.msra.mxu0 0
    %247 = vmatprep.subr.bf16.mxu0 0
    %248 = vmatpush1.bf16.msra.mxu0 0
    %249 = vmatprep.subr.bf16.mxu0 0
    %250 = vmatpush1.bf16.msra.mxu0 0
    %251 = vmatprep.subr.bf16.mxu0 0
    %252 = vmatpush1.bf16.msra.mxu0 0
    %253 = vmatprep.subr.bf16.mxu0 0
    %254 = vmatpush1.bf16.msra.mxu0 0
    %255 = vmatprep.subr.bf16.mxu0 0
    %256 = vmatpush1.bf16.msra.mxu0 0
    %257 = vmatprep.subr.bf16.mxu0 0
    %258 = vmatpush1.bf16.msra.mxu0 0
    %259 = vmatprep.subr.bf16.mxu0 0
    %260 = vmatpush1.bf16.msra.mxu0 0
    %261 = vmatprep.subr.bf16.mxu0 0
    %262 = vmatpush1.bf16.msra.mxu0 0
    %263 = vmatprep.subr.bf16.mxu0 0
    %264 = vmatpush1.bf16.msra.mxu0 0
    %265 = vmatprep.mubr.bf16.mxu0 0
    %266 = vmatmul.mubr.bf16.gmra.mrb[0].mxu0 %v87
    %v267 = vpop.f32.mrb[0].mxu0
    %v268 = vadd.f32 0.0, %v267
    %v269 = vpop.f32.mrb[0].mxu0
    %v270 = vpop.f32.mrb[0].mxu0
    %v271 = vadd.f32 0.0, %v270
    %v272 = vpop.f32.mrb[0].mxu0
    %273 = vmatprep.mubr.bf16.mxu0 0
    %274 = vmatmul.mubr.bf16.gmra.mrb[0].mxu0 %v90
    %v275 = vpop.f32.mrb[0].mxu0
    %v276 = vadd.f32 0.0, %v275
    %v277 = vpop.f32.mrb[0].mxu0
    %v278 = vpop.f32.mrb[0].mxu0
    %v279 = vadd.f32 0.0, %v278
    %v280 = vpop.f32.mrb[0].mxu0
    %281 = vmatprep.mubr.bf16.mxu0 0
    %282 = vmatmul.mubr.bf16.gmra.mrb[0].mxu0 %v93
    %v283 = vpop.f32.mrb[0].mxu0
    %v284 = vadd.f32 0.0, %v283
    %v285 = vpop.f32.mrb[0].mxu0
    %v286 = vpop.f32.mrb[0].mxu0
    %v287 = vadd.f32 0.0, %v286
    %v288 = vpop.f32.mrb[0].mxu0
    %289 = vmatprep.mubr.bf16.mxu0 0
    %290 = vmatmul.mubr.bf16.gmra.mrb[0].mxu0 %v96
    %v291 = vpop.f32.mrb[0].mxu0
    %v292 = vadd.f32 0.0, %v291
    %v293 = vpop.f32.mrb[0].mxu0
    %v294 = vpop.f32.mrb[0].mxu0
    %v295 = vadd.f32 0.0, %v294
    %v296 = vpop.f32.mrb[0].mxu0
    %297 = vmatprep.mubr.bf16.mxu0 0
    %298 = vmatmul.mubr.bf16.gmra.mrb[0].mxu0 %v99
    %v299 = vpop.f32.mrb[0].mxu0
    %v300 = vadd.f32 0.0, %v299
    %v301 = vpop.f32.mrb[0].mxu0
    %v302 = vpop.f32.mrb[0].mxu0
    %v303 = vadd.f32 0.0, %v302
    %v304 = vpop.f32.mrb[0].mxu0
    %305 = vmatprep.mubr.bf16.mxu0 0
    %306 = vmatmul.mubr.bf16.gmra.mrb[0].mxu0 %v102
    %v307 = vpop.f32.mrb[0].mxu0
    %v308 = vadd.f32 0.0, %v307
    %v309 = vpop.f32.mrb[0].mxu0
    %v310 = vpop.f32.mrb[0].mxu0
    %v311 = vadd.f32 0.0, %v310
    %v312 = vpop.f32.mrb[0].mxu0
    %313 = vmatprep.mubr.bf16.mxu0 0
    %314 = vmatmul.mubr.bf16.gmra.mrb[0].mxu0 %v105
    %v315 = vpop.f32.mrb[0].mxu0
    %v316 = vadd.f32 0.0, %v315
    %v317 = vpop.f32.mrb[0].mxu0
    %v318 = vpop.f32.mrb[0].mxu0
    %v319 = vadd.f32 0.0, %v318
    %v320 = vpop.f32.mrb[0].mxu0
    %321 = vmatprep.mubr.bf16.mxu0 0
    %322 = vmatmul.mubr.bf16.gmra.mrb[0].mxu0 %v108
    %v323 = vpop.f32.mrb[0].mxu0
    %v324 = vadd.f32 0.0, %v323
    %v325 = vpop.f32.mrb[0].mxu0
    %v326 = vpop.f32.mrb[0].mxu0
    %v327 = vadd.f32 0.0, %v326
    %v328 = vpop.f32.mrb[0].mxu0
    %329 = vdwg.mxu0
    %v330 = vmax.f32 %v155, 0.0
    %v331 = vmax.f32 %v159, 0.0
    %v332 = vmax.f32 %v165, 0.0
    %v333 = vmax.f32 %v169, 0.0
    %v334 = vmax.f32 %v175, 0.0
    %v335 = vmax.f32 %v179, 0.0
    %v336 = vmax.f32 %v185, 0.0
    %v337 = vmax.f32 %v189, 0.0
    %v338 = vmax.f32 %v195, 0.0
    %v339 = vmax.f32 %v199, 0.0
    %v340 = vmax.f32 %v205, 0.0
    %v341 = vmax.f32 %v209, 0.0
    %v342 = vmax.f32 %v215, 0.0
    %v343 = vmax.f32 %v219, 0.0
    %v344 = vmax.f32 %v225, 0.0
    %v345 = vmax.f32 %v229, 0.0
    %v346 = vpack.c.bf16 %v331, %v330
    %v347 = vpack.c.bf16 %v333, %v332
    %v348 = vpack.c.bf16 %v335, %v334
    %v349 = vpack.c.bf16 %v337, %v336
    %v350 = vpack.c.bf16 %v339, %v338
    %v351 = vpack.c.bf16 %v341, %v340
    %v352 = vpack.c.bf16 %v343, %v342
    %v353 = vpack.c.bf16 %v345, %v344
    %v354 = vld [vmem:[%s2] sm:$0xf]
    %v355 = vld [vmem:[%s2 + $0x4] sm:$0xf]
    %v356 = vld [vmem:[%s2 + $0x8] sm:$0xf]
    %v357 = vld [vmem:[%s2 + $0xc] sm:$0xf]
    %v358 = vld [vmem:[%s2 + $0x10] sm:$0xf]
    %v359 = vld [vmem:[%s2 + $0x14] sm:$0xf]
    %v360 = vld [vmem:[%s2 + $0x18] sm:$0xf]
    %v361 = vld [vmem:[%s2 + $0x1c] sm:$0xf]
    %v362 = vld [vmem:[%s2 + $0x20] sm:$0xf]
    %v363 = vld [vmem:[%s2 + $0x24] sm:$0xf]
    %v364 = vld [vmem:[%s2 + $0x28] sm:$0xf]
    %v365 = vld [vmem:[%s2 + $0x2c] sm:$0xf]
    %v366 = vld [vmem:[%s2 + $0x30] sm:$0xf]
    %v367 = vld [vmem:[%s2 + $0x34] sm:$0xf]
    %v368 = vld [vmem:[%s2 + $0x38] sm:$0xf]
    %v369 = vld [vmem:[%s2 + $0x3c] sm:$0xf]
    %v386 = vunpack.c.l.b16 %v354
    %v387 = vunpack.c.l.b16 %v355
    %v388 = vunpack.c.l.b16 %v356
    %v389 = vunpack.c.l.b16 %v357
    %v390 = vunpack.c.l.b16 %v358
    %v391 = vunpack.c.l.b16 %v359
    %v392 = vunpack.c.l.b16 %v360
    %v393 = vunpack.c.l.b16 %v361
    %v394 = vunpack.c.l.b16 %v362
    %v395 = vunpack.c.l.b16 %v363
    %v396 = vunpack.c.l.b16 %v364
    %v397 = vunpack.c.l.b16 %v365
    %v398 = vunpack.c.l.b16 %v366
    %v399 = vunpack.c.l.b16 %v367
    %v400 = vunpack.c.l.b16 %v368
    %v401 = vunpack.c.l.b16 %v369
    %v402 = vpack.c.b16 %v387, %v386
    %v403 = vpack.c.b16 %v389, %v388
    %v404 = vpack.c.b16 %v391, %v390
    %v405 = vpack.c.b16 %v393, %v392
    %v406 = vpack.c.b16 %v395, %v394
    %v407 = vpack.c.b16 %v397, %v396
    %v408 = vpack.c.b16 %v399, %v398
    %v409 = vpack.c.b16 %v401, %v400
    %418 = vmatprep.subr.bf16.mxu0 0
    %419 = vmatpush1.bf16.msra.mxu0 %v402
    %420 = vmatprep.subr.bf16.mxu0 0
    %421 = vmatpush1.bf16.msra.mxu0 %v403
    %422 = vmatprep.subr.bf16.mxu0 0
    %423 = vmatpush1.bf16.msra.mxu0 %v404
    %424 = vmatprep.subr.bf16.mxu0 0
    %425 = vmatpush1.bf16.msra.mxu0 %v405
    %426 = vmatprep.subr.bf16.mxu0 0
    %427 = vmatpush1.bf16.msra.mxu0 %v406
    %428 = vmatprep.subr.bf16.mxu0 0
    %429 = vmatpush1.bf16.msra.mxu0 %v407
    %430 = vmatprep.subr.bf16.mxu0 0
    %431 = vmatpush1.bf16.msra.mxu0 %v408
    %432 = vmatprep.subr.bf16.mxu0 0
    %433 = vmatpush1.bf16.msra.mxu0 %v409
    %434 = vmatprep.subr.bf16.mxu0 0
    %435 = vmatpush1.bf16.msra.mxu0 0
    %436 = vmatprep.subr.bf16.mxu0 0
    %437 = vmatpush1.bf16.msra.mxu0 0
    %438 = vmatprep.subr.bf16.mxu0 0
    %439 = vmatpush1.bf16.msra.mxu0 0
    %440 = vmatprep.subr.bf16.mxu0 0
    %441 = vmatpush1.bf16.msra.mxu0 0
    %442 = vmatprep.subr.bf16.mxu0 0
    %443 = vmatpush1.bf16.msra.mxu0 0
    %444 = vmatprep.subr.bf16.mxu0 0
    %445 = vmatpush1.bf16.msra.mxu0 0
    %446 = vmatprep.subr.bf16.mxu0 0
    %447 = vmatpush1.bf16.msra.mxu0 0
    %448 = vmatprep.subr.bf16.mxu0 0
    %449 = vmatpush1.bf16.msra.mxu0 0
    %450 = vmatprep.mubr.bf16.mxu0 0
    %451 = vmatmul.mubr.bf16.gmra.mrb[0].mxu0 %v346
    %v452 = vpop.f32.mrb[0].mxu0
    %v453 = vadd.f32 %v157, %v452
    %v454 = vpop.f32.mrb[0].mxu0
    %v455 = vpop.f32.mrb[0].mxu0
    %v456 = vadd.f32 %v161, %v455
    %v457 = vpop.f32.mrb[0].mxu0
    %458 = vmatprep.mubr.bf16.mxu0 0
    %459 = vmatmul.mubr.bf16.gmra.mrb[0].mxu0 %v347
    %v460 = vpop.f32.mrb[0].mxu0
    %v461 = vadd.f32 %v167, %v460
    %v462 = vpop.f32.mrb[0].mxu0
    %v463 = vpop.f32.mrb[0].mxu0
    %v464 = vadd.f32 %v171, %v463
    %v465 = vpop.f32.mrb[0].mxu0
    %466 = vmatprep.mubr.bf16.mxu0 0
    %467 = vmatmul.mubr.bf16.gmra.mrb[0].mxu0 %v348
    %v468 = vpop.f32.mrb[0].mxu0
    %v469 = vadd.f32 %v177, %v468
    %v470 = vpop.f32.mrb[0].mxu0
    %v471 = vpop.f32.mrb[0].mxu0
    %v472 = vadd.f32 %v181, %v471
    %v473 = vpop.f32.mrb[0].mxu0
    %474 = vmatprep.mubr.bf16.mxu0 0
    %475 = vmatmul.mubr.bf16.gmra.mrb[0].mxu0 %v349
    %v476 = vpop.f32.mrb[0].mxu0
    %v477 = vadd.f32 %v187, %v476
    %v478 = vpop.f32.mrb[0].mxu0
    %v479 = vpop.f32.mrb[0].mxu0
    %v480 = vadd.f32 %v191, %v479
    %v481 = vpop.f32.mrb[0].mxu0
    %482 = vmatprep.mubr.bf16.mxu0 0
    %483 = vmatmul.mubr.bf16.gmra.mrb[0].mxu0 %v350
    %v484 = vpop.f32.mrb[0].mxu0
    %v485 = vadd.f32 %v197, %v484
    %v486 = vpop.f32.mrb[0].mxu0
    %v487 = vpop.f32.mrb[0].mxu0
    %v488 = vadd.f32 %v201, %v487
    %v489 = vpop.f32.mrb[0].mxu0
    %490 = vmatprep.mubr.bf16.mxu0 0
    %491 = vmatmul.mubr.bf16.gmra.mrb[0].mxu0 %v351
    %v492 = vpop.f32.mrb[0].mxu0
    %v493 = vadd.f32 %v207, %v492
    %v494 = vpop.f32.mrb[0].mxu0
    %v495 = vpop.f32.mrb[0].mxu0
    %v496 = vadd.f32 %v211, %v495
    %v497 = vpop.f32.mrb[0].mxu0
    %498 = vmatprep.mubr.bf16.mxu0 0
    %499 = vmatmul.mubr.bf16.gmra.mrb[0].mxu0 %v352
    %v500 = vpop.f32.mrb[0].mxu0
    %v501 = vadd.f32 %v217, %v500
    %v502 = vpop.f32.mrb[0].mxu0
    %v503 = vpop.f32.mrb[0].mxu0
    %v504 = vadd.f32 %v221, %v503
    %v505 = vpop.f32.mrb[0].mxu0
    %506 = vmatprep.mubr.bf16.mxu0 0
    %507 = vmatmul.mubr.bf16.gmra.mrb[0].mxu0 %v353
    %v508 = vpop.f32.mrb[0].mxu0
    %v509 = vadd.f32 %v227, %v508
    %v510 = vpop.f32.mrb[0].mxu0
    %v511 = vpop.f32.mrb[0].mxu0
    %v512 = vadd.f32 %v231, %v511
    %v513 = vpop.f32.mrb[0].mxu0
    %514 = vdwg.mxu0
    %v515 = vmax.f32 %v453, 0.0
    %v516 = vmax.f32 %v456, 0.0
    %v517 = vmax.f32 %v461, 0.0
    %v518 = vmax.f32 %v464, 0.0
    %v519 = vmax.f32 %v469, 0.0
    %v520 = vmax.f32 %v472, 0.0
    %v521 = vmax.f32 %v477, 0.0
    %v522 = vmax.f32 %v480, 0.0
    %v523 = vmax.f32 %v485, 0.0
    %v524 = vmax.f32 %v488, 0.0
    %v525 = vmax.f32 %v493, 0.0
    %v526 = vmax.f32 %v496, 0.0
    %v527 = vmax.f32 %v501, 0.0
    %v528 = vmax.f32 %v504, 0.0
    %v529 = vmax.f32 %v509, 0.0
    %v530 = vmax.f32 %v512, 0.0
    %v531 = vpack.c.bf16 %v516, %v515
    %v532 = vpack.c.bf16 %v518, %v517
    %v533 = vpack.c.bf16 %v520, %v519
    %v534 = vpack.c.bf16 %v522, %v521
    %v535 = vpack.c.bf16 %v524, %v523
    %v536 = vpack.c.bf16 %v526, %v525
    %v537 = vpack.c.bf16 %v528, %v527
    %v538 = vpack.c.bf16 %v530, %v529
    %v539 = vld [vmem:[%s3] sm:$0xf]
    %v540 = vld [vmem:[%s3 + $0x4] sm:$0xf]
    %v541 = vld [vmem:[%s3 + $0x8] sm:$0xf]
    %v542 = vld [vmem:[%s3 + $0xc] sm:$0xf]
    %v543 = vld [vmem:[%s3 + $0x10] sm:$0xf]
    %v544 = vld [vmem:[%s3 + $0x14] sm:$0xf]
    %v545 = vld [vmem:[%s3 + $0x18] sm:$0xf]
    %v546 = vld [vmem:[%s3 + $0x1c] sm:$0xf]
    %v547 = vld [vmem:[%s3 + $0x20] sm:$0xf]
    %v548 = vld [vmem:[%s3 + $0x24] sm:$0xf]
    %v549 = vld [vmem:[%s3 + $0x28] sm:$0xf]
    %v550 = vld [vmem:[%s3 + $0x2c] sm:$0xf]
    %v551 = vld [vmem:[%s3 + $0x30] sm:$0xf]
    %v552 = vld [vmem:[%s3 + $0x34] sm:$0xf]
    %v553 = vld [vmem:[%s3 + $0x38] sm:$0xf]
    %v554 = vld [vmem:[%s3 + $0x3c] sm:$0xf]
    %v571 = vunpack.c.l.b16 %v539
    %v572 = vunpack.c.l.b16 %v540
    %v573 = vunpack.c.l.b16 %v541
    %v574 = vunpack.c.l.b16 %v542
    %v575 = vunpack.c.l.b16 %v543
    %v576 = vunpack.c.l.b16 %v544
    %v577 = vunpack.c.l.b16 %v545
    %v578 = vunpack.c.l.b16 %v546
    %v579 = vunpack.c.l.b16 %v547
    %v580 = vunpack.c.l.b16 %v548
    %v581 = vunpack.c.l.b16 %v549
    %v582 = vunpack.c.l.b16 %v550
    %v583 = vunpack.c.l.b16 %v551
    %v584 = vunpack.c.l.b16 %v552
    %v585 = vunpack.c.l.b16 %v553
    %v586 = vunpack.c.l.b16 %v554
    %v587 = vpack.c.b16 %v572, %v571
    %v588 = vpack.c.b16 %v574, %v573
    %v589 = vpack.c.b16 %v576, %v575
    %v590 = vpack.c.b16 %v578, %v577
    %v591 = vpack.c.b16 %v580, %v579
    %v592 = vpack.c.b16 %v582, %v581
    %v593 = vpack.c.b16 %v584, %v583
    %v594 = vpack.c.b16 %v586, %v585
    %603 = vmatprep.subr.bf16.mxu0 0
    %604 = vmatpush1.bf16.msra.mxu0 %v587
    %605 = vmatprep.subr.bf16.mxu0 0
    %606 = vmatpush1.bf16.msra.mxu0 %v588
    %607 = vmatprep.subr.bf16.mxu0 0
    %608 = vmatpush1.bf16.msra.mxu0 %v589
    %609 = vmatprep.subr.bf16.mxu0 0
    %610 = vmatpush1.bf16.msra.mxu0 %v590
    %611 = vmatprep.subr.bf16.mxu0 0
    %612 = vmatpush1.bf16.msra.mxu0 %v591
    %613 = vmatprep.subr.bf16.mxu0 0
    %614 = vmatpush1.bf16.msra.mxu0 %v592
    %615 = vmatprep.subr.bf16.mxu0 0
    %616 = vmatpush1.bf16.msra.mxu0 %v593
    %617 = vmatprep.subr.bf16.mxu0 0
    %618 = vmatpush1.bf16.msra.mxu0 %v594
    %619 = vmatprep.subr.bf16.mxu0 0
    %620 = vmatpush1.bf16.msra.mxu0 0
    %621 = vmatprep.subr.bf16.mxu0 0
    %622 = vmatpush1.bf16.msra.mxu0 0
    %623 = vmatprep.subr.bf16.mxu0 0
    %624 = vmatpush1.bf16.msra.mxu0 0
    %625 = vmatprep.subr.bf16.mxu0 0
    %626 = vmatpush1.bf16.msra.mxu0 0
    %627 = vmatprep.subr.bf16.mxu0 0
    %628 = vmatpush1.bf16.msra.mxu0 0
    %629 = vmatprep.subr.bf16.mxu0 0
    %630 = vmatpush1.bf16.msra.mxu0 0
    %631 = vmatprep.subr.bf16.mxu0 0
    %632 = vmatpush1.bf16.msra.mxu0 0
    %633 = vmatprep.subr.bf16.mxu0 0
    %634 = vmatpush1.bf16.msra.mxu0 0
    %635 = vmatprep.mubr.bf16.mxu0 0
    %636 = vmatmul.mubr.bf16.gmra.mrb[0].mxu0 %v531
    %v637 = vpop.f32.mrb[0].mxu0
    %v638 = vadd.f32 %v268, %v637
    %v639 = vpop.f32.mrb[0].mxu0
    %v640 = vpop.f32.mrb[0].mxu0
    %v641 = vadd.f32 %v271, %v640
    %v642 = vpop.f32.mrb[0].mxu0
    %643 = vmatprep.mubr.bf16.mxu0 0
    %644 = vmatmul.mubr.bf16.gmra.mrb[0].mxu0 %v532
    %v645 = vpop.f32.mrb[0].mxu0
    %v646 = vadd.f32 %v276, %v645
    %v647 = vpop.f32.mrb[0].mxu0
    %v648 = vpop.f32.mrb[0].mxu0
    %v649 = vadd.f32 %v279, %v648
    %v650 = vpop.f32.mrb[0].mxu0
    %651 = vmatprep.mubr.bf16.mxu0 0
    %652 = vmatmul.mubr.bf16.gmra.mrb[0].mxu0 %v533
    %v653 = vpop.f32.mrb[0].mxu0
    %v654 = vadd.f32 %v284, %v653
    %v655 = vpop.f32.mrb[0].mxu0
    %v656 = vpop.f32.mrb[0].mxu0
    %v657 = vadd.f32 %v287, %v656
    %v658 = vpop.f32.mrb[0].mxu0
    %659 = vmatprep.mubr.bf16.mxu0 0
    %660 = vmatmul.mubr.bf16.gmra.mrb[0].mxu0 %v534
    %v661 = vpop.f32.mrb[0].mxu0
    %v662 = vadd.f32 %v292, %v661
    %v663 = vpop.f32.mrb[0].mxu0
    %v664 = vpop.f32.mrb[0].mxu0
    %v665 = vadd.f32 %v295, %v664
    %v666 = vpop.f32.mrb[0].mxu0
    %667 = vmatprep.mubr.bf16.mxu0 0
    %668 = vmatmul.mubr.bf16.gmra.mrb[0].mxu0 %v535
    %v669 = vpop.f32.mrb[0].mxu0
    %v670 = vadd.f32 %v300, %v669
    %v671 = vpop.f32.mrb[0].mxu0
    %v672 = vpop.f32.mrb[0].mxu0
    %v673 = vadd.f32 %v303, %v672
    %v674 = vpop.f32.mrb[0].mxu0
    %675 = vmatprep.mubr.bf16.mxu0 0
    %676 = vmatmul.mubr.bf16.gmra.mrb[0].mxu0 %v536
    %v677 = vpop.f32.mrb[0].mxu0
    %v678 = vadd.f32 %v308, %v677
    %v679 = vpop.f32.mrb[0].mxu0
    %v680 = vpop.f32.mrb[0].mxu0
    %v681 = vadd.f32 %v311, %v680
    %v682 = vpop.f32.mrb[0].mxu0
    %683 = vmatprep.mubr.bf16.mxu0 0
    %684 = vmatmul.mubr.bf16.gmra.mrb[0].mxu0 %v537
    %v685 = vpop.f32.mrb[0].mxu0
    %v686 = vadd.f32 %v316, %v685
    %v687 = vpop.f32.mrb[0].mxu0
    %v688 = vpop.f32.mrb[0].mxu0
    %v689 = vadd.f32 %v319, %v688
    %v690 = vpop.f32.mrb[0].mxu0
    %691 = vmatprep.mubr.bf16.mxu0 0
    %692 = vmatmul.mubr.bf16.gmra.mrb[0].mxu0 %v538
    %v693 = vpop.f32.mrb[0].mxu0
    %v694 = vadd.f32 %v324, %v693
    %v695 = vpop.f32.mrb[0].mxu0
    %v696 = vpop.f32.mrb[0].mxu0
    %v697 = vadd.f32 %v327, %v696
    %v698 = vpop.f32.mrb[0].mxu0
    %699 = vdwg.mxu0
    %v700 = vpack.c.bf16 %v641, %v638
    %v701 = vpack.c.bf16 %v649, %v646
    %v702 = vpack.c.bf16 %v657, %v654
    %v703 = vpack.c.bf16 %v665, %v662
    %v704 = vpack.c.bf16 %v673, %v670
    %v705 = vpack.c.bf16 %v681, %v678
    %v706 = vpack.c.bf16 %v689, %v686
    %v707 = vpack.c.bf16 %v697, %v694
    %v716 = vunpack.c.l.b16 %v700
    %v717 = vunpack.c.h.b16 %v700
    %v718 = vunpack.c.l.b16 %v701
    %v719 = vunpack.c.h.b16 %v701
    %v720 = vunpack.c.l.b16 %v702
    %v721 = vunpack.c.h.b16 %v702
    %v722 = vunpack.c.l.b16 %v703
    %v723 = vunpack.c.h.b16 %v703
    %v724 = vunpack.c.l.b16 %v704
    %v725 = vunpack.c.h.b16 %v704
    %v726 = vunpack.c.l.b16 %v705
    %v727 = vunpack.c.h.b16 %v705
    %v728 = vunpack.c.l.b16 %v706
    %v729 = vunpack.c.h.b16 %v706
    %v730 = vunpack.c.l.b16 %v707
    %v731 = vunpack.c.h.b16 %v707
    %v732 = vpack.c.b16 %v716, %v716
    %v733 = vpack.c.b16 %v717, %v717
    %v734 = vpack.c.b16 %v718, %v718
    %v735 = vpack.c.b16 %v719, %v719
    %v736 = vpack.c.b16 %v720, %v720
    %v737 = vpack.c.b16 %v721, %v721
    %v738 = vpack.c.b16 %v722, %v722
    %v739 = vpack.c.b16 %v723, %v723
    %v740 = vpack.c.b16 %v724, %v724
    %v741 = vpack.c.b16 %v725, %v725
    %v742 = vpack.c.b16 %v726, %v726
    %v743 = vpack.c.b16 %v727, %v727
    %v744 = vpack.c.b16 %v728, %v728
    %v745 = vpack.c.b16 %v729, %v729
    %v746 = vpack.c.b16 %v730, %v730
    %v747 = vpack.c.b16 %v731, %v731
    %764 = vst [vmem:[#allocation2] sm:$0xf] %v732
    %765 = vst [vmem:[#allocation2 + $0x4] sm:$0xf] %v733
    %766 = vst [vmem:[#allocation2 + $0x8] sm:$0xf] %v734
    %767 = vst [vmem:[#allocation2 + $0xc] sm:$0xf] %v735
    %768 = vst [vmem:[#allocation2 + $0x10] sm:$0xf] %v736
    %769 = vst [vmem:[#allocation2 + $0x14] sm:$0xf] %v737
    %770 = vst [vmem:[#allocation2 + $0x18] sm:$0xf] %v738
    %771 = vst [vmem:[#allocation2 + $0x1c] sm:$0xf] %v739
    %772 = vst [vmem:[#allocation2 + $0x20] sm:$0xf] %v740
    %773 = vst [vmem:[#allocation2 + $0x24] sm:$0xf] %v741
    %774 = vst [vmem:[#allocation2 + $0x28] sm:$0xf] %v742
    %775 = vst [vmem:[#allocation2 + $0x2c] sm:$0xf] %v743
    %776 = vst [vmem:[#allocation2 + $0x30] sm:$0xf] %v744
    %777 = vst [vmem:[#allocation2 + $0x34] sm:$0xf] %v745
    %778 = vst [vmem:[#allocation2 + $0x38] sm:$0xf] %v746
    %779 = vst [vmem:[#allocation2 + $0x3c] sm:$0xf] %v747
    %s780 = scalar_lea.vmem %s0, 64
    %v781 = vld [vmem:[%s780] sm:$0xf]
    %v782 = vld [vmem:[%s780 + $0x4] sm:$0xf]
    %v783 = vld [vmem:[%s780 + $0x8] sm:$0xf]
    %v784 = vld [vmem:[%s780 + $0xc] sm:$0xf]
    %v785 = vld [vmem:[%s780 + $0x10] sm:$0xf]
    %v786 = vld [vmem:[%s780 + $0x14] sm:$0xf]
    %v787 = vld [vmem:[%s780 + $0x18] sm:$0xf]
    %v788 = vld [vmem:[%s780 + $0x1c] sm:$0xf]
    %v789 = vld [vmem:[%s780 + $0x20] sm:$0xf]
    %v790 = vld [vmem:[%s780 + $0x24] sm:$0xf]
    %v791 = vld [vmem:[%s780 + $0x28] sm:$0xf]
    %v792 = vld [vmem:[%s780 + $0x2c] sm:$0xf]
    %v793 = vld [vmem:[%s780 + $0x30] sm:$0xf]
    %v794 = vld [vmem:[%s780 + $0x34] sm:$0xf]
    %v795 = vld [vmem:[%s780 + $0x38] sm:$0xf]
    %v796 = vld [vmem:[%s780 + $0x3c] sm:$0xf]
    %v797 = vld [vmem:[%s1] sm:$0xff]
    %v798 = vld [vmem:[%s1 + $0x8] sm:$0xf]
    %v815 = vunpack.c.l.b16 %v781
    %v816 = vunpack.c.l.b16 %v782
    %v817 = vunpack.c.l.b16 %v783
    %v818 = vunpack.c.l.b16 %v784
    %v819 = vunpack.c.l.b16 %v785
    %v820 = vunpack.c.l.b16 %v786
    %v821 = vunpack.c.l.b16 %v787
    %v822 = vunpack.c.l.b16 %v788
    %v823 = vunpack.c.l.b16 %v789
    %v824 = vunpack.c.l.b16 %v790
    %v825 = vunpack.c.l.b16 %v791
    %v826 = vunpack.c.l.b16 %v792
    %v827 = vunpack.c.l.b16 %v793
    %v828 = vunpack.c.l.b16 %v794
    %v829 = vunpack.c.l.b16 %v795
    %v830 = vunpack.c.l.b16 %v796
    %v831 = vpack.c.b16 %v816, %v815
    %v832 = vpack.c.b16 %v818, %v817
    %v833 = vpack.c.b16 %v820, %v819
    %v834 = vpack.c.b16 %v822, %v821
    %v835 = vpack.c.b16 %v824, %v823
    %v836 = vpack.c.b16 %v826, %v825
    %v837 = vpack.c.b16 %v828, %v827
    %v838 = vpack.c.b16 %v830, %v829
    %v841 = vunpack.c.l.b16 %v797
    %v842 = vunpack.c.h.b16 %v797
    %v843 = vunpack.c.l.b16 %v798
    %v844 = vpack.c.b16 %v841, %v841
    %v845 = vpack.c.b16 %v842, %v842
    %v846 = vpack.c.b16 %v843, %v843
    %v848 = vsel %vm85, %v831, 0
    %v851 = vsel %vm85, %v832, 0
    %v854 = vsel %vm85, %v833, 0
    %v857 = vsel %vm85, %v834, 0
    %v860 = vsel %vm85, %v835, 0
    %v863 = vsel %vm85, %v836, 0
    %v866 = vsel %vm85, %v837, 0
    %v869 = vsel %vm85, %v838, 0
    %v872 = vsel %vm110, %v844, 0
    %v875 = vsel %vm110, %v845, 0
    %v878 = vsel %vm110, %v846, 0
    %880 = vmatprep.subr.bf16.mxu0 %v875
    %881 = vmatpush1.bf16.msra.mxu0 %v872
    %882 = vmatprep.subr.bf16.mxu0 0
    %883 = vmatpush1.bf16.msra.mxu0 0
    %884 = vmatprep.subr.bf16.mxu0 0
    %885 = vmatpush1.bf16.msra.mxu0 0
    %886 = vmatprep.subr.bf16.mxu0 0
    %887 = vmatpush1.bf16.msra.mxu0 0
    %888 = vmatprep.subr.bf16.mxu0 0
    %889 = vmatpush1.bf16.msra.mxu0 0
    %890 = vmatprep.subr.bf16.mxu0 0
    %891 = vmatpush1.bf16.msra.mxu0 0
    %892 = vmatprep.subr.bf16.mxu0 0
    %893 = vmatpush1.bf16.msra.mxu0 0
    %894 = vmatprep.subr.bf16.mxu0 0
    %895 = vmatpush1.bf16.msra.mxu0 0
    %896 = vmatprep.subr.bf16.mxu0 0
    %897 = vmatpush1.bf16.msra.mxu0 0
    %898 = vmatprep.subr.bf16.mxu0 0
    %899 = vmatpush1.bf16.msra.mxu0 0
    %900 = vmatprep.subr.bf16.mxu0 0
    %901 = vmatpush1.bf16.msra.mxu0 0
    %902 = vmatprep.subr.bf16.mxu0 0
    %903 = vmatpush1.bf16.msra.mxu0 0
    %904 = vmatprep.subr.bf16.mxu0 0
    %905 = vmatpush1.bf16.msra.mxu0 0
    %906 = vmatprep.subr.bf16.mxu0 0
    %907 = vmatpush1.bf16.msra.mxu0 0
    %908 = vmatprep.subr.bf16.mxu0 0
    %909 = vmatpush1.bf16.msra.mxu0 0
    %910 = vmatprep.subr.bf16.mxu0 0
    %911 = vmatpush1.bf16.msra.mxu0 0
    %912 = vmatprep.mubr.bf16.mxu0 0
    %913 = vmatmul.mubr.bf16.gmra.mrb[0].mxu0 %v848
    %v914 = vpop.f32.mrb[0].mxu0
    %v915 = vadd.f32 0.0, %v914
    %v916 = vpop.f32.mrb[0].mxu0
    %v917 = vadd.f32 0.0, %v916
    %v918 = vpop.f32.mrb[0].mxu0
    %v919 = vadd.f32 0.0, %v918
    %v920 = vpop.f32.mrb[0].mxu0
    %v921 = vadd.f32 0.0, %v920
    %922 = vmatprep.mubr.bf16.mxu0 0
    %923 = vmatmul.mubr.bf16.gmra.mrb[0].mxu0 %v851
    %v924 = vpop.f32.mrb[0].mxu0
    %v925 = vadd.f32 0.0, %v924
    %v926 = vpop.f32.mrb[0].mxu0
    %v927 = vadd.f32 0.0, %v926
    %v928 = vpop.f32.mrb[0].mxu0
    %v929 = vadd.f32 0.0, %v928
    %v930 = vpop.f32.mrb[0].mxu0
    %v931 = vadd.f32 0.0, %v930
    %932 = vmatprep.mubr.bf16.mxu0 0
    %933 = vmatmul.mubr.bf16.gmra.mrb[0].mxu0 %v854
    %v934 = vpop.f32.mrb[0].mxu0
    %v935 = vadd.f32 0.0, %v934
    %v936 = vpop.f32.mrb[0].mxu0
    %v937 = vadd.f32 0.0, %v936
    %v938 = vpop.f32.mrb[0].mxu0
    %v939 = vadd.f32 0.0, %v938
    %v940 = vpop.f32.mrb[0].mxu0
    %v941 = vadd.f32 0.0, %v940
    %942 = vmatprep.mubr.bf16.mxu0 0
    %943 = vmatmul.mubr.bf16.gmra.mrb[0].mxu0 %v857
    %v944 = vpop.f32.mrb[0].mxu0
    %v945 = vadd.f32 0.0, %v944
    %v946 = vpop.f32.mrb[0].mxu0
    %v947 = vadd.f32 0.0, %v946
    %v948 = vpop.f32.mrb[0].mxu0
    %v949 = vadd.f32 0.0, %v948
    %v950 = vpop.f32.mrb[0].mxu0
    %v951 = vadd.f32 0.0, %v950
    %952 = vmatprep.mubr.bf16.mxu0 0
    %953 = vmatmul.mubr.bf16.gmra.mrb[0].mxu0 %v860
    %v954 = vpop.f32.mrb[0].mxu0
    %v955 = vadd.f32 0.0, %v954
    %v956 = vpop.f32.mrb[0].mxu0
    %v957 = vadd.f32 0.0, %v956
    %v958 = vpop.f32.mrb[0].mxu0
    %v959 = vadd.f32 0.0, %v958
    %v960 = vpop.f32.mrb[0].mxu0
    %v961 = vadd.f32 0.0, %v960
    %962 = vmatprep.mubr.bf16.mxu0 0
    %963 = vmatmul.mubr.bf16.gmra.mrb[0].mxu0 %v863
    %v964 = vpop.f32.mrb[0].mxu0
    %v965 = vadd.f32 0.0, %v964
    %v966 = vpop.f32.mrb[0].mxu0
    %v967 = vadd.f32 0.0, %v966
    %v968 = vpop.f32.mrb[0].mxu0
    %v969 = vadd.f32 0.0, %v968
    %v970 = vpop.f32.mrb[0].mxu0
    %v971 = vadd.f32 0.0, %v970
    %972 = vmatprep.mubr.bf16.mxu0 0
    %973 = vmatmul.mubr.bf16.gmra.mrb[0].mxu0 %v866
    %v974 = vpop.f32.mrb[0].mxu0
    %v975 = vadd.f32 0.0, %v974
    %v976 = vpop.f32.mrb[0].mxu0
    %v977 = vadd.f32 0.0, %v976
    %v978 = vpop.f32.mrb[0].mxu0
    %v979 = vadd.f32 0.0, %v978
    %v980 = vpop.f32.mrb[0].mxu0
    %v981 = vadd.f32 0.0, %v980
    %982 = vmatprep.mubr.bf16.mxu0 0
    %983 = vmatmul.mubr.bf16.gmra.mrb[0].mxu0 %v869
    %v984 = vpop.f32.mrb[0].mxu0
    %v985 = vadd.f32 0.0, %v984
    %v986 = vpop.f32.mrb[0].mxu0
    %v987 = vadd.f32 0.0, %v986
    %v988 = vpop.f32.mrb[0].mxu0
    %v989 = vadd.f32 0.0, %v988
    %v990 = vpop.f32.mrb[0].mxu0
    %v991 = vadd.f32 0.0, %v990
    %992 = vdwg.mxu0
    %993 = vmatprep.subr.bf16.mxu0 0
    %994 = vmatpush1.bf16.msra.mxu0 %v878
    %995 = vmatprep.subr.bf16.mxu0 0
    %996 = vmatpush1.bf16.msra.mxu0 0
    %997 = vmatprep.subr.bf16.mxu0 0
    %998 = vmatpush1.bf16.msra.mxu0 0
    %999 = vmatprep.subr.bf16.mxu0 0
    %1000 = vmatpush1.bf16.msra.mxu0 0
    %1001 = vmatprep.subr.bf16.mxu0 0
    %1002 = vmatpush1.bf16.msra.mxu0 0
    %1003 = vmatprep.subr.bf16.mxu0 0
    %1004 = vmatpush1.bf16.msra.mxu0 0
    %1005 = vmatprep.subr.bf16.mxu0 0
    %1006 = vmatpush1.bf16.msra.mxu0 0
    %1007 = vmatprep.subr.bf16.mxu0 0
    %1008 = vmatpush1.bf16.msra.mxu0 0
    %1009 = vmatprep.subr.bf16.mxu0 0
    %1010 = vmatpush1.bf16.msra.mxu0 0
    %1011 = vmatprep.subr.bf16.mxu0 0
    %1012 = vmatpush1.bf16.msra.mxu0 0
    %1013 = vmatprep.subr.bf16.mxu0 0
    %1014 = vmatpush1.bf16.msra.mxu0 0
    %1015 = vmatprep.subr.bf16.mxu0 0
    %1016 = vmatpush1.bf16.msra.mxu0 0
    %1017 = vmatprep.subr.bf16.mxu0 0
    %1018 = vmatpush1.bf16.msra.mxu0 0
    %1019 = vmatprep.subr.bf16.mxu0 0
    %1020 = vmatpush1.bf16.msra.mxu0 0
    %1021 = vmatprep.subr.bf16.mxu0 0
    %1022 = vmatpush1.bf16.msra.mxu0 0
    %1023 = vmatprep.subr.bf16.mxu0 0
    %1024 = vmatpush1.bf16.msra.mxu0 0
    %1025 = vmatprep.mubr.bf16.mxu0 0
    %1026 = vmatmul.mubr.bf16.gmra.mrb[0].mxu0 %v848
    %v1027 = vpop.f32.mrb[0].mxu0
    %v1028 = vadd.f32 0.0, %v1027
    %v1029 = vpop.f32.mrb[0].mxu0
    %v1030 = vpop.f32.mrb[0].mxu0
    %v1031 = vadd.f32 0.0, %v1030
    %v1032 = vpop.f32.mrb[0].mxu0
    %1033 = vmatprep.mubr.bf16.mxu0 0
    %1034 = vmatmul.mubr.bf16.gmra.mrb[0].mxu0 %v851
    %v1035 = vpop.f32.mrb[0].mxu0
    %v1036 = vadd.f32 0.0, %v1035
    %v1037 = vpop.f32.mrb[0].mxu0
    %v1038 = vpop.f32.mrb[0].mxu0
    %v1039 = vadd.f32 0.0, %v1038
    %v1040 = vpop.f32.mrb[0].mxu0
    %1041 = vmatprep.mubr.bf16.mxu0 0
    %1042 = vmatmul.mubr.bf16.gmra.mrb[0].mxu0 %v854
    %v1043 = vpop.f32.mrb[0].mxu0
    %v1044 = vadd.f32 0.0, %v1043
    %v1045 = vpop.f32.mrb[0].mxu0
    %v1046 = vpop.f32.mrb[0].mxu0
    %v1047 = vadd.f32 0.0, %v1046
    %v1048 = vpop.f32.mrb[0].mxu0
    %1049 = vmatprep.mubr.bf16.mxu0 0
    %1050 = vmatmul.mubr.bf16.gmra.mrb[0].mxu0 %v857
    %v1051 = vpop.f32.mrb[0].mxu0
    %v1052 = vadd.f32 0.0, %v1051
    %v1053 = vpop.f32.mrb[0].mxu0
    %v1054 = vpop.f32.mrb[0].mxu0
    %v1055 = vadd.f32 0.0, %v1054
    %v1056 = vpop.f32.mrb[0].mxu0
    %1057 = vmatprep.mubr.bf16.mxu0 0
    %1058 = vmatmul.mubr.bf16.gmra.mrb[0].mxu0 %v860
    %v1059 = vpop.f32.mrb[0].mxu0
    %v1060 = vadd.f32 0.0, %v1059
    %v1061 = vpop.f32.mrb[0].mxu0
    %v1062 = vpop.f32.mrb[0].mxu0
    %v1063 = vadd.f32 0.0, %v1062
    %v1064 = vpop.f32.mrb[0].mxu0
    %1065 = vmatprep.mubr.bf16.mxu0 0
    %1066 = vmatmul.mubr.bf16.gmra.mrb[0].mxu0 %v863
    %v1067 = vpop.f32.mrb[0].mxu0
    %v1068 = vadd.f32 0.0, %v1067
    %v1069 = vpop.f32.mrb[0].mxu0
    %v1070 = vpop.f32.mrb[0].mxu0
    %v1071 = vadd.f32 0.0, %v1070
    %v1072 = vpop.f32.mrb[0].mxu0
    %1073 = vmatprep.mubr.bf16.mxu0 0
    %1074 = vmatmul.mubr.bf16.gmra.mrb[0].mxu0 %v866
    %v1075 = vpop.f32.mrb[0].mxu0
    %v1076 = vadd.f32 0.0, %v1075
    %v1077 = vpop.f32.mrb[0].mxu0
    %v1078 = vpop.f32.mrb[0].mxu0
    %v1079 = vadd.f32 0.0, %v1078
    %v1080 = vpop.f32.mrb[0].mxu0
    %1081 = vmatprep.mubr.bf16.mxu0 0
    %1082 = vmatmul.mubr.bf16.gmra.mrb[0].mxu0 %v869
    %v1083 = vpop.f32.mrb[0].mxu0
    %v1084 = vadd.f32 0.0, %v1083
    %v1085 = vpop.f32.mrb[0].mxu0
    %v1086 = vpop.f32.mrb[0].mxu0
    %v1087 = vadd.f32 0.0, %v1086
    %v1088 = vpop.f32.mrb[0].mxu0
    %1089 = vdwg.mxu0
    %v1090 = vmax.f32 %v915, 0.0
    %v1091 = vmax.f32 %v919, 0.0
    %v1092 = vmax.f32 %v925, 0.0
    %v1093 = vmax.f32 %v929, 0.0
    %v1094 = vmax.f32 %v935, 0.0
    %v1095 = vmax.f32 %v939, 0.0
    %v1096 = vmax.f32 %v945, 0.0
    %v1097 = vmax.f32 %v949, 0.0
    %v1098 = vmax.f32 %v955, 0.0
    %v1099 = vmax.f32 %v959, 0.0
    %v1100 = vmax.f32 %v965, 0.0
    %v1101 = vmax.f32 %v969, 0.0
    %v1102 = vmax.f32 %v975, 0.0
    %v1103 = vmax.f32 %v979, 0.0
    %v1104 = vmax.f32 %v985, 0.0
    %v1105 = vmax.f32 %v989, 0.0
    %v1106 = vpack.c.bf16 %v1091, %v1090
    %v1107 = vpack.c.bf16 %v1093, %v1092
    %v1108 = vpack.c.bf16 %v1095, %v1094
    %v1109 = vpack.c.bf16 %v1097, %v1096
    %v1110 = vpack.c.bf16 %v1099, %v1098
    %v1111 = vpack.c.bf16 %v1101, %v1100
    %v1112 = vpack.c.bf16 %v1103, %v1102
    %v1113 = vpack.c.bf16 %v1105, %v1104
    %v1114 = vld [vmem:[%s2] sm:$0xf]
    %v1115 = vld [vmem:[%s2 + $0x4] sm:$0xf]
    %v1116 = vld [vmem:[%s2 + $0x8] sm:$0xf]
    %v1117 = vld [vmem:[%s2 + $0xc] sm:$0xf]
    %v1118 = vld [vmem:[%s2 + $0x10] sm:$0xf]
    %v1119 = vld [vmem:[%s2 + $0x14] sm:$0xf]
    %v1120 = vld [vmem:[%s2 + $0x18] sm:$0xf]
    %v1121 = vld [vmem:[%s2 + $0x1c] sm:$0xf]
    %v1122 = vld [vmem:[%s2 + $0x20] sm:$0xf]
    %v1123 = vld [vmem:[%s2 + $0x24] sm:$0xf]
    %v1124 = vld [vmem:[%s2 + $0x28] sm:$0xf]
    %v1125 = vld [vmem:[%s2 + $0x2c] sm:$0xf]
    %v1126 = vld [vmem:[%s2 + $0x30] sm:$0xf]
    %v1127 = vld [vmem:[%s2 + $0x34] sm:$0xf]
    %v1128 = vld [vmem:[%s2 + $0x38] sm:$0xf]
    %v1129 = vld [vmem:[%s2 + $0x3c] sm:$0xf]
    %v1146 = vunpack.c.l.b16 %v1114
    %v1147 = vunpack.c.l.b16 %v1115
    %v1148 = vunpack.c.l.b16 %v1116
    %v1149 = vunpack.c.l.b16 %v1117
    %v1150 = vunpack.c.l.b16 %v1118
    %v1151 = vunpack.c.l.b16 %v1119
    %v1152 = vunpack.c.l.b16 %v1120
    %v1153 = vunpack.c.l.b16 %v1121
    %v1154 = vunpack.c.l.b16 %v1122
    %v1155 = vunpack.c.l.b16 %v1123
    %v1156 = vunpack.c.l.b16 %v1124
    %v1157 = vunpack.c.l.b16 %v1125
    %v1158 = vunpack.c.l.b16 %v1126
    %v1159 = vunpack.c.l.b16 %v1127
    %v1160 = vunpack.c.l.b16 %v1128
    %v1161 = vunpack.c.l.b16 %v1129
    %v1162 = vpack.c.b16 %v1147, %v1146
    %v1163 = vpack.c.b16 %v1149, %v1148
    %v1164 = vpack.c.b16 %v1151, %v1150
    %v1165 = vpack.c.b16 %v1153, %v1152
    %v1166 = vpack.c.b16 %v1155, %v1154
    %v1167 = vpack.c.b16 %v1157, %v1156
    %v1168 = vpack.c.b16 %v1159, %v1158
    %v1169 = vpack.c.b16 %v1161, %v1160
    %1178 = vmatprep.subr.bf16.mxu0 0
    %1179 = vmatpush1.bf16.msra.mxu0 %v1162
    %1180 = vmatprep.subr.bf16.mxu0 0
    %1181 = vmatpush1.bf16.msra.mxu0 %v1163
    %1182 = vmatprep.subr.bf16.mxu0 0
    %1183 = vmatpush1.bf16.msra.mxu0 %v1164
    %1184 = vmatprep.subr.bf16.mxu0 0
    %1185 = vmatpush1.bf16.msra.mxu0 %v1165
    %1186 = vmatprep.subr.bf16.mxu0 0
    %1187 = vmatpush1.bf16.msra.mxu0 %v1166
    %1188 = vmatprep.subr.bf16.mxu0 0
    %1189 = vmatpush1.bf16.msra.mxu0 %v1167
    %1190 = vmatprep.subr.bf16.mxu0 0
    %1191 = vmatpush1.bf16.msra.mxu0 %v1168
    %1192 = vmatprep.subr.bf16.mxu0 0
    %1193 = vmatpush1.bf16.msra.mxu0 %v1169
    %1194 = vmatprep.subr.bf16.mxu0 0
    %1195 = vmatpush1.bf16.msra.mxu0 0
    %1196 = vmatprep.subr.bf16.mxu0 0
    %1197 = vmatpush1.bf16.msra.mxu0 0
    %1198 = vmatprep.subr.bf16.mxu0 0
    %1199 = vmatpush1.bf16.msra.mxu0 0
    %1200 = vmatprep.subr.bf16.mxu0 0
    %1201 = vmatpush1.bf16.msra.mxu0 0
    %1202 = vmatprep.subr.bf16.mxu0 0
    %1203 = vmatpush1.bf16.msra.mxu0 0
    %1204 = vmatprep.subr.bf16.mxu0 0
    %1205 = vmatpush1.bf16.msra.mxu0 0
    %1206 = vmatprep.subr.bf16.mxu0 0
    %1207 = vmatpush1.bf16.msra.mxu0 0
    %1208 = vmatprep.subr.bf16.mxu0 0
    %1209 = vmatpush1.bf16.msra.mxu0 0
    %1210 = vmatprep.mubr.bf16.mxu0 0
    %1211 = vmatmul.mubr.bf16.gmra.mrb[0].mxu0 %v1106
    %v1212 = vpop.f32.mrb[0].mxu0
    %v1213 = vadd.f32 %v917, %v1212
    %v1214 = vpop.f32.mrb[0].mxu0
    %v1215 = vpop.f32.mrb[0].mxu0
    %v1216 = vadd.f32 %v921, %v1215
    %v1217 = vpop.f32.mrb[0].mxu0
    %1218 = vmatprep.mubr.bf16.mxu0 0
    %1219 = vmatmul.mubr.bf16.gmra.mrb[0].mxu0 %v1107
    %v1220 = vpop.f32.mrb[0].mxu0
    %v1221 = vadd.f32 %v927, %v1220
    %v1222 = vpop.f32.mrb[0].mxu0
    %v1223 = vpop.f32.mrb[0].mxu0
    %v1224 = vadd.f32 %v931, %v1223
    %v1225 = vpop.f32.mrb[0].mxu0
    %1226 = vmatprep.mubr.bf16.mxu0 0
    %1227 = vmatmul.mubr.bf16.gmra.mrb[0].mxu0 %v1108
    %v1228 = vpop.f32.mrb[0].mxu0
    %v1229 = vadd.f32 %v937, %v1228
    %v1230 = vpop.f32.mrb[0].mxu0
    %v1231 = vpop.f32.mrb[0].mxu0
    %v1232 = vadd.f32 %v941, %v1231
    %v1233 = vpop.f32.mrb[0].mxu0
    %1234 = vmatprep.mubr.bf16.mxu0 0
    %1235 = vmatmul.mubr.bf16.gmra.mrb[0].mxu0 %v1109
    %v1236 = vpop.f32.mrb[0].mxu0
    %v1237 = vadd.f32 %v947, %v1236
    %v1238 = vpop.f32.mrb[0].mxu0
    %v1239 = vpop.f32.mrb[0].mxu0
    %v1240 = vadd.f32 %v951, %v1239
    %v1241 = vpop.f32.mrb[0].mxu0
    %1242 = vmatprep.mubr.bf16.mxu0 0
    %1243 = vmatmul.mubr.bf16.gmra.mrb[0].mxu0 %v1110
    %v1244 = vpop.f32.mrb[0].mxu0
    %v1245 = vadd.f32 %v957, %v1244
    %v1246 = vpop.f32.mrb[0].mxu0
    %v1247 = vpop.f32.mrb[0].mxu0
    %v1248 = vadd.f32 %v961, %v1247
    %v1249 = vpop.f32.mrb[0].mxu0
    %1250 = vmatprep.mubr.bf16.mxu0 0
    %1251 = vmatmul.mubr.bf16.gmra.mrb[0].mxu0 %v1111
    %v1252 = vpop.f32.mrb[0].mxu0
    %v1253 = vadd.f32 %v967, %v1252
    %v1254 = vpop.f32.mrb[0].mxu0
    %v1255 = vpop.f32.mrb[0].mxu0
    %v1256 = vadd.f32 %v971, %v1255
    %v1257 = vpop.f32.mrb[0].mxu0
    %1258 = vmatprep.mubr.bf16.mxu0 0
    %1259 = vmatmul.mubr.bf16.gmra.mrb[0].mxu0 %v1112
    %v1260 = vpop.f32.mrb[0].mxu0
    %v1261 = vadd.f32 %v977, %v1260
    %v1262 = vpop.f32.mrb[0].mxu0
    %v1263 = vpop.f32.mrb[0].mxu0
    %v1264 = vadd.f32 %v981, %v1263
    %v1265 = vpop.f32.mrb[0].mxu0
    %1266 = vmatprep.mubr.bf16.mxu0 0
    %1267 = vmatmul.mubr.bf16.gmra.mrb[0].mxu0 %v1113
    %v1268 = vpop.f32.mrb[0].mxu0
    %v1269 = vadd.f32 %v987, %v1268
    %v1270 = vpop.f32.mrb[0].mxu0
    %v1271 = vpop.f32.mrb[0].mxu0
    %v1272 = vadd.f32 %v991, %v1271
    %v1273 = vpop.f32.mrb[0].mxu0
    %1274 = vdwg.mxu0
    %v1275 = vmax.f32 %v1213, 0.0
    %v1276 = vmax.f32 %v1216, 0.0
    %v1277 = vmax.f32 %v1221, 0.0
    %v1278 = vmax.f32 %v1224, 0.0
    %v1279 = vmax.f32 %v1229, 0.0
    %v1280 = vmax.f32 %v1232, 0.0
    %v1281 = vmax.f32 %v1237, 0.0
    %v1282 = vmax.f32 %v1240, 0.0
    %v1283 = vmax.f32 %v1245, 0.0
    %v1284 = vmax.f32 %v1248, 0.0
    %v1285 = vmax.f32 %v1253, 0.0
    %v1286 = vmax.f32 %v1256, 0.0
    %v1287 = vmax.f32 %v1261, 0.0
    %v1288 = vmax.f32 %v1264, 0.0
    %v1289 = vmax.f32 %v1269, 0.0
    %v1290 = vmax.f32 %v1272, 0.0
    %v1291 = vpack.c.bf16 %v1276, %v1275
    %v1292 = vpack.c.bf16 %v1278, %v1277
    %v1293 = vpack.c.bf16 %v1280, %v1279
    %v1294 = vpack.c.bf16 %v1282, %v1281
    %v1295 = vpack.c.bf16 %v1284, %v1283
    %v1296 = vpack.c.bf16 %v1286, %v1285
    %v1297 = vpack.c.bf16 %v1288, %v1287
    %v1298 = vpack.c.bf16 %v1290, %v1289
    %v1299 = vld [vmem:[%s3] sm:$0xf]
    %v1300 = vld [vmem:[%s3 + $0x4] sm:$0xf]
    %v1301 = vld [vmem:[%s3 + $0x8] sm:$0xf]
    %v1302 = vld [vmem:[%s3 + $0xc] sm:$0xf]
    %v1303 = vld [vmem:[%s3 + $0x10] sm:$0xf]
    %v1304 = vld [vmem:[%s3 + $0x14] sm:$0xf]
    %v1305 = vld [vmem:[%s3 + $0x18] sm:$0xf]
    %v1306 = vld [vmem:[%s3 + $0x1c] sm:$0xf]
    %v1307 = vld [vmem:[%s3 + $0x20] sm:$0xf]
    %v1308 = vld [vmem:[%s3 + $0x24] sm:$0xf]
    %v1309 = vld [vmem:[%s3 + $0x28] sm:$0xf]
    %v1310 = vld [vmem:[%s3 + $0x2c] sm:$0xf]
    %v1311 = vld [vmem:[%s3 + $0x30] sm:$0xf]
    %v1312 = vld [vmem:[%s3 + $0x34] sm:$0xf]
    %v1313 = vld [vmem:[%s3 + $0x38] sm:$0xf]
    %v1314 = vld [vmem:[%s3 + $0x3c] sm:$0xf]
    %v1331 = vunpack.c.l.b16 %v1299
    %v1332 = vunpack.c.l.b16 %v1300
    %v1333 = vunpack.c.l.b16 %v1301
    %v1334 = vunpack.c.l.b16 %v1302
    %v1335 = vunpack.c.l.b16 %v1303
    %v1336 = vunpack.c.l.b16 %v1304
    %v1337 = vunpack.c.l.b16 %v1305
    %v1338 = vunpack.c.l.b16 %v1306
    %v1339 = vunpack.c.l.b16 %v1307
    %v1340 = vunpack.c.l.b16 %v1308
    %v1341 = vunpack.c.l.b16 %v1309
    %v1342 = vunpack.c.l.b16 %v1310
    %v1343 = vunpack.c.l.b16 %v1311
    %v1344 = vunpack.c.l.b16 %v1312
    %v1345 = vunpack.c.l.b16 %v1313
    %v1346 = vunpack.c.l.b16 %v1314
    %v1347 = vpack.c.b16 %v1332, %v1331
    %v1348 = vpack.c.b16 %v1334, %v1333
    %v1349 = vpack.c.b16 %v1336, %v1335
    %v1350 = vpack.c.b16 %v1338, %v1337
    %v1351 = vpack.c.b16 %v1340, %v1339
    %v1352 = vpack.c.b16 %v1342, %v1341
    %v1353 = vpack.c.b16 %v1344, %v1343
    %v1354 = vpack.c.b16 %v1346, %v1345
    %1363 = vmatprep.subr.bf16.mxu0 0
    %1364 = vmatpush1.bf16.msra.mxu0 %v1347
    %1365 = vmatprep.subr.bf16.mxu0 0
    %1366 = vmatpush1.bf16.msra.mxu0 %v1348
    %1367 = vmatprep.subr.bf16.mxu0 0
    %1368 = vmatpush1.bf16.msra.mxu0 %v1349
    %1369 = vmatprep.subr.bf16.mxu0 0
    %1370 = vmatpush1.bf16.msra.mxu0 %v1350
    %1371 = vmatprep.subr.bf16.mxu0 0
    %1372 = vmatpush1.bf16.msra.mxu0 %v1351
    %1373 = vmatprep.subr.bf16.mxu0 0
    %1374 = vmatpush1.bf16.msra.mxu0 %v1352
    %1375 = vmatprep.subr.bf16.mxu0 0
    %1376 = vmatpush1.bf16.msra.mxu0 %v1353
    %1377 = vmatprep.subr.bf16.mxu0 0
    %1378 = vmatpush1.bf16.msra.mxu0 %v1354
    %1379 = vmatprep.subr.bf16.mxu0 0
    %1380 = vmatpush1.bf16.msra.mxu0 0
    %1381 = vmatprep.subr.bf16.mxu0 0
    %1382 = vmatpush1.bf16.msra.mxu0 0
    %1383 = vmatprep.subr.bf16.mxu0 0
    %1384 = vmatpush1.bf16.msra.mxu0 0
    %1385 = vmatprep.subr.bf16.mxu0 0
    %1386 = vmatpush1.bf16.msra.mxu0 0
    %1387 = vmatprep.subr.bf16.mxu0 0
    %1388 = vmatpush1.bf16.msra.mxu0 0
    %1389 = vmatprep.subr.bf16.mxu0 0
    %1390 = vmatpush1.bf16.msra.mxu0 0
    %1391 = vmatprep.subr.bf16.mxu0 0
    %1392 = vmatpush1.bf16.msra.mxu0 0
    %1393 = vmatprep.subr.bf16.mxu0 0
    %1394 = vmatpush1.bf16.msra.mxu0 0
    %1395 = vmatprep.mubr.bf16.mxu0 0
    %1396 = vmatmul.mubr.bf16.gmra.mrb[0].mxu0 %v1291
    %v1397 = vpop.f32.mrb[0].mxu0
    %v1398 = vadd.f32 %v1028, %v1397
    %v1399 = vpop.f32.mrb[0].mxu0
    %v1400 = vpop.f32.mrb[0].mxu0
    %v1401 = vadd.f32 %v1031, %v1400
    %v1402 = vpop.f32.mrb[0].mxu0
    %1403 = vmatprep.mubr.bf16.mxu0 0
    %1404 = vmatmul.mubr.bf16.gmra.mrb[0].mxu0 %v1292
    %v1405 = vpop.f32.mrb[0].mxu0
    %v1406 = vadd.f32 %v1036, %v1405
    %v1407 = vpop.f32.mrb[0].mxu0
    %v1408 = vpop.f32.mrb[0].mxu0
    %v1409 = vadd.f32 %v1039, %v1408
    %v1410 = vpop.f32.mrb[0].mxu0
    %1411 = vmatprep.mubr.bf16.mxu0 0
    %1412 = vmatmul.mubr.bf16.gmra.mrb[0].mxu0 %v1293
    %v1413 = vpop.f32.mrb[0].mxu0
    %v1414 = vadd.f32 %v1044, %v1413
    %v1415 = vpop.f32.mrb[0].mxu0
    %v1416 = vpop.f32.mrb[0].mxu0
    %v1417 = vadd.f32 %v1047, %v1416
    %v1418 = vpop.f32.mrb[0].mxu0
    %1419 = vmatprep.mubr.bf16.mxu0 0
    %1420 = vmatmul.mubr.bf16.gmra.mrb[0].mxu0 %v1294
    %v1421 = vpop.f32.mrb[0].mxu0
    %v1422 = vadd.f32 %v1052, %v1421
    %v1423 = vpop.f32.mrb[0].mxu0
    %v1424 = vpop.f32.mrb[0].mxu0
    %v1425 = vadd.f32 %v1055, %v1424
    %v1426 = vpop.f32.mrb[0].mxu0
    %1427 = vmatprep.mubr.bf16.mxu0 0
    %1428 = vmatmul.mubr.bf16.gmra.mrb[0].mxu0 %v1295
    %v1429 = vpop.f32.mrb[0].mxu0
    %v1430 = vadd.f32 %v1060, %v1429
    %v1431 = vpop.f32.mrb[0].mxu0
    %v1432 = vpop.f32.mrb[0].mxu0
    %v1433 = vadd.f32 %v1063, %v1432
    %v1434 = vpop.f32.mrb[0].mxu0
    %1435 = vmatprep.mubr.bf16.mxu0 0
    %1436 = vmatmul.mubr.bf16.gmra.mrb[0].mxu0 %v1296
    %v1437 = vpop.f32.mrb[0].mxu0
    %v1438 = vadd.f32 %v1068, %v1437
    %v1439 = vpop.f32.mrb[0].mxu0
    %v1440 = vpop.f32.mrb[0].mxu0
    %v1441 = vadd.f32 %v1071, %v1440
    %v1442 = vpop.f32.mrb[0].mxu0
    %1443 = vmatprep.mubr.bf16.mxu0 0
    %1444 = vmatmul.mubr.bf16.gmra.mrb[0].mxu0 %v1297
    %v1445 = vpop.f32.mrb[0].mxu0
    %v1446 = vadd.f32 %v1076, %v1445
    %v1447 = vpop.f32.mrb[0].mxu0
    %v1448 = vpop.f32.mrb[0].mxu0
    %v1449 = vadd.f32 %v1079, %v1448
    %v1450 = vpop.f32.mrb[0].mxu0
    %1451 = vmatprep.mubr.bf16.mxu0 0
    %1452 = vmatmul.mubr.bf16.gmra.mrb[0].mxu0 %v1298
    %v1453 = vpop.f32.mrb[0].mxu0
    %v1454 = vadd.f32 %v1084, %v1453
    %v1455 = vpop.f32.mrb[0].mxu0
    %v1456 = vpop.f32.mrb[0].mxu0
    %v1457 = vadd.f32 %v1087, %v1456
    %v1458 = vpop.f32.mrb[0].mxu0
    %1459 = vdwg.mxu0
    %v1460 = vpack.c.bf16 %v1401, %v1398
    %v1461 = vpack.c.bf16 %v1409, %v1406
    %v1462 = vpack.c.bf16 %v1417, %v1414
    %v1463 = vpack.c.bf16 %v1425, %v1422
    %v1464 = vpack.c.bf16 %v1433, %v1430
    %v1465 = vpack.c.bf16 %v1441, %v1438
    %v1466 = vpack.c.bf16 %v1449, %v1446
    %v1467 = vpack.c.bf16 %v1457, %v1454
    %v1476 = vunpack.c.l.b16 %v1460
    %v1477 = vunpack.c.h.b16 %v1460
    %v1478 = vunpack.c.l.b16 %v1461
    %v1479 = vunpack.c.h.b16 %v1461
    %v1480 = vunpack.c.l.b16 %v1462
    %v1481 = vunpack.c.h.b16 %v1462
    %v1482 = vunpack.c.l.b16 %v1463
    %v1483 = vunpack.c.h.b16 %v1463
    %v1484 = vunpack.c.l.b16 %v1464
    %v1485 = vunpack.c.h.b16 %v1464
    %v1486 = vunpack.c.l.b16 %v1465
    %v1487 = vunpack.c.h.b16 %v1465
    %v1488 = vunpack.c.l.b16 %v1466
    %v1489 = vunpack.c.h.b16 %v1466
    %v1490 = vunpack.c.l.b16 %v1467
    %v1491 = vunpack.c.h.b16 %v1467
    %v1492 = vpack.c.b16 %v1476, %v1476
    %v1493 = vpack.c.b16 %v1477, %v1477
    %v1494 = vpack.c.b16 %v1478, %v1478
    %v1495 = vpack.c.b16 %v1479, %v1479
    %v1496 = vpack.c.b16 %v1480, %v1480
    %v1497 = vpack.c.b16 %v1481, %v1481
    %v1498 = vpack.c.b16 %v1482, %v1482
    %v1499 = vpack.c.b16 %v1483, %v1483
    %v1500 = vpack.c.b16 %v1484, %v1484
    %v1501 = vpack.c.b16 %v1485, %v1485
    %v1502 = vpack.c.b16 %v1486, %v1486
    %v1503 = vpack.c.b16 %v1487, %v1487
    %v1504 = vpack.c.b16 %v1488, %v1488
    %v1505 = vpack.c.b16 %v1489, %v1489
    %v1506 = vpack.c.b16 %v1490, %v1490
    %v1507 = vpack.c.b16 %v1491, %v1491
    %s1524 = scalar_lea.vmem [#allocation2], 64
    %1525 = vst [vmem:[%s1524] sm:$0xf] %v1492
    %1526 = vst [vmem:[%s1524 + $0x4] sm:$0xf] %v1493
    %1527 = vst [vmem:[%s1524 + $0x8] sm:$0xf] %v1494
    %1528 = vst [vmem:[%s1524 + $0xc] sm:$0xf] %v1495
    %1529 = vst [vmem:[%s1524 + $0x10] sm:$0xf] %v1496
    %1530 = vst [vmem:[%s1524 + $0x14] sm:$0xf] %v1497
    %1531 = vst [vmem:[%s1524 + $0x18] sm:$0xf] %v1498
    %1532 = vst [vmem:[%s1524 + $0x1c] sm:$0xf] %v1499
    %1533 = vst [vmem:[%s1524 + $0x20] sm:$0xf] %v1500
    %1534 = vst [vmem:[%s1524 + $0x24] sm:$0xf] %v1501
    %1535 = vst [vmem:[%s1524 + $0x28] sm:$0xf] %v1502
    %1536 = vst [vmem:[%s1524 + $0x2c] sm:$0xf] %v1503
    %1537 = vst [vmem:[%s1524 + $0x30] sm:$0xf] %v1504
    %1538 = vst [vmem:[%s1524 + $0x34] sm:$0xf] %v1505
    %1539 = vst [vmem:[%s1524 + $0x38] sm:$0xf] %v1506
    %1540 = vst [vmem:[%s1524 + $0x3c] sm:$0xf] %v1507
    %s1541 = scalar_lea.vmem %s0, 128
    %v1542 = vld [vmem:[%s1541] sm:$0xf]
    %v1543 = vld [vmem:[%s1541 + $0x4] sm:$0xf]
    %v1544 = vld [vmem:[%s1541 + $0x8] sm:$0xf]
    %v1545 = vld [vmem:[%s1541 + $0xc] sm:$0xf]
    %v1546 = vld [vmem:[%s1541 + $0x10] sm:$0xf]
    %v1547 = vld [vmem:[%s1541 + $0x14] sm:$0xf]
    %v1548 = vld [vmem:[%s1541 + $0x18] sm:$0xf]
    %v1549 = vld [vmem:[%s1541 + $0x1c] sm:$0xf]
    %v1550 = vld [vmem:[%s1541 + $0x20] sm:$0xf]
    %v1551 = vld [vmem:[%s1541 + $0x24] sm:$0xf]
    %v1552 = vld [vmem:[%s1541 + $0x28] sm:$0xf]
    %v1553 = vld [vmem:[%s1541 + $0x2c] sm:$0xf]
    %v1554 = vld [vmem:[%s1541 + $0x30] sm:$0xf]
    %v1555 = vld [vmem:[%s1541 + $0x34] sm:$0xf]
    %v1556 = vld [vmem:[%s1541 + $0x38] sm:$0xf]
    %v1557 = vld [vmem:[%s1541 + $0x3c] sm:$0xf]
    %v1558 = vld [vmem:[%s1] sm:$0xff]
    %v1559 = vld [vmem:[%s1 + $0x8] sm:$0xf]
    %v1576 = vunpack.c.l.b16 %v1542
    %v1577 = vunpack.c.l.b16 %v1543
    %v1578 = vunpack.c.l.b16 %v1544
    %v1579 = vunpack.c.l.b16 %v1545
    %v1580 = vunpack.c.l.b16 %v1546
    %v1581 = vunpack.c.l.b16 %v1547
    %v1582 = vunpack.c.l.b16 %v1548
    %v1583 = vunpack.c.l.b16 %v1549
    %v1584 = vunpack.c.l.b16 %v1550
    %v1585 = vunpack.c.l.b16 %v1551
    %v1586 = vunpack.c.l.b16 %v1552
    %v1587 = vunpack.c.l.b16 %v1553
    %v1588 = vunpack.c.l.b16 %v1554
    %v1589 = vunpack.c.l.b16 %v1555
    %v1590 = vunpack.c.l.b16 %v1556
    %v1591 = vunpack.c.l.b16 %v1557
    %v1592 = vpack.c.b16 %v1577, %v1576
    %v1593 = vpack.c.b16 %v1579, %v1578
    %v1594 = vpack.c.b16 %v1581, %v1580
    %v1595 = vpack.c.b16 %v1583, %v1582
    %v1596 = vpack.c.b16 %v1585, %v1584
    %v1597 = vpack.c.b16 %v1587, %v1586
    %v1598 = vpack.c.b16 %v1589, %v1588
    %v1599 = vpack.c.b16 %v1591, %v1590
    %v1602 = vunpack.c.l.b16 %v1558
    %v1603 = vunpack.c.h.b16 %v1558
    %v1604 = vunpack.c.l.b16 %v1559
    %v1605 = vpack.c.b16 %v1602, %v1602
    %v1606 = vpack.c.b16 %v1603, %v1603
    %v1607 = vpack.c.b16 %v1604, %v1604
    %v1609 = vsel %vm85, %v1592, 0
    %v1612 = vsel %vm85, %v1593, 0
    %v1615 = vsel %vm85, %v1594, 0
    %v1618 = vsel %vm85, %v1595, 0
    %v1621 = vsel %vm85, %v1596, 0
    %v1624 = vsel %vm85, %v1597, 0
    %v1627 = vsel %vm85, %v1598, 0
    %v1630 = vsel %vm85, %v1599, 0
    %v1633 = vsel %vm110, %v1605, 0
    %v1636 = vsel %vm110, %v1606, 0
    %v1639 = vsel %vm110, %v1607, 0
    %1641 = vmatprep.subr.bf16.mxu0 %v1636
    %1642 = vmatpush1.bf16.msra.mxu0 %v1633
    %1643 = vmatprep.subr.bf16.mxu0 0
    %1644 = vmatpush1.bf16.msra.mxu0 0
    %1645 = vmatprep.subr.bf16.mxu0 0
    %1646 = vmatpush1.bf16.msra.mxu0 0
    %1647 = vmatprep.subr.bf16.mxu0 0
    %1648 = vmatpush1.bf16.msra.mxu0 0
    %1649 = vmatprep.subr.bf16.mxu0 0
    %1650 = vmatpush1.bf16.msra.mxu0 0
    %1651 = vmatprep.subr.bf16.mxu0 0
    %1652 = vmatpush1.bf16.msra.mxu0 0
    %1653 = vmatprep.subr.bf16.mxu0 0
    %1654 = vmatpush1.bf16.msra.mxu0 0
    %1655 = vmatprep.subr.bf16.mxu0 0
    %1656 = vmatpush1.bf16.msra.mxu0 0
    %1657 = vmatprep.subr.bf16.mxu0 0
    %1658 = vmatpush1.bf16.msra.mxu0 0
    %1659 = vmatprep.subr.bf16.mxu0 0
    %1660 = vmatpush1.bf16.msra.mxu0 0
    %1661 = vmatprep.subr.bf16.mxu0 0
    %1662 = vmatpush1.bf16.msra.mxu0 0
    %1663 = vmatprep.subr.bf16.mxu0 0
    %1664 = vmatpush1.bf16.msra.mxu0 0
    %1665 = vmatprep.subr.bf16.mxu0 0
    %1666 = vmatpush1.bf16.msra.mxu0 0
    %1667 = vmatprep.subr.bf16.mxu0 0
    %1668 = vmatpush1.bf16.msra.mxu0 0
    %1669 = vmatprep.subr.bf16.mxu0 0
    %1670 = vmatpush1.bf16.msra.mxu0 0
    %1671 = vmatprep.subr.bf16.mxu0 0
    %1672 = vmatpush1.bf16.msra.mxu0 0
    %1673 = vmatprep.mubr.bf16.mxu0 0
    %1674 = vmatmul.mubr.bf16.gmra.mrb[0].mxu0 %v1609
    %v1675 = vpop.f32.mrb[0].mxu0
    %v1676 = vadd.f32 0.0, %v1675
    %v1677 = vpop.f32.mrb[0].mxu0
    %v1678 = vadd.f32 0.0, %v1677
    %v1679 = vpop.f32.mrb[0].mxu0
    %v1680 = vadd.f32 0.0, %v1679
    %v1681 = vpop.f32.mrb[0].mxu0
    %v1682 = vadd.f32 0.0, %v1681
    %1683 = vmatprep.mubr.bf16.mxu0 0
    %1684 = vmatmul.mubr.bf16.gmra.mrb[0].mxu0 %v1612
    %v1685 = vpop.f32.mrb[0].mxu0
    %v1686 = vadd.f32 0.0, %v1685
    %v1687 = vpop.f32.mrb[0].mxu0
    %v1688 = vadd.f32 0.0, %v1687
    %v1689 = vpop.f32.mrb[0].mxu0
    %v1690 = vadd.f32 0.0, %v1689
    %v1691 = vpop.f32.mrb[0].mxu0
    %v1692 = vadd.f32 0.0, %v1691
    %1693 = vmatprep.mubr.bf16.mxu0 0
    %1694 = vmatmul.mubr.bf16.gmra.mrb[0].mxu0 %v1615
    %v1695 = vpop.f32.mrb[0].mxu0
    %v1696 = vadd.f32 0.0, %v1695
    %v1697 = vpop.f32.mrb[0].mxu0
    %v1698 = vadd.f32 0.0, %v1697
    %v1699 = vpop.f32.mrb[0].mxu0
    %v1700 = vadd.f32 0.0, %v1699
    %v1701 = vpop.f32.mrb[0].mxu0
    %v1702 = vadd.f32 0.0, %v1701
    %1703 = vmatprep.mubr.bf16.mxu0 0
    %1704 = vmatmul.mubr.bf16.gmra.mrb[0].mxu0 %v1618
    %v1705 = vpop.f32.mrb[0].mxu0
    %v1706 = vadd.f32 0.0, %v1705
    %v1707 = vpop.f32.mrb[0].mxu0
    %v1708 = vadd.f32 0.0, %v1707
    %v1709 = vpop.f32.mrb[0].mxu0
    %v1710 = vadd.f32 0.0, %v1709
    %v1711 = vpop.f32.mrb[0].mxu0
    %v1712 = vadd.f32 0.0, %v1711
    %1713 = vmatprep.mubr.bf16.mxu0 0
    %1714 = vmatmul.mubr.bf16.gmra.mrb[0].mxu0 %v1621
    %v1715 = vpop.f32.mrb[0].mxu0
    %v1716 = vadd.f32 0.0, %v1715
    %v1717 = vpop.f32.mrb[0].mxu0
    %v1718 = vadd.f32 0.0, %v1717
    %v1719 = vpop.f32.mrb[0].mxu0
    %v1720 = vadd.f32 0.0, %v1719
    %v1721 = vpop.f32.mrb[0].mxu0
    %v1722 = vadd.f32 0.0, %v1721
    %1723 = vmatprep.mubr.bf16.mxu0 0
    %1724 = vmatmul.mubr.bf16.gmra.mrb[0].mxu0 %v1624
    %v1725 = vpop.f32.mrb[0].mxu0
    %v1726 = vadd.f32 0.0, %v1725
    %v1727 = vpop.f32.mrb[0].mxu0
    %v1728 = vadd.f32 0.0, %v1727
    %v1729 = vpop.f32.mrb[0].mxu0
    %v1730 = vadd.f32 0.0, %v1729
    %v1731 = vpop.f32.mrb[0].mxu0
    %v1732 = vadd.f32 0.0, %v1731
    %1733 = vmatprep.mubr.bf16.mxu0 0
    %1734 = vmatmul.mubr.bf16.gmra.mrb[0].mxu0 %v1627
    %v1735 = vpop.f32.mrb[0].mxu0
    %v1736 = vadd.f32 0.0, %v1735
    %v1737 = vpop.f32.mrb[0].mxu0
    %v1738 = vadd.f32 0.0, %v1737
    %v1739 = vpop.f32.mrb[0].mxu0
    %v1740 = vadd.f32 0.0, %v1739
    %v1741 = vpop.f32.mrb[0].mxu0
    %v1742 = vadd.f32 0.0, %v1741
    %1743 = vmatprep.mubr.bf16.mxu0 0
    %1744 = vmatmul.mubr.bf16.gmra.mrb[0].mxu0 %v1630
    %v1745 = vpop.f32.mrb[0].mxu0
    %v1746 = vadd.f32 0.0, %v1745
    %v1747 = vpop.f32.mrb[0].mxu0
    %v1748 = vadd.f32 0.0, %v1747
    %v1749 = vpop.f32.mrb[0].mxu0
    %v1750 = vadd.f32 0.0, %v1749
    %v1751 = vpop.f32.mrb[0].mxu0
    %v1752 = vadd.f32 0.0, %v1751
    %1753 = vdwg.mxu0
    %1754 = vmatprep.subr.bf16.mxu0 0
    %1755 = vmatpush1.bf16.msra.mxu0 %v1639
    %1756 = vmatprep.subr.bf16.mxu0 0
    %1757 = vmatpush1.bf16.msra.mxu0 0
    %1758 = vmatprep.subr.bf16.mxu0 0
    %1759 = vmatpush1.bf16.msra.mxu0 0
    %1760 = vmatprep.subr.bf16.mxu0 0
    %1761 = vmatpush1.bf16.msra.mxu0 0
    %1762 = vmatprep.subr.bf16.mxu0 0
    %1763 = vmatpush1.bf16.msra.mxu0 0
    %1764 = vmatprep.subr.bf16.mxu0 0
    %1765 = vmatpush1.bf16.msra.mxu0 0
    %1766 = vmatprep.subr.bf16.mxu0 0
    %1767 = vmatpush1.bf16.msra.mxu0 0
    %1768 = vmatprep.subr.bf16.mxu0 0
    %1769 = vmatpush1.bf16.msra.mxu0 0
    %1770 = vmatprep.subr.bf16.mxu0 0
    %1771 = vmatpush1.bf16.msra.mxu0 0
    %1772 = vmatprep.subr.bf16.mxu0 0
    %1773 = vmatpush1.bf16.msra.mxu0 0
    %1774 = vmatprep.subr.bf16.mxu0 0
    %1775 = vmatpush1.bf16.msra.mxu0 0
    %1776 = vmatprep.subr.bf16.mxu0 0
    %1777 = vmatpush1.bf16.msra.mxu0 0
    %1778 = vmatprep.subr.bf16.mxu0 0
    %1779 = vmatpush1.bf16.msra.mxu0 0
    %1780 = vmatprep.subr.bf16.mxu0 0
    %1781 = vmatpush1.bf16.msra.mxu0 0
    %1782 = vmatprep.subr.bf16.mxu0 0
    %1783 = vmatpush1.bf16.msra.mxu0 0
    %1784 = vmatprep.subr.bf16.mxu0 0
    %1785 = vmatpush1.bf16.msra.mxu0 0
    %1786 = vmatprep.mubr.bf16.mxu0 0
    %1787 = vmatmul.mubr.bf16.gmra.mrb[0].mxu0 %v1609
    %v1788 = vpop.f32.mrb[0].mxu0
    %v1789 = vadd.f32 0.0, %v1788
    %v1790 = vpop.f32.mrb[0].mxu0
    %v1791 = vpop.f32.mrb[0].mxu0
    %v1792 = vadd.f32 0.0, %v1791
    %v1793 = vpop.f32.mrb[0].mxu0
    %1794 = vmatprep.mubr.bf16.mxu0 0
    %1795 = vmatmul.mubr.bf16.gmra.mrb[0].mxu0 %v1612
    %v1796 = vpop.f32.mrb[0].mxu0
    %v1797 = vadd.f32 0.0, %v1796
    %v1798 = vpop.f32.mrb[0].mxu0
    %v1799 = vpop.f32.mrb[0].mxu0
    %v1800 = vadd.f32 0.0, %v1799
    %v1801 = vpop.f32.mrb[0].mxu0
    %1802 = vmatprep.mubr.bf16.mxu0 0
    %1803 = vmatmul.mubr.bf16.gmra.mrb[0].mxu0 %v1615
    %v1804 = vpop.f32.mrb[0].mxu0
    %v1805 = vadd.f32 0.0, %v1804
    %v1806 = vpop.f32.mrb[0].mxu0
    %v1807 = vpop.f32.mrb[0].mxu0
    %v1808 = vadd.f32 0.0, %v1807
    %v1809 = vpop.f32.mrb[0].mxu0
    %1810 = vmatprep.mubr.bf16.mxu0 0
    %1811 = vmatmul.mubr.bf16.gmra.mrb[0].mxu0 %v1618
    %v1812 = vpop.f32.mrb[0].mxu0
    %v1813 = vadd.f32 0.0, %v1812
    %v1814 = vpop.f32.mrb[0].mxu0
    %v1815 = vpop.f32.mrb[0].mxu0
    %v1816 = vadd.f32 0.0, %v1815
    %v1817 = vpop.f32.mrb[0].mxu0
    %1818 = vmatprep.mubr.bf16.mxu0 0
    %1819 = vmatmul.mubr.bf16.gmra.mrb[0].mxu0 %v1621
    %v1820 = vpop.f32.mrb[0].mxu0
    %v1821 = vadd.f32 0.0, %v1820
    %v1822 = vpop.f32.mrb[0].mxu0
    %v1823 = vpop.f32.mrb[0].mxu0
    %v1824 = vadd.f32 0.0, %v1823
    %v1825 = vpop.f32.mrb[0].mxu0
    %1826 = vmatprep.mubr.bf16.mxu0 0
    %1827 = vmatmul.mubr.bf16.gmra.mrb[0].mxu0 %v1624
    %v1828 = vpop.f32.mrb[0].mxu0
    %v1829 = vadd.f32 0.0, %v1828
    %v1830 = vpop.f32.mrb[0].mxu0
    %v1831 = vpop.f32.mrb[0].mxu0
    %v1832 = vadd.f32 0.0, %v1831
    %v1833 = vpop.f32.mrb[0].mxu0
    %1834 = vmatprep.mubr.bf16.mxu0 0
    %1835 = vmatmul.mubr.bf16.gmra.mrb[0].mxu0 %v1627
    %v1836 = vpop.f32.mrb[0].mxu0
    %v1837 = vadd.f32 0.0, %v1836
    %v1838 = vpop.f32.mrb[0].mxu0
    %v1839 = vpop.f32.mrb[0].mxu0
    %v1840 = vadd.f32 0.0, %v1839
    %v1841 = vpop.f32.mrb[0].mxu0
    %1842 = vmatprep.mubr.bf16.mxu0 0
    %1843 = vmatmul.mubr.bf16.gmra.mrb[0].mxu0 %v1630
    %v1844 = vpop.f32.mrb[0].mxu0
    %v1845 = vadd.f32 0.0, %v1844
    %v1846 = vpop.f32.mrb[0].mxu0
    %v1847 = vpop.f32.mrb[0].mxu0
    %v1848 = vadd.f32 0.0, %v1847
    %v1849 = vpop.f32.mrb[0].mxu0
    %1850 = vdwg.mxu0
    %v1851 = vmax.f32 %v1676, 0.0
    %v1852 = vmax.f32 %v1680, 0.0
    %v1853 = vmax.f32 %v1686, 0.0
    %v1854 = vmax.f32 %v1690, 0.0
    %v1855 = vmax.f32 %v1696, 0.0
    %v1856 = vmax.f32 %v1700, 0.0
    %v1857 = vmax.f32 %v1706, 0.0
    %v1858 = vmax.f32 %v1710, 0.0
    %v1859 = vmax.f32 %v1716, 0.0
    %v1860 = vmax.f32 %v1720, 0.0
    %v1861 = vmax.f32 %v1726, 0.0
    %v1862 = vmax.f32 %v1730, 0.0
    %v1863 = vmax.f32 %v1736, 0.0
    %v1864 = vmax.f32 %v1740, 0.0
    %v1865 = vmax.f32 %v1746, 0.0
    %v1866 = vmax.f32 %v1750, 0.0
    %v1867 = vpack.c.bf16 %v1852, %v1851
    %v1868 = vpack.c.bf16 %v1854, %v1853
    %v1869 = vpack.c.bf16 %v1856, %v1855
    %v1870 = vpack.c.bf16 %v1858, %v1857
    %v1871 = vpack.c.bf16 %v1860, %v1859
    %v1872 = vpack.c.bf16 %v1862, %v1861
    %v1873 = vpack.c.bf16 %v1864, %v1863
    %v1874 = vpack.c.bf16 %v1866, %v1865
    %v1875 = vld [vmem:[%s2] sm:$0xf]
    %v1876 = vld [vmem:[%s2 + $0x4] sm:$0xf]
    %v1877 = vld [vmem:[%s2 + $0x8] sm:$0xf]
    %v1878 = vld [vmem:[%s2 + $0xc] sm:$0xf]
    %v1879 = vld [vmem:[%s2 + $0x10] sm:$0xf]
    %v1880 = vld [vmem:[%s2 + $0x14] sm:$0xf]
    %v1881 = vld [vmem:[%s2 + $0x18] sm:$0xf]
    %v1882 = vld [vmem:[%s2 + $0x1c] sm:$0xf]
    %v1883 = vld [vmem:[%s2 + $0x20] sm:$0xf]
    %v1884 = vld [vmem:[%s2 + $0x24] sm:$0xf]
    %v1885 = vld [vmem:[%s2 + $0x28] sm:$0xf]
    %v1886 = vld [vmem:[%s2 + $0x2c] sm:$0xf]
    %v1887 = vld [vmem:[%s2 + $0x30] sm:$0xf]
    %v1888 = vld [vmem:[%s2 + $0x34] sm:$0xf]
    %v1889 = vld [vmem:[%s2 + $0x38] sm:$0xf]
    %v1890 = vld [vmem:[%s2 + $0x3c] sm:$0xf]
    %v1907 = vunpack.c.l.b16 %v1875
    %v1908 = vunpack.c.l.b16 %v1876
    %v1909 = vunpack.c.l.b16 %v1877
    %v1910 = vunpack.c.l.b16 %v1878
    %v1911 = vunpack.c.l.b16 %v1879
    %v1912 = vunpack.c.l.b16 %v1880
    %v1913 = vunpack.c.l.b16 %v1881
    %v1914 = vunpack.c.l.b16 %v1882
    %v1915 = vunpack.c.l.b16 %v1883
    %v1916 = vunpack.c.l.b16 %v1884
    %v1917 = vunpack.c.l.b16 %v1885
    %v1918 = vunpack.c.l.b16 %v1886
    %v1919 = vunpack.c.l.b16 %v1887
    %v1920 = vunpack.c.l.b16 %v1888
    %v1921 = vunpack.c.l.b16 %v1889
    %v1922 = vunpack.c.l.b16 %v1890
    %v1923 = vpack.c.b16 %v1908, %v1907
    %v1924 = vpack.c.b16 %v1910, %v1909
    %v1925 = vpack.c.b16 %v1912, %v1911
    %v1926 = vpack.c.b16 %v1914, %v1913
    %v1927 = vpack.c.b16 %v1916, %v1915
    %v1928 = vpack.c.b16 %v1918, %v1917
    %v1929 = vpack.c.b16 %v1920, %v1919
    %v1930 = vpack.c.b16 %v1922, %v1921
    %1939 = vmatprep.subr.bf16.mxu0 0
    %1940 = vmatpush1.bf16.msra.mxu0 %v1923
    %1941 = vmatprep.subr.bf16.mxu0 0
    %1942 = vmatpush1.bf16.msra.mxu0 %v1924
    %1943 = vmatprep.subr.bf16.mxu0 0
    %1944 = vmatpush1.bf16.msra.mxu0 %v1925
    %1945 = vmatprep.subr.bf16.mxu0 0
    %1946 = vmatpush1.bf16.msra.mxu0 %v1926
    %1947 = vmatprep.subr.bf16.mxu0 0
    %1948 = vmatpush1.bf16.msra.mxu0 %v1927
    %1949 = vmatprep.subr.bf16.mxu0 0
    %1950 = vmatpush1.bf16.msra.mxu0 %v1928
    %1951 = vmatprep.subr.bf16.mxu0 0
    %1952 = vmatpush1.bf16.msra.mxu0 %v1929
    %1953 = vmatprep.subr.bf16.mxu0 0
    %1954 = vmatpush1.bf16.msra.mxu0 %v1930
    %1955 = vmatprep.subr.bf16.mxu0 0
    %1956 = vmatpush1.bf16.msra.mxu0 0
    %1957 = vmatprep.subr.bf16.mxu0 0
    %1958 = vmatpush1.bf16.msra.mxu0 0
    %1959 = vmatprep.subr.bf16.mxu0 0
    %1960 = vmatpush1.bf16.msra.mxu0 0
    %1961 = vmatprep.subr.bf16.mxu0 0
    %1962 = vmatpush1.bf16.msra.mxu0 0
    %1963 = vmatprep.subr.bf16.mxu0 0
    %1964 = vmatpush1.bf16.msra.mxu0 0
    %1965 = vmatprep.subr.bf16.mxu0 0
    %1966 = vmatpush1.bf16.msra.mxu0 0
    %1967 = vmatprep.subr.bf16.mxu0 0
    %1968 = vmatpush1.bf16.msra.mxu0 0
    %1969 = vmatprep.subr.bf16.mxu0 0
    %1970 = vmatpush1.bf16.msra.mxu0 0
    %1971 = vmatprep.mubr.bf16.mxu0 0
    %1972 = vmatmul.mubr.bf16.gmra.mrb[0].mxu0 %v1867
    %v1973 = vpop.f32.mrb[0].mxu0
    %v1974 = vadd.f32 %v1678, %v1973
    %v1975 = vpop.f32.mrb[0].mxu0
    %v1976 = vpop.f32.mrb[0].mxu0
    %v1977 = vadd.f32 %v1682, %v1976
    %v1978 = vpop.f32.mrb[0].mxu0
    %1979 = vmatprep.mubr.bf16.mxu0 0
    %1980 = vmatmul.mubr.bf16.gmra.mrb[0].mxu0 %v1868
    %v1981 = vpop.f32.mrb[0].mxu0
    %v1982 = vadd.f32 %v1688, %v1981
    %v1983 = vpop.f32.mrb[0].mxu0
    %v1984 = vpop.f32.mrb[0].mxu0
    %v1985 = vadd.f32 %v1692, %v1984
    %v1986 = vpop.f32.mrb[0].mxu0
    %1987 = vmatprep.mubr.bf16.mxu0 0
    %1988 = vmatmul.mubr.bf16.gmra.mrb[0].mxu0 %v1869
    %v1989 = vpop.f32.mrb[0].mxu0
    %v1990 = vadd.f32 %v1698, %v1989
    %v1991 = vpop.f32.mrb[0].mxu0
    %v1992 = vpop.f32.mrb[0].mxu0
    %v1993 = vadd.f32 %v1702, %v1992
    %v1994 = vpop.f32.mrb[0].mxu0
    %1995 = vmatprep.mubr.bf16.mxu0 0
    %1996 = vmatmul.mubr.bf16.gmra.mrb[0].mxu0 %v1870
    %v1997 = vpop.f32.mrb[0].mxu0
    %v1998 = vadd.f32 %v1708, %v1997
    %v1999 = vpop.f32.mrb[0].mxu0
    %v2000 = vpop.f32.mrb[0].mxu0
    %v2001 = vadd.f32 %v1712, %v2000
    %v2002 = vpop.f32.mrb[0].mxu0
    %2003 = vmatprep.mubr.bf16.mxu0 0
    %2004 = vmatmul.mubr.bf16.gmra.mrb[0].mxu0 %v1871
    %v2005 = vpop.f32.mrb[0].mxu0
    %v2006 = vadd.f32 %v1718, %v2005
    %v2007 = vpop.f32.mrb[0].mxu0
    %v2008 = vpop.f32.mrb[0].mxu0
    %v2009 = vadd.f32 %v1722, %v2008
    %v2010 = vpop.f32.mrb[0].mxu0
    %2011 = vmatprep.mubr.bf16.mxu0 0
    %2012 = vmatmul.mubr.bf16.gmra.mrb[0].mxu0 %v1872
    %v2013 = vpop.f32.mrb[0].mxu0
    %v2014 = vadd.f32 %v1728, %v2013
    %v2015 = vpop.f32.mrb[0].mxu0
    %v2016 = vpop.f32.mrb[0].mxu0
    %v2017 = vadd.f32 %v1732, %v2016
    %v2018 = vpop.f32.mrb[0].mxu0
    %2019 = vmatprep.mubr.bf16.mxu0 0
    %2020 = vmatmul.mubr.bf16.gmra.mrb[0].mxu0 %v1873
    %v2021 = vpop.f32.mrb[0].mxu0
    %v2022 = vadd.f32 %v1738, %v2021
    %v2023 = vpop.f32.mrb[0].mxu0
    %v2024 = vpop.f32.mrb[0].mxu0
    %v2025 = vadd.f32 %v1742, %v2024
    %v2026 = vpop.f32.mrb[0].mxu0
    %2027 = vmatprep.mubr.bf16.mxu0 0
    %2028 = vmatmul.mubr.bf16.gmra.mrb[0].mxu0 %v1874
    %v2029 = vpop.f32.mrb[0].mxu0
    %v2030 = vadd.f32 %v1748, %v2029
    %v2031 = vpop.f32.mrb[0].mxu0
    %v2032 = vpop.f32.mrb[0].mxu0
    %v2033 = vadd.f32 %v1752, %v2032
    %v2034 = vpop.f32.mrb[0].mxu0
    %2035 = vdwg.mxu0
    %v2036 = vmax.f32 %v1974, 0.0
    %v2037 = vmax.f32 %v1977, 0.0
    %v2038 = vmax.f32 %v1982, 0.0
    %v2039 = vmax.f32 %v1985, 0.0
    %v2040 = vmax.f32 %v1990, 0.0
    %v2041 = vmax.f32 %v1993, 0.0
    %v2042 = vmax.f32 %v1998, 0.0
    %v2043 = vmax.f32 %v2001, 0.0
    %v2044 = vmax.f32 %v2006, 0.0
    %v2045 = vmax.f32 %v2009, 0.0
    %v2046 = vmax.f32 %v2014, 0.0
    %v2047 = vmax.f32 %v2017, 0.0
    %v2048 = vmax.f32 %v2022, 0.0
    %v2049 = vmax.f32 %v2025, 0.0
    %v2050 = vmax.f32 %v2030, 0.0
    %v2051 = vmax.f32 %v2033, 0.0
    %v2052 = vpack.c.bf16 %v2037, %v2036
    %v2053 = vpack.c.bf16 %v2039, %v2038
    %v2054 = vpack.c.bf16 %v2041, %v2040
    %v2055 = vpack.c.bf16 %v2043, %v2042
    %v2056 = vpack.c.bf16 %v2045, %v2044
    %v2057 = vpack.c.bf16 %v2047, %v2046
    %v2058 = vpack.c.bf16 %v2049, %v2048
    %v2059 = vpack.c.bf16 %v2051, %v2050
    %v2060 = vld [vmem:[%s3] sm:$0xf]
    %v2061 = vld [vmem:[%s3 + $0x4] sm:$0xf]
    %v2062 = vld [vmem:[%s3 + $0x8] sm:$0xf]
    %v2063 = vld [vmem:[%s3 + $0xc] sm:$0xf]
    %v2064 = vld [vmem:[%s3 + $0x10] sm:$0xf]
    %v2065 = vld [vmem:[%s3 + $0x14] sm:$0xf]
    %v2066 = vld [vmem:[%s3 + $0x18] sm:$0xf]
    %v2067 = vld [vmem:[%s3 + $0x1c] sm:$0xf]
    %v2068 = vld [vmem:[%s3 + $0x20] sm:$0xf]
    %v2069 = vld [vmem:[%s3 + $0x24] sm:$0xf]
    %v2070 = vld [vmem:[%s3 + $0x28] sm:$0xf]
    %v2071 = vld [vmem:[%s3 + $0x2c] sm:$0xf]
    %v2072 = vld [vmem:[%s3 + $0x30] sm:$0xf]
    %v2073 = vld [vmem:[%s3 + $0x34] sm:$0xf]
    %v2074 = vld [vmem:[%s3 + $0x38] sm:$0xf]
    %v2075 = vld [vmem:[%s3 + $0x3c] sm:$0xf]
    %v2092 = vunpack.c.l.b16 %v2060
    %v2093 = vunpack.c.l.b16 %v2061
    %v2094 = vunpack.c.l.b16 %v2062
    %v2095 = vunpack.c.l.b16 %v2063
    %v2096 = vunpack.c.l.b16 %v2064
    %v2097 = vunpack.c.l.b16 %v2065
    %v2098 = vunpack.c.l.b16 %v2066
    %v2099 = vunpack.c.l.b16 %v2067
    %v2100 = vunpack.c.l.b16 %v2068
    %v2101 = vunpack.c.l.b16 %v2069
    %v2102 = vunpack.c.l.b16 %v2070
    %v2103 = vunpack.c.l.b16 %v2071
    %v2104 = vunpack.c.l.b16 %v2072
    %v2105 = vunpack.c.l.b16 %v2073
    %v2106 = vunpack.c.l.b16 %v2074
    %v2107 = vunpack.c.l.b16 %v2075
    %v2108 = vpack.c.b16 %v2093, %v2092
    %v2109 = vpack.c.b16 %v2095, %v2094
    %v2110 = vpack.c.b16 %v2097, %v2096
    %v2111 = vpack.c.b16 %v2099, %v2098
    %v2112 = vpack.c.b16 %v2101, %v2100
    %v2113 = vpack.c.b16 %v2103, %v2102
    %v2114 = vpack.c.b16 %v2105, %v2104
    %v2115 = vpack.c.b16 %v2107, %v2106
    %2124 = vmatprep.subr.bf16.mxu0 0
    %2125 = vmatpush1.bf16.msra.mxu0 %v2108
    %2126 = vmatprep.subr.bf16.mxu0 0
    %2127 = vmatpush1.bf16.msra.mxu0 %v2109
    %2128 = vmatprep.subr.bf16.mxu0 0
    %2129 = vmatpush1.bf16.msra.mxu0 %v2110
    %2130 = vmatprep.subr.bf16.mxu0 0
    %2131 = vmatpush1.bf16.msra.mxu0 %v2111
    %2132 = vmatprep.subr.bf16.mxu0 0
    %2133 = vmatpush1.bf16.msra.mxu0 %v2112
    %2134 = vmatprep.subr.bf16.mxu0 0
    %2135 = vmatpush1.bf16.msra.mxu0 %v2113
    %2136 = vmatprep.subr.bf16.mxu0 0
    %2137 = vmatpush1.bf16.msra.mxu0 %v2114
    %2138 = vmatprep.subr.bf16.mxu0 0
    %2139 = vmatpush1.bf16.msra.mxu0 %v2115
    %2140 = vmatprep.subr.bf16.mxu0 0
    %2141 = vmatpush1.bf16.msra.mxu0 0
    %2142 = vmatprep.subr.bf16.mxu0 0
    %2143 = vmatpush1.bf16.msra.mxu0 0
    %2144 = vmatprep.subr.bf16.mxu0 0
    %2145 = vmatpush1.bf16.msra.mxu0 0
    %2146 = vmatprep.subr.bf16.mxu0 0
    %2147 = vmatpush1.bf16.msra.mxu0 0
    %2148 = vmatprep.subr.bf16.mxu0 0
    %2149 = vmatpush1.bf16.msra.mxu0 0
    %2150 = vmatprep.subr.bf16.mxu0 0
    %2151 = vmatpush1.bf16.msra.mxu0 0
    %2152 = vmatprep.subr.bf16.mxu0 0
    %2153 = vmatpush1.bf16.msra.mxu0 0
    %2154 = vmatprep.subr.bf16.mxu0 0
    %2155 = vmatpush1.bf16.msra.mxu0 0
    %2156 = vmatprep.mubr.bf16.mxu0 0
    %2157 = vmatmul.mubr.bf16.gmra.mrb[0].mxu0 %v2052
    %v2158 = vpop.f32.mrb[0].mxu0
    %v2159 = vadd.f32 %v1789, %v2158
    %v2160 = vpop.f32.mrb[0].mxu0
    %v2161 = vpop.f32.mrb[0].mxu0
    %v2162 = vadd.f32 %v1792, %v2161
    %v2163 = vpop.f32.mrb[0].mxu0
    %2164 = vmatprep.mubr.bf16.mxu0 0
    %2165 = vmatmul.mubr.bf16.gmra.mrb[0].mxu0 %v2053
    %v2166 = vpop.f32.mrb[0].mxu0
    %v2167 = vadd.f32 %v1797, %v2166
    %v2168 = vpop.f32.mrb[0].mxu0
    %v2169 = vpop.f32.mrb[0].mxu0
    %v2170 = vadd.f32 %v1800, %v2169
    %v2171 = vpop.f32.mrb[0].mxu0
    %2172 = vmatprep.mubr.bf16.mxu0 0
    %2173 = vmatmul.mubr.bf16.gmra.mrb[0].mxu0 %v2054
    %v2174 = vpop.f32.mrb[0].mxu0
    %v2175 = vadd.f32 %v1805, %v2174
    %v2176 = vpop.f32.mrb[0].mxu0
    %v2177 = vpop.f32.mrb[0].mxu0
    %v2178 = vadd.f32 %v1808, %v2177
    %v2179 = vpop.f32.mrb[0].mxu0
    %2180 = vmatprep.mubr.bf16.mxu0 0
    %2181 = vmatmul.mubr.bf16.gmra.mrb[0].mxu0 %v2055
    %v2182 = vpop.f32.mrb[0].mxu0
    %v2183 = vadd.f32 %v1813, %v2182
    %v2184 = vpop.f32.mrb[0].mxu0
    %v2185 = vpop.f32.mrb[0].mxu0
    %v2186 = vadd.f32 %v1816, %v2185
    %v2187 = vpop.f32.mrb[0].mxu0
    %2188 = vmatprep.mubr.bf16.mxu0 0
    %2189 = vmatmul.mubr.bf16.gmra.mrb[0].mxu0 %v2056
    %v2190 = vpop.f32.mrb[0].mxu0
    %v2191 = vadd.f32 %v1821, %v2190
    %v2192 = vpop.f32.mrb[0].mxu0
    %v2193 = vpop.f32.mrb[0].mxu0
    %v2194 = vadd.f32 %v1824, %v2193
    %v2195 = vpop.f32.mrb[0].mxu0
    %2196 = vmatprep.mubr.bf16.mxu0 0
    %2197 = vmatmul.mubr.bf16.gmra.mrb[0].mxu0 %v2057
    %v2198 = vpop.f32.mrb[0].mxu0
    %v2199 = vadd.f32 %v1829, %v2198
    %v2200 = vpop.f32.mrb[0].mxu0
    %v2201 = vpop.f32.mrb[0].mxu0
    %v2202 = vadd.f32 %v1832, %v2201
    %v2203 = vpop.f32.mrb[0].mxu0
    %2204 = vmatprep.mubr.bf16.mxu0 0
    %2205 = vmatmul.mubr.bf16.gmra.mrb[0].mxu0 %v2058
    %v2206 = vpop.f32.mrb[0].mxu0
    %v2207 = vadd.f32 %v1837, %v2206
    %v2208 = vpop.f32.mrb[0].mxu0
    %v2209 = vpop.f32.mrb[0].mxu0
    %v2210 = vadd.f32 %v1840, %v2209
    %v2211 = vpop.f32.mrb[0].mxu0
    %2212 = vmatprep.mubr.bf16.mxu0 0
    %2213 = vmatmul.mubr.bf16.gmra.mrb[0].mxu0 %v2059
    %v2214 = vpop.f32.mrb[0].mxu0
    %v2215 = vadd.f32 %v1845, %v2214
    %v2216 = vpop.f32.mrb[0].mxu0
    %v2217 = vpop.f32.mrb[0].mxu0
    %v2218 = vadd.f32 %v1848, %v2217
    %v2219 = vpop.f32.mrb[0].mxu0
    %2220 = vdwg.mxu0
    %v2221 = vpack.c.bf16 %v2162, %v2159
    %v2222 = vpack.c.bf16 %v2170, %v2167
    %v2223 = vpack.c.bf16 %v2178, %v2175
    %v2224 = vpack.c.bf16 %v2186, %v2183
    %v2225 = vpack.c.bf16 %v2194, %v2191
    %v2226 = vpack.c.bf16 %v2202, %v2199
    %v2227 = vpack.c.bf16 %v2210, %v2207
    %v2228 = vpack.c.bf16 %v2218, %v2215
    %v2237 = vunpack.c.l.b16 %v2221
    %v2238 = vunpack.c.h.b16 %v2221
    %v2239 = vunpack.c.l.b16 %v2222
    %v2240 = vunpack.c.h.b16 %v2222
    %v2241 = vunpack.c.l.b16 %v2223
    %v2242 = vunpack.c.h.b16 %v2223
    %v2243 = vunpack.c.l.b16 %v2224
    %v2244 = vunpack.c.h.b16 %v2224
    %v2245 = vunpack.c.l.b16 %v2225
    %v2246 = vunpack.c.h.b16 %v2225
    %v2247 = vunpack.c.l.b16 %v2226
    %v2248 = vunpack.c.h.b16 %v2226
    %v2249 = vunpack.c.l.b16 %v2227
    %v2250 = vunpack.c.h.b16 %v2227
    %v2251 = vunpack.c.l.b16 %v2228
    %v2252 = vunpack.c.h.b16 %v2228
    %v2253 = vpack.c.b16 %v2237, %v2237
    %v2254 = vpack.c.b16 %v2238, %v2238
    %v2255 = vpack.c.b16 %v2239, %v2239
    %v2256 = vpack.c.b16 %v2240, %v2240
    %v2257 = vpack.c.b16 %v2241, %v2241
    %v2258 = vpack.c.b16 %v2242, %v2242
    %v2259 = vpack.c.b16 %v2243, %v2243
    %v2260 = vpack.c.b16 %v2244, %v2244
    %v2261 = vpack.c.b16 %v2245, %v2245
    %v2262 = vpack.c.b16 %v2246, %v2246
    %v2263 = vpack.c.b16 %v2247, %v2247
    %v2264 = vpack.c.b16 %v2248, %v2248
    %v2265 = vpack.c.b16 %v2249, %v2249
    %v2266 = vpack.c.b16 %v2250, %v2250
    %v2267 = vpack.c.b16 %v2251, %v2251
    %v2268 = vpack.c.b16 %v2252, %v2252
    %s2285 = scalar_lea.vmem [#allocation2], 128
    %2286 = vst [vmem:[%s2285] sm:$0xf] %v2253
    %2287 = vst [vmem:[%s2285 + $0x4] sm:$0xf] %v2254
    %2288 = vst [vmem:[%s2285 + $0x8] sm:$0xf] %v2255
    %2289 = vst [vmem:[%s2285 + $0xc] sm:$0xf] %v2256
    %2290 = vst [vmem:[%s2285 + $0x10] sm:$0xf] %v2257
    %2291 = vst [vmem:[%s2285 + $0x14] sm:$0xf] %v2258
    %2292 = vst [vmem:[%s2285 + $0x18] sm:$0xf] %v2259
    %2293 = vst [vmem:[%s2285 + $0x1c] sm:$0xf] %v2260
    %2294 = vst [vmem:[%s2285 + $0x20] sm:$0xf] %v2261
    %2295 = vst [vmem:[%s2285 + $0x24] sm:$0xf] %v2262
    %2296 = vst [vmem:[%s2285 + $0x28] sm:$0xf] %v2263
    %2297 = vst [vmem:[%s2285 + $0x2c] sm:$0xf] %v2264
    %2298 = vst [vmem:[%s2285 + $0x30] sm:$0xf] %v2265
    %2299 = vst [vmem:[%s2285 + $0x34] sm:$0xf] %v2266
    %2300 = vst [vmem:[%s2285 + $0x38] sm:$0xf] %v2267
    %2301 = vst [vmem:[%s2285 + $0x3c] sm:$0xf] %v2268
    %s2302 = scalar_lea.vmem %s0, 192
    %v2303 = vld [vmem:[%s2302] sm:$0xf]
    %v2304 = vld [vmem:[%s2302 + $0x4] sm:$0xf]
    %v2305 = vld [vmem:[%s2302 + $0x8] sm:$0xf]
    %v2306 = vld [vmem:[%s2302 + $0xc] sm:$0xf]
    %v2307 = vld [vmem:[%s2302 + $0x10] sm:$0xf]
    %v2308 = vld [vmem:[%s2302 + $0x14] sm:$0xf]
    %v2309 = vld [vmem:[%s2302 + $0x18] sm:$0xf]
    %v2310 = vld [vmem:[%s2302 + $0x1c] sm:$0xf]
    %v2311 = vld [vmem:[%s2302 + $0x20] sm:$0xf]
    %v2312 = vld [vmem:[%s2302 + $0x24] sm:$0xf]
    %v2313 = vld [vmem:[%s2302 + $0x28] sm:$0xf]
    %v2314 = vld [vmem:[%s2302 + $0x2c] sm:$0xf]
    %v2315 = vld [vmem:[%s2302 + $0x30] sm:$0xf]
    %v2316 = vld [vmem:[%s2302 + $0x34] sm:$0xf]
    %v2317 = vld [vmem:[%s2302 + $0x38] sm:$0xf]
    %v2318 = vld [vmem:[%s2302 + $0x3c] sm:$0xf]
    %v2319 = vld [vmem:[%s1] sm:$0xff]
    %v2320 = vld [vmem:[%s1 + $0x8] sm:$0xf]
    %v2337 = vunpack.c.l.b16 %v2303
    %v2338 = vunpack.c.l.b16 %v2304
    %v2339 = vunpack.c.l.b16 %v2305
    %v2340 = vunpack.c.l.b16 %v2306
    %v2341 = vunpack.c.l.b16 %v2307
    %v2342 = vunpack.c.l.b16 %v2308
    %v2343 = vunpack.c.l.b16 %v2309
    %v2344 = vunpack.c.l.b16 %v2310
    %v2345 = vunpack.c.l.b16 %v2311
    %v2346 = vunpack.c.l.b16 %v2312
    %v2347 = vunpack.c.l.b16 %v2313
    %v2348 = vunpack.c.l.b16 %v2314
    %v2349 = vunpack.c.l.b16 %v2315
    %v2350 = vunpack.c.l.b16 %v2316
    %v2351 = vunpack.c.l.b16 %v2317
    %v2352 = vunpack.c.l.b16 %v2318
    %v2353 = vpack.c.b16 %v2338, %v2337
    %v2354 = vpack.c.b16 %v2340, %v2339
    %v2355 = vpack.c.b16 %v2342, %v2341
    %v2356 = vpack.c.b16 %v2344, %v2343
    %v2357 = vpack.c.b16 %v2346, %v2345
    %v2358 = vpack.c.b16 %v2348, %v2347
    %v2359 = vpack.c.b16 %v2350, %v2349
    %v2360 = vpack.c.b16 %v2352, %v2351
    %v2363 = vunpack.c.l.b16 %v2319
    %v2364 = vunpack.c.h.b16 %v2319
    %v2365 = vunpack.c.l.b16 %v2320
    %v2366 = vpack.c.b16 %v2363, %v2363
    %v2367 = vpack.c.b16 %v2364, %v2364
    %v2368 = vpack.c.b16 %v2365, %v2365
    %v2370 = vsel %vm85, %v2353, 0
    %v2373 = vsel %vm85, %v2354, 0
    %v2376 = vsel %vm85, %v2355, 0
    %v2379 = vsel %vm85, %v2356, 0
    %v2382 = vsel %vm85, %v2357, 0
    %v2385 = vsel %vm85, %v2358, 0
    %v2388 = vsel %vm85, %v2359, 0
    %v2391 = vsel %vm85, %v2360, 0
    %v2394 = vsel %vm110, %v2366, 0
    %v2397 = vsel %vm110, %v2367, 0
    %v2400 = vsel %vm110, %v2368, 0
    %2402 = vmatprep.subr.bf16.mxu0 %v2397
    %2403 = vmatpush1.bf16.msra.mxu0 %v2394
    %2404 = vmatprep.subr.bf16.mxu0 0
    %2405 = vmatpush1.bf16.msra.mxu0 0
    %2406 = vmatprep.subr.bf16.mxu0 0
    %2407 = vmatpush1.bf16.msra.mxu0 0
    %2408 = vmatprep.subr.bf16.mxu0 0
    %2409 = vmatpush1.bf16.msra.mxu0 0
    %2410 = vmatprep.subr.bf16.mxu0 0
    %2411 = vmatpush1.bf16.msra.mxu0 0
    %2412 = vmatprep.subr.bf16.mxu0 0
    %2413 = vmatpush1.bf16.msra.mxu0 0
    %2414 = vmatprep.subr.bf16.mxu0 0
    %2415 = vmatpush1.bf16.msra.mxu0 0
    %2416 = vmatprep.subr.bf16.mxu0 0
    %2417 = vmatpush1.bf16.msra.mxu0 0
    %2418 = vmatprep.subr.bf16.mxu0 0
    %2419 = vmatpush1.bf16.msra.mxu0 0
    %2420 = vmatprep.subr.bf16.mxu0 0
    %2421 = vmatpush1.bf16.msra.mxu0 0
    %2422 = vmatprep.subr.bf16.mxu0 0
    %2423 = vmatpush1.bf16.msra.mxu0 0
    %2424 = vmatprep.subr.bf16.mxu0 0
    %2425 = vmatpush1.bf16.msra.mxu0 0
    %2426 = vmatprep.subr.bf16.mxu0 0
    %2427 = vmatpush1.bf16.msra.mxu0 0
    %2428 = vmatprep.subr.bf16.mxu0 0
    %2429 = vmatpush1.bf16.msra.mxu0 0
    %2430 = vmatprep.subr.bf16.mxu0 0
    %2431 = vmatpush1.bf16.msra.mxu0 0
    %2432 = vmatprep.subr.bf16.mxu0 0
    %2433 = vmatpush1.bf16.msra.mxu0 0
    %2434 = vmatprep.mubr.bf16.mxu0 0
    %2435 = vmatmul.mubr.bf16.gmra.mrb[0].mxu0 %v2370
    %v2436 = vpop.f32.mrb[0].mxu0
    %v2437 = vadd.f32 0.0, %v2436
    %v2438 = vpop.f32.mrb[0].mxu0
    %v2439 = vadd.f32 0.0, %v2438
    %v2440 = vpop.f32.mrb[0].mxu0
    %v2441 = vadd.f32 0.0, %v2440
    %v2442 = vpop.f32.mrb[0].mxu0
    %v2443 = vadd.f32 0.0, %v2442
    %2444 = vmatprep.mubr.bf16.mxu0 0
    %2445 = vmatmul.mubr.bf16.gmra.mrb[0].mxu0 %v2373
    %v2446 = vpop.f32.mrb[0].mxu0
    %v2447 = vadd.f32 0.0, %v2446
    %v2448 = vpop.f32.mrb[0].mxu0
    %v2449 = vadd.f32 0.0, %v2448
    %v2450 = vpop.f32.mrb[0].mxu0
    %v2451 = vadd.f32 0.0, %v2450
    %v2452 = vpop.f32.mrb[0].mxu0
    %v2453 = vadd.f32 0.0, %v2452
    %2454 = vmatprep.mubr.bf16.mxu0 0
    %2455 = vmatmul.mubr.bf16.gmra.mrb[0].mxu0 %v2376
    %v2456 = vpop.f32.mrb[0].mxu0
    %v2457 = vadd.f32 0.0, %v2456
    %v2458 = vpop.f32.mrb[0].mxu0
    %v2459 = vadd.f32 0.0, %v2458
    %v2460 = vpop.f32.mrb[0].mxu0
    %v2461 = vadd.f32 0.0, %v2460
    %v2462 = vpop.f32.mrb[0].mxu0
    %v2463 = vadd.f32 0.0, %v2462
    %2464 = vmatprep.mubr.bf16.mxu0 0
    %2465 = vmatmul.mubr.bf16.gmra.mrb[0].mxu0 %v2379
    %v2466 = vpop.f32.mrb[0].mxu0
    %v2467 = vadd.f32 0.0, %v2466
    %v2468 = vpop.f32.mrb[0].mxu0
    %v2469 = vadd.f32 0.0, %v2468
    %v2470 = vpop.f32.mrb[0].mxu0
    %v2471 = vadd.f32 0.0, %v2470
    %v2472 = vpop.f32.mrb[0].mxu0
    %v2473 = vadd.f32 0.0, %v2472
    %2474 = vmatprep.mubr.bf16.mxu0 0
    %2475 = vmatmul.mubr.bf16.gmra.mrb[0].mxu0 %v2382
    %v2476 = vpop.f32.mrb[0].mxu0
    %v2477 = vadd.f32 0.0, %v2476
    %v2478 = vpop.f32.mrb[0].mxu0
    %v2479 = vadd.f32 0.0, %v2478
    %v2480 = vpop.f32.mrb[0].mxu0
    %v2481 = vadd.f32 0.0, %v2480
    %v2482 = vpop.f32.mrb[0].mxu0
    %v2483 = vadd.f32 0.0, %v2482
    %2484 = vmatprep.mubr.bf16.mxu0 0
    %2485 = vmatmul.mubr.bf16.gmra.mrb[0].mxu0 %v2385
    %v2486 = vpop.f32.mrb[0].mxu0
    %v2487 = vadd.f32 0.0, %v2486
    %v2488 = vpop.f32.mrb[0].mxu0
    %v2489 = vadd.f32 0.0, %v2488
    %v2490 = vpop.f32.mrb[0].mxu0
    %v2491 = vadd.f32 0.0, %v2490
    %v2492 = vpop.f32.mrb[0].mxu0
    %v2493 = vadd.f32 0.0, %v2492
    %2494 = vmatprep.mubr.bf16.mxu0 0
    %2495 = vmatmul.mubr.bf16.gmra.mrb[0].mxu0 %v2388
    %v2496 = vpop.f32.mrb[0].mxu0
    %v2497 = vadd.f32 0.0, %v2496
    %v2498 = vpop.f32.mrb[0].mxu0
    %v2499 = vadd.f32 0.0, %v2498
    %v2500 = vpop.f32.mrb[0].mxu0
    %v2501 = vadd.f32 0.0, %v2500
    %v2502 = vpop.f32.mrb[0].mxu0
    %v2503 = vadd.f32 0.0, %v2502
    %2504 = vmatprep.mubr.bf16.mxu0 0
    %2505 = vmatmul.mubr.bf16.gmra.mrb[0].mxu0 %v2391
    %v2506 = vpop.f32.mrb[0].mxu0
    %v2507 = vadd.f32 0.0, %v2506
    %v2508 = vpop.f32.mrb[0].mxu0
    %v2509 = vadd.f32 0.0, %v2508
    %v2510 = vpop.f32.mrb[0].mxu0
    %v2511 = vadd.f32 0.0, %v2510
    %v2512 = vpop.f32.mrb[0].mxu0
    %v2513 = vadd.f32 0.0, %v2512
    %2514 = vdwg.mxu0
    %2515 = vmatprep.subr.bf16.mxu0 0
    %2516 = vmatpush1.bf16.msra.mxu0 %v2400
    %2517 = vmatprep.subr.bf16.mxu0 0
    %2518 = vmatpush1.bf16.msra.mxu0 0
    %2519 = vmatprep.subr.bf16.mxu0 0
    %2520 = vmatpush1.bf16.msra.mxu0 0
    %2521 = vmatprep.subr.bf16.mxu0 0
    %2522 = vmatpush1.bf16.msra.mxu0 0
    %2523 = vmatprep.subr.bf16.mxu0 0
    %2524 = vmatpush1.bf16.msra.mxu0 0
    %2525 = vmatprep.subr.bf16.mxu0 0
    %2526 = vmatpush1.bf16.msra.mxu0 0
    %2527 = vmatprep.subr.bf16.mxu0 0
    %2528 = vmatpush1.bf16.msra.mxu0 0
    %2529 = vmatprep.subr.bf16.mxu0 0
    %2530 = vmatpush1.bf16.msra.mxu0 0
    %2531 = vmatprep.subr.bf16.mxu0 0
    %2532 = vmatpush1.bf16.msra.mxu0 0
    %2533 = vmatprep.subr.bf16.mxu0 0
    %2534 = vmatpush1.bf16.msra.mxu0 0
    %2535 = vmatprep.subr.bf16.mxu0 0
    %2536 = vmatpush1.bf16.msra.mxu0 0
    %2537 = vmatprep.subr.bf16.mxu0 0
    %2538 = vmatpush1.bf16.msra.mxu0 0
    %2539 = vmatprep.subr.bf16.mxu0 0
    %2540 = vmatpush1.bf16.msra.mxu0 0
    %2541 = vmatprep.subr.bf16.mxu0 0
    %2542 = vmatpush1.bf16.msra.mxu0 0
    %2543 = vmatprep.subr.bf16.mxu0 0
    %2544 = vmatpush1.bf16.msra.mxu0 0
    %2545 = vmatprep.subr.bf16.mxu0 0
    %2546 = vmatpush1.bf16.msra.mxu0 0
    %2547 = vmatprep.mubr.bf16.mxu0 0
    %2548 = vmatmul.mubr.bf16.gmra.mrb[0].mxu0 %v2370
    %v2549 = vpop.f32.mrb[0].mxu0
    %v2550 = vadd.f32 0.0, %v2549
    %v2551 = vpop.f32.mrb[0].mxu0
    %v2552 = vpop.f32.mrb[0].mxu0
    %v2553 = vadd.f32 0.0, %v2552
    %v2554 = vpop.f32.mrb[0].mxu0
    %2555 = vmatprep.mubr.bf16.mxu0 0
    %2556 = vmatmul.mubr.bf16.gmra.mrb[0].mxu0 %v2373
    %v2557 = vpop.f32.mrb[0].mxu0
    %v2558 = vadd.f32 0.0, %v2557
    %v2559 = vpop.f32.mrb[0].mxu0
    %v2560 = vpop.f32.mrb[0].mxu0
    %v2561 = vadd.f32 0.0, %v2560
    %v2562 = vpop.f32.mrb[0].mxu0
    %2563 = vmatprep.mubr.bf16.mxu0 0
    %2564 = vmatmul.mubr.bf16.gmra.mrb[0].mxu0 %v2376
    %v2565 = vpop.f32.mrb[0].mxu0
    %v2566 = vadd.f32 0.0, %v2565
    %v2567 = vpop.f32.mrb[0].mxu0
    %v2568 = vpop.f32.mrb[0].mxu0
    %v2569 = vadd.f32 0.0, %v2568
    %v2570 = vpop.f32.mrb[0].mxu0
    %2571 = vmatprep.mubr.bf16.mxu0 0
    %2572 = vmatmul.mubr.bf16.gmra.mrb[0].mxu0 %v2379
    %v2573 = vpop.f32.mrb[0].mxu0
    %v2574 = vadd.f32 0.0, %v2573
    %v2575 = vpop.f32.mrb[0].mxu0
    %v2576 = vpop.f32.mrb[0].mxu0
    %v2577 = vadd.f32 0.0, %v2576
    %v2578 = vpop.f32.mrb[0].mxu0
    %2579 = vmatprep.mubr.bf16.mxu0 0
    %2580 = vmatmul.mubr.bf16.gmra.mrb[0].mxu0 %v2382
    %v2581 = vpop.f32.mrb[0].mxu0
    %v2582 = vadd.f32 0.0, %v2581
    %v2583 = vpop.f32.mrb[0].mxu0
    %v2584 = vpop.f32.mrb[0].mxu0
    %v2585 = vadd.f32 0.0, %v2584
    %v2586 = vpop.f32.mrb[0].mxu0
    %2587 = vmatprep.mubr.bf16.mxu0 0
    %2588 = vmatmul.mubr.bf16.gmra.mrb[0].mxu0 %v2385
    %v2589 = vpop.f32.mrb[0].mxu0
    %v2590 = vadd.f32 0.0, %v2589
    %v2591 = vpop.f32.mrb[0].mxu0
    %v2592 = vpop.f32.mrb[0].mxu0
    %v2593 = vadd.f32 0.0, %v2592
    %v2594 = vpop.f32.mrb[0].mxu0
    %2595 = vmatprep.mubr.bf16.mxu0 0
    %2596 = vmatmul.mubr.bf16.gmra.mrb[0].mxu0 %v2388
    %v2597 = vpop.f32.mrb[0].mxu0
    %v2598 = vadd.f32 0.0, %v2597
    %v2599 = vpop.f32.mrb[0].mxu0
    %v2600 = vpop.f32.mrb[0].mxu0
    %v2601 = vadd.f32 0.0, %v2600
    %v2602 = vpop.f32.mrb[0].mxu0
    %2603 = vmatprep.mubr.bf16.mxu0 0
    %2604 = vmatmul.mubr.bf16.gmra.mrb[0].mxu0 %v2391
    %v2605 = vpop.f32.mrb[0].mxu0
    %v2606 = vadd.f32 0.0, %v2605
    %v2607 = vpop.f32.mrb[0].mxu0
    %v2608 = vpop.f32.mrb[0].mxu0
    %v2609 = vadd.f32 0.0, %v2608
    %v2610 = vpop.f32.mrb[0].mxu0
    %2611 = vdwg.mxu0
    %v2612 = vmax.f32 %v2437, 0.0
    %v2613 = vmax.f32 %v2441, 0.0
    %v2614 = vmax.f32 %v2447, 0.0
    %v2615 = vmax.f32 %v2451, 0.0
    %v2616 = vmax.f32 %v2457, 0.0
    %v2617 = vmax.f32 %v2461, 0.0
    %v2618 = vmax.f32 %v2467, 0.0
    %v2619 = vmax.f32 %v2471, 0.0
    %v2620 = vmax.f32 %v2477, 0.0
    %v2621 = vmax.f32 %v2481, 0.0
    %v2622 = vmax.f32 %v2487, 0.0
    %v2623 = vmax.f32 %v2491, 0.0
    %v2624 = vmax.f32 %v2497, 0.0
    %v2625 = vmax.f32 %v2501, 0.0
    %v2626 = vmax.f32 %v2507, 0.0
    %v2627 = vmax.f32 %v2511, 0.0
    %v2628 = vpack.c.bf16 %v2613, %v2612
    %v2629 = vpack.c.bf16 %v2615, %v2614
    %v2630 = vpack.c.bf16 %v2617, %v2616
    %v2631 = vpack.c.bf16 %v2619, %v2618
    %v2632 = vpack.c.bf16 %v2621, %v2620
    %v2633 = vpack.c.bf16 %v2623, %v2622
    %v2634 = vpack.c.bf16 %v2625, %v2624
    %v2635 = vpack.c.bf16 %v2627, %v2626
    %v2636 = vld [vmem:[%s2] sm:$0xf]
    %v2637 = vld [vmem:[%s2 + $0x4] sm:$0xf]
    %v2638 = vld [vmem:[%s2 + $0x8] sm:$0xf]
    %v2639 = vld [vmem:[%s2 + $0xc] sm:$0xf]
    %v2640 = vld [vmem:[%s2 + $0x10] sm:$0xf]
    %v2641 = vld [vmem:[%s2 + $0x14] sm:$0xf]
    %v2642 = vld [vmem:[%s2 + $0x18] sm:$0xf]
    %v2643 = vld [vmem:[%s2 + $0x1c] sm:$0xf]
    %v2644 = vld [vmem:[%s2 + $0x20] sm:$0xf]
    %v2645 = vld [vmem:[%s2 + $0x24] sm:$0xf]
    %v2646 = vld [vmem:[%s2 + $0x28] sm:$0xf]
    %v2647 = vld [vmem:[%s2 + $0x2c] sm:$0xf]
    %v2648 = vld [vmem:[%s2 + $0x30] sm:$0xf]
    %v2649 = vld [vmem:[%s2 + $0x34] sm:$0xf]
    %v2650 = vld [vmem:[%s2 + $0x38] sm:$0xf]
    %v2651 = vld [vmem:[%s2 + $0x3c] sm:$0xf]
    %v2668 = vunpack.c.l.b16 %v2636
    %v2669 = vunpack.c.l.b16 %v2637
    %v2670 = vunpack.c.l.b16 %v2638
    %v2671 = vunpack.c.l.b16 %v2639
    %v2672 = vunpack.c.l.b16 %v2640
    %v2673 = vunpack.c.l.b16 %v2641
    %v2674 = vunpack.c.l.b16 %v2642
    %v2675 = vunpack.c.l.b16 %v2643
    %v2676 = vunpack.c.l.b16 %v2644
    %v2677 = vunpack.c.l.b16 %v2645
    %v2678 = vunpack.c.l.b16 %v2646
    %v2679 = vunpack.c.l.b16 %v2647
    %v2680 = vunpack.c.l.b16 %v2648
    %v2681 = vunpack.c.l.b16 %v2649
    %v2682 = vunpack.c.l.b16 %v2650
    %v2683 = vunpack.c.l.b16 %v2651
    %v2684 = vpack.c.b16 %v2669, %v2668
    %v2685 = vpack.c.b16 %v2671, %v2670
    %v2686 = vpack.c.b16 %v2673, %v2672
    %v2687 = vpack.c.b16 %v2675, %v2674
    %v2688 = vpack.c.b16 %v2677, %v2676
    %v2689 = vpack.c.b16 %v2679, %v2678
    %v2690 = vpack.c.b16 %v2681, %v2680
    %v2691 = vpack.c.b16 %v2683, %v2682
    %2700 = vmatprep.subr.bf16.mxu0 0
    %2701 = vmatpush1.bf16.msra.mxu0 %v2684
    %2702 = vmatprep.subr.bf16.mxu0 0
    %2703 = vmatpush1.bf16.msra.mxu0 %v2685
    %2704 = vmatprep.subr.bf16.mxu0 0
    %2705 = vmatpush1.bf16.msra.mxu0 %v2686
    %2706 = vmatprep.subr.bf16.mxu0 0
    %2707 = vmatpush1.bf16.msra.mxu0 %v2687
    %2708 = vmatprep.subr.bf16.mxu0 0
    %2709 = vmatpush1.bf16.msra.mxu0 %v2688
    %2710 = vmatprep.subr.bf16.mxu0 0
    %2711 = vmatpush1.bf16.msra.mxu0 %v2689
    %2712 = vmatprep.subr.bf16.mxu0 0
    %2713 = vmatpush1.bf16.msra.mxu0 %v2690
    %2714 = vmatprep.subr.bf16.mxu0 0
    %2715 = vmatpush1.bf16.msra.mxu0 %v2691
    %2716 = vmatprep.subr.bf16.mxu0 0
    %2717 = vmatpush1.bf16.msra.mxu0 0
    %2718 = vmatprep.subr.bf16.mxu0 0
    %2719 = vmatpush1.bf16.msra.mxu0 0
    %2720 = vmatprep.subr.bf16.mxu0 0
    %2721 = vmatpush1.bf16.msra.mxu0 0
    %2722 = vmatprep.subr.bf16.mxu0 0
    %2723 = vmatpush1.bf16.msra.mxu0 0
    %2724 = vmatprep.subr.bf16.mxu0 0
    %2725 = vmatpush1.bf16.msra.mxu0 0
    %2726 = vmatprep.subr.bf16.mxu0 0
    %2727 = vmatpush1.bf16.msra.mxu0 0
    %2728 = vmatprep.subr.bf16.mxu0 0
    %2729 = vmatpush1.bf16.msra.mxu0 0
    %2730 = vmatprep.subr.bf16.mxu0 0
    %2731 = vmatpush1.bf16.msra.mxu0 0
    %2732 = vmatprep.mubr.bf16.mxu0 0
    %2733 = vmatmul.mubr.bf16.gmra.mrb[0].mxu0 %v2628
    %v2734 = vpop.f32.mrb[0].mxu0
    %v2735 = vadd.f32 %v2439, %v2734
    %v2736 = vpop.f32.mrb[0].mxu0
    %v2737 = vpop.f32.mrb[0].mxu0
    %v2738 = vadd.f32 %v2443, %v2737
    %v2739 = vpop.f32.mrb[0].mxu0
    %2740 = vmatprep.mubr.bf16.mxu0 0
    %2741 = vmatmul.mubr.bf16.gmra.mrb[0].mxu0 %v2629
    %v2742 = vpop.f32.mrb[0].mxu0
    %v2743 = vadd.f32 %v2449, %v2742
    %v2744 = vpop.f32.mrb[0].mxu0
    %v2745 = vpop.f32.mrb[0].mxu0
    %v2746 = vadd.f32 %v2453, %v2745
    %v2747 = vpop.f32.mrb[0].mxu0
    %2748 = vmatprep.mubr.bf16.mxu0 0
    %2749 = vmatmul.mubr.bf16.gmra.mrb[0].mxu0 %v2630
    %v2750 = vpop.f32.mrb[0].mxu0
    %v2751 = vadd.f32 %v2459, %v2750
    %v2752 = vpop.f32.mrb[0].mxu0
    %v2753 = vpop.f32.mrb[0].mxu0
    %v2754 = vadd.f32 %v2463, %v2753
    %v2755 = vpop.f32.mrb[0].mxu0
    %2756 = vmatprep.mubr.bf16.mxu0 0
    %2757 = vmatmul.mubr.bf16.gmra.mrb[0].mxu0 %v2631
    %v2758 = vpop.f32.mrb[0].mxu0
    %v2759 = vadd.f32 %v2469, %v2758
    %v2760 = vpop.f32.mrb[0].mxu0
    %v2761 = vpop.f32.mrb[0].mxu0
    %v2762 = vadd.f32 %v2473, %v2761
    %v2763 = vpop.f32.mrb[0].mxu0
    %2764 = vmatprep.mubr.bf16.mxu0 0
    %2765 = vmatmul.mubr.bf16.gmra.mrb[0].mxu0 %v2632
    %v2766 = vpop.f32.mrb[0].mxu0
    %v2767 = vadd.f32 %v2479, %v2766
    %v2768 = vpop.f32.mrb[0].mxu0
    %v2769 = vpop.f32.mrb[0].mxu0
    %v2770 = vadd.f32 %v2483, %v2769
    %v2771 = vpop.f32.mrb[0].mxu0
    %2772 = vmatprep.mubr.bf16.mxu0 0
    %2773 = vmatmul.mubr.bf16.gmra.mrb[0].mxu0 %v2633
    %v2774 = vpop.f32.mrb[0].mxu0
    %v2775 = vadd.f32 %v2489, %v2774
    %v2776 = vpop.f32.mrb[0].mxu0
    %v2777 = vpop.f32.mrb[0].mxu0
    %v2778 = vadd.f32 %v2493, %v2777
    %v2779 = vpop.f32.mrb[0].mxu0
    %2780 = vmatprep.mubr.bf16.mxu0 0
    %2781 = vmatmul.mubr.bf16.gmra.mrb[0].mxu0 %v2634
    %v2782 = vpop.f32.mrb[0].mxu0
    %v2783 = vadd.f32 %v2499, %v2782
    %v2784 = vpop.f32.mrb[0].mxu0
    %v2785 = vpop.f32.mrb[0].mxu0
    %v2786 = vadd.f32 %v2503, %v2785
    %v2787 = vpop.f32.mrb[0].mxu0
    %2788 = vmatprep.mubr.bf16.mxu0 0
    %2789 = vmatmul.mubr.bf16.gmra.mrb[0].mxu0 %v2635
    %v2790 = vpop.f32.mrb[0].mxu0
    %v2791 = vadd.f32 %v2509, %v2790
    %v2792 = vpop.f32.mrb[0].mxu0
    %v2793 = vpop.f32.mrb[0].mxu0
    %v2794 = vadd.f32 %v2513, %v2793
    %v2795 = vpop.f32.mrb[0].mxu0
    %2796 = vdwg.mxu0
    %v2797 = vmax.f32 %v2735, 0.0
    %v2798 = vmax.f32 %v2738, 0.0
    %v2799 = vmax.f32 %v2743, 0.0
    %v2800 = vmax.f32 %v2746, 0.0
    %v2801 = vmax.f32 %v2751, 0.0
    %v2802 = vmax.f32 %v2754, 0.0
    %v2803 = vmax.f32 %v2759, 0.0
    %v2804 = vmax.f32 %v2762, 0.0
    %v2805 = vmax.f32 %v2767, 0.0
    %v2806 = vmax.f32 %v2770, 0.0
    %v2807 = vmax.f32 %v2775, 0.0
    %v2808 = vmax.f32 %v2778, 0.0
    %v2809 = vmax.f32 %v2783, 0.0
    %v2810 = vmax.f32 %v2786, 0.0
    %v2811 = vmax.f32 %v2791, 0.0
    %v2812 = vmax.f32 %v2794, 0.0
    %v2813 = vpack.c.bf16 %v2798, %v2797
    %v2814 = vpack.c.bf16 %v2800, %v2799
    %v2815 = vpack.c.bf16 %v2802, %v2801
    %v2816 = vpack.c.bf16 %v2804, %v2803
    %v2817 = vpack.c.bf16 %v2806, %v2805
    %v2818 = vpack.c.bf16 %v2808, %v2807
    %v2819 = vpack.c.bf16 %v2810, %v2809
    %v2820 = vpack.c.bf16 %v2812, %v2811
    %v2821 = vld [vmem:[%s3] sm:$0xf]
    %v2822 = vld [vmem:[%s3 + $0x4] sm:$0xf]
    %v2823 = vld [vmem:[%s3 + $0x8] sm:$0xf]
    %v2824 = vld [vmem:[%s3 + $0xc] sm:$0xf]
    %v2825 = vld [vmem:[%s3 + $0x10] sm:$0xf]
    %v2826 = vld [vmem:[%s3 + $0x14] sm:$0xf]
    %v2827 = vld [vmem:[%s3 + $0x18] sm:$0xf]
    %v2828 = vld [vmem:[%s3 + $0x1c] sm:$0xf]
    %v2829 = vld [vmem:[%s3 + $0x20] sm:$0xf]
    %v2830 = vld [vmem:[%s3 + $0x24] sm:$0xf]
    %v2831 = vld [vmem:[%s3 + $0x28] sm:$0xf]
    %v2832 = vld [vmem:[%s3 + $0x2c] sm:$0xf]
    %v2833 = vld [vmem:[%s3 + $0x30] sm:$0xf]
    %v2834 = vld [vmem:[%s3 + $0x34] sm:$0xf]
    %v2835 = vld [vmem:[%s3 + $0x38] sm:$0xf]
    %v2836 = vld [vmem:[%s3 + $0x3c] sm:$0xf]
    %v2853 = vunpack.c.l.b16 %v2821
    %v2854 = vunpack.c.l.b16 %v2822
    %v2855 = vunpack.c.l.b16 %v2823
    %v2856 = vunpack.c.l.b16 %v2824
    %v2857 = vunpack.c.l.b16 %v2825
    %v2858 = vunpack.c.l.b16 %v2826
    %v2859 = vunpack.c.l.b16 %v2827
    %v2860 = vunpack.c.l.b16 %v2828
    %v2861 = vunpack.c.l.b16 %v2829
    %v2862 = vunpack.c.l.b16 %v2830
    %v2863 = vunpack.c.l.b16 %v2831
    %v2864 = vunpack.c.l.b16 %v2832
    %v2865 = vunpack.c.l.b16 %v2833
    %v2866 = vunpack.c.l.b16 %v2834
    %v2867 = vunpack.c.l.b16 %v2835
    %v2868 = vunpack.c.l.b16 %v2836
    %v2869 = vpack.c.b16 %v2854, %v2853
    %v2870 = vpack.c.b16 %v2856, %v2855
    %v2871 = vpack.c.b16 %v2858, %v2857
    %v2872 = vpack.c.b16 %v2860, %v2859
    %v2873 = vpack.c.b16 %v2862, %v2861
    %v2874 = vpack.c.b16 %v2864, %v2863
    %v2875 = vpack.c.b16 %v2866, %v2865
    %v2876 = vpack.c.b16 %v2868, %v2867
    %2885 = vmatprep.subr.bf16.mxu0 0
    %2886 = vmatpush1.bf16.msra.mxu0 %v2869
    %2887 = vmatprep.subr.bf16.mxu0 0
    %2888 = vmatpush1.bf16.msra.mxu0 %v2870
    %2889 = vmatprep.subr.bf16.mxu0 0
    %2890 = vmatpush1.bf16.msra.mxu0 %v2871
    %2891 = vmatprep.subr.bf16.mxu0 0
    %2892 = vmatpush1.bf16.msra.mxu0 %v2872
    %2893 = vmatprep.subr.bf16.mxu0 0
    %2894 = vmatpush1.bf16.msra.mxu0 %v2873
    %2895 = vmatprep.subr.bf16.mxu0 0
    %2896 = vmatpush1.bf16.msra.mxu0 %v2874
    %2897 = vmatprep.subr.bf16.mxu0 0
    %2898 = vmatpush1.bf16.msra.mxu0 %v2875
    %2899 = vmatprep.subr.bf16.mxu0 0
    %2900 = vmatpush1.bf16.msra.mxu0 %v2876
    %2901 = vmatprep.subr.bf16.mxu0 0
    %2902 = vmatpush1.bf16.msra.mxu0 0
    %2903 = vmatprep.subr.bf16.mxu0 0
    %2904 = vmatpush1.bf16.msra.mxu0 0
    %2905 = vmatprep.subr.bf16.mxu0 0
    %2906 = vmatpush1.bf16.msra.mxu0 0
    %2907 = vmatprep.subr.bf16.mxu0 0
    %2908 = vmatpush1.bf16.msra.mxu0 0
    %2909 = vmatprep.subr.bf16.mxu0 0
    %2910 = vmatpush1.bf16.msra.mxu0 0
    %2911 = vmatprep.subr.bf16.mxu0 0
    %2912 = vmatpush1.bf16.msra.mxu0 0
    %2913 = vmatprep.subr.bf16.mxu0 0
    %2914 = vmatpush1.bf16.msra.mxu0 0
    %2915 = vmatprep.subr.bf16.mxu0 0
    %2916 = vmatpush1.bf16.msra.mxu0 0
    %2917 = vmatprep.mubr.bf16.mxu0 0
    %2918 = vmatmul.mubr.bf16.gmra.mrb[0].mxu0 %v2813
    %v2919 = vpop.f32.mrb[0].mxu0
    %v2920 = vadd.f32 %v2550, %v2919
    %v2921 = vpop.f32.mrb[0].mxu0
    %v2922 = vpop.f32.mrb[0].mxu0
    %v2923 = vadd.f32 %v2553, %v2922
    %v2924 = vpop.f32.mrb[0].mxu0
    %2925 = vmatprep.mubr.bf16.mxu0 0
    %2926 = vmatmul.mubr.bf16.gmra.mrb[0].mxu0 %v2814
    %v2927 = vpop.f32.mrb[0].mxu0
    %v2928 = vadd.f32 %v2558, %v2927
    %v2929 = vpop.f32.mrb[0].mxu0
    %v2930 = vpop.f32.mrb[0].mxu0
    %v2931 = vadd.f32 %v2561, %v2930
    %v2932 = vpop.f32.mrb[0].mxu0
    %2933 = vmatprep.mubr.bf16.mxu0 0
    %2934 = vmatmul.mubr.bf16.gmra.mrb[0].mxu0 %v2815
    %v2935 = vpop.f32.mrb[0].mxu0
    %v2936 = vadd.f32 %v2566, %v2935
    %v2937 = vpop.f32.mrb[0].mxu0
    %v2938 = vpop.f32.mrb[0].mxu0
    %v2939 = vadd.f32 %v2569, %v2938
    %v2940 = vpop.f32.mrb[0].mxu0
    %2941 = vmatprep.mubr.bf16.mxu0 0
    %2942 = vmatmul.mubr.bf16.gmra.mrb[0].mxu0 %v2816
    %v2943 = vpop.f32.mrb[0].mxu0
    %v2944 = vadd.f32 %v2574, %v2943
    %v2945 = vpop.f32.mrb[0].mxu0
    %v2946 = vpop.f32.mrb[0].mxu0
    %v2947 = vadd.f32 %v2577, %v2946
    %v2948 = vpop.f32.mrb[0].mxu0
    %2949 = vmatprep.mubr.bf16.mxu0 0
    %2950 = vmatmul.mubr.bf16.gmra.mrb[0].mxu0 %v2817
    %v2951 = vpop.f32.mrb[0].mxu0
    %v2952 = vadd.f32 %v2582, %v2951
    %v2953 = vpop.f32.mrb[0].mxu0
    %v2954 = vpop.f32.mrb[0].mxu0
    %v2955 = vadd.f32 %v2585, %v2954
    %v2956 = vpop.f32.mrb[0].mxu0
    %2957 = vmatprep.mubr.bf16.mxu0 0
    %2958 = vmatmul.mubr.bf16.gmra.mrb[0].mxu0 %v2818
    %v2959 = vpop.f32.mrb[0].mxu0
    %v2960 = vadd.f32 %v2590, %v2959
    %v2961 = vpop.f32.mrb[0].mxu0
    %v2962 = vpop.f32.mrb[0].mxu0
    %v2963 = vadd.f32 %v2593, %v2962
    %v2964 = vpop.f32.mrb[0].mxu0
    %2965 = vmatprep.mubr.bf16.mxu0 0
    %2966 = vmatmul.mubr.bf16.gmra.mrb[0].mxu0 %v2819
    %v2967 = vpop.f32.mrb[0].mxu0
    %v2968 = vadd.f32 %v2598, %v2967
    %v2969 = vpop.f32.mrb[0].mxu0
    %v2970 = vpop.f32.mrb[0].mxu0
    %v2971 = vadd.f32 %v2601, %v2970
    %v2972 = vpop.f32.mrb[0].mxu0
    %2973 = vmatprep.mubr.bf16.mxu0 0
    %2974 = vmatmul.mubr.bf16.gmra.mrb[0].mxu0 %v2820
    %v2975 = vpop.f32.mrb[0].mxu0
    %v2976 = vadd.f32 %v2606, %v2975
    %v2977 = vpop.f32.mrb[0].mxu0
    %v2978 = vpop.f32.mrb[0].mxu0
    %v2979 = vadd.f32 %v2609, %v2978
    %v2980 = vpop.f32.mrb[0].mxu0
    %2981 = vdwg.mxu0
    %v2982 = vpack.c.bf16 %v2923, %v2920
    %v2983 = vpack.c.bf16 %v2931, %v2928
    %v2984 = vpack.c.bf16 %v2939, %v2936
    %v2985 = vpack.c.bf16 %v2947, %v2944
    %v2986 = vpack.c.bf16 %v2955, %v2952
    %v2987 = vpack.c.bf16 %v2963, %v2960
    %v2988 = vpack.c.bf16 %v2971, %v2968
    %v2989 = vpack.c.bf16 %v2979, %v2976
    %v2998 = vunpack.c.l.b16 %v2982
    %v2999 = vunpack.c.h.b16 %v2982
    %v3000 = vunpack.c.l.b16 %v2983
    %v3001 = vunpack.c.h.b16 %v2983
    %v3002 = vunpack.c.l.b16 %v2984
    %v3003 = vunpack.c.h.b16 %v2984
    %v3004 = vunpack.c.l.b16 %v2985
    %v3005 = vunpack.c.h.b16 %v2985
    %v3006 = vunpack.c.l.b16 %v2986
    %v3007 = vunpack.c.h.b16 %v2986
    %v3008 = vunpack.c.l.b16 %v2987
    %v3009 = vunpack.c.h.b16 %v2987
    %v3010 = vunpack.c.l.b16 %v2988
    %v3011 = vunpack.c.h.b16 %v2988
    %v3012 = vunpack.c.l.b16 %v2989
    %v3013 = vunpack.c.h.b16 %v2989
    %v3014 = vpack.c.b16 %v2998, %v2998
    %v3015 = vpack.c.b16 %v2999, %v2999
    %v3016 = vpack.c.b16 %v3000, %v3000
    %v3017 = vpack.c.b16 %v3001, %v3001
    %v3018 = vpack.c.b16 %v3002, %v3002
    %v3019 = vpack.c.b16 %v3003, %v3003
    %v3020 = vpack.c.b16 %v3004, %v3004
    %v3021 = vpack.c.b16 %v3005, %v3005
    %v3022 = vpack.c.b16 %v3006, %v3006
    %v3023 = vpack.c.b16 %v3007, %v3007
    %v3024 = vpack.c.b16 %v3008, %v3008
    %v3025 = vpack.c.b16 %v3009, %v3009
    %v3026 = vpack.c.b16 %v3010, %v3010
    %v3027 = vpack.c.b16 %v3011, %v3011
    %v3028 = vpack.c.b16 %v3012, %v3012
    %v3029 = vpack.c.b16 %v3013, %v3013
    %s3046 = scalar_lea.vmem [#allocation2], 192
    %3047 = vst [vmem:[%s3046] sm:$0xf] %v3014
    %3048 = vst [vmem:[%s3046 + $0x4] sm:$0xf] %v3015
    %3049 = vst [vmem:[%s3046 + $0x8] sm:$0xf] %v3016
    %3050 = vst [vmem:[%s3046 + $0xc] sm:$0xf] %v3017
    %3051 = vst [vmem:[%s3046 + $0x10] sm:$0xf] %v3018
    %3052 = vst [vmem:[%s3046 + $0x14] sm:$0xf] %v3019
    %3053 = vst [vmem:[%s3046 + $0x18] sm:$0xf] %v3020
    %3054 = vst [vmem:[%s3046 + $0x1c] sm:$0xf] %v3021
    %3055 = vst [vmem:[%s3046 + $0x20] sm:$0xf] %v3022
    %3056 = vst [vmem:[%s3046 + $0x24] sm:$0xf] %v3023
    %3057 = vst [vmem:[%s3046 + $0x28] sm:$0xf] %v3024
    %3058 = vst [vmem:[%s3046 + $0x2c] sm:$0xf] %v3025
    %3059 = vst [vmem:[%s3046 + $0x30] sm:$0xf] %v3026
    %3060 = vst [vmem:[%s3046 + $0x34] sm:$0xf] %v3027
    %3061 = vst [vmem:[%s3046 + $0x38] sm:$0xf] %v3028
    %3062 = vst [vmem:[%s3046 + $0x3c] sm:$0xf] %v3029
    // Predicated region
    $region18: #{tpu_custom_call.1} parent=1 // pred_check
      _
    $region19: #{tpu_custom_call.1} parent=1 // pred_check_branch
      %3064 = sbr.rel (0) target = $region21
    $region20: #{tpu_custom_call.1} parent=1 // pred_region
      %s3066 = ssub.s32 4096, 4096
      %3067 = vsyncadd [#allocation3], %s3066
      %s3068 = sshll.u32 [#allocation2], 4
      %s3069 = int_to_ptr.vmem [resolvable:$true] %s3068
      %3074 = dma.vmem_to_hbm [thread:$0]  %s3069, 4096, %s4, [#allocation3], 64, 64, 4
    $region21: #{tpu_custom_call.1} parent=1 // pred_fallthru
      _
    // Predicated region
    $region22: #{tpu_custom_call.1} parent=1 // pred_check
      _
    $region23: #{tpu_custom_call.1} parent=1 // pred_check_branch
      %3076 = sbr.rel (0) target = $region25
    $region24: #{tpu_custom_call.1} parent=1 // pred_region
      %3077 = dma.done [#allocation3], 4096
    $region25: #{tpu_custom_call.1} parent=1 // pred_fallthru
      _
    %3078 = vsyncpa [#allocation3], 1

</llo_original>
